<compile_context>
chip_gen: v7x
topology: tpu7x:2x2x1
jax: 0.10.0
libtpu: 0.0.40
codegen_flags: <defaults>
</compile_context>

<pallas_src>
import functools

import jax
import jax.numpy as jnp
from jax import lax
from jax.experimental import pallas as pl
from jax.experimental.pallas import tpu as pltpu

EPS = 1e-5                       # nn.BatchNorm2d default
LANE = 128                       # TPU lane width
VMEM_LIMIT = 32 * 1024 * 1024    # > v5e's 16 MiB scoped default, < v7x physical


def _round_up(x, m):
    return (x + m - 1) // m * m


def _pick_row_tile(n, h_out, w_out, target_rows=1024):
    """Output rows per grid step (TH).

    Constraints / preferences:
      * lane-dense output tiles: (TH*W) % 128 == 0, or TH == H (whole image),
      * >= 4 total grid steps so each v7x TensorCore gets >= 2 (pipeline overlap),
      * otherwise the largest tile <= ~1024 rows (per-step overhead amortization).
    """
    divisors = [d for d in range(1, h_out + 1) if h_out % d == 0]
    ok = [d for d in divisors if (d * w_out) % LANE == 0] or [h_out]
    pref = [d for d in ok if n * (h_out // d) >= 4] or ok
    fit = [d for d in pref if d * w_out <= target_rows] or [min(pref)]
    return max(fit)


# -------- shared in-kernel fused-im2col conv tile ----------------------------

def _conv_rows(x_ref, w9_ref, row0, th, k):
    """f32 conv for output rows [row0, row0+th) of the resident padded image.

    x_ref : (Hp, Wp, C_in) bf16   (whole padded image, VMEM resident)
    w9_ref: (k*k, C_in, C_out_pad) bf16
    returns (th * W_out, C_out_pad) f32
    """
    wp, c_in = x_ref.shape[1], x_ref.shape[2]
    w_out = wp - (k - 1)
    c_out_pad = w9_ref.shape[2]
    # One dynamic load of the halo slab; everything below is static slicing.
    slab = x_ref[pl.ds(row0, th + k - 1), :, :]            # (th+k-1, Wp, C_in)
    acc = jnp.zeros((th * w_out, c_out_pad), jnp.float32)
    for kh in range(k):
        for kw in range(k):
            win = slab[kh:kh + th, kw:kw + w_out, :]        # (th, W_out, C_in)
            acc = acc + jnp.dot(win.reshape(th * w_out, c_in),
                                w9_ref[kh * k + kw],
                                preferred_element_type=jnp.float32)
    return acc


# -------- Pass 1: conv (fused im2col) -> per-tile partial BN statistics ------

def _conv_stats_kernel(x_ref, w9_ref, stats_ref, *, th, k):
    row0 = pl.multiple_of(pl.program_id(1) * th, th)
    acc = _conv_rows(x_ref, w9_ref, row0, th, k)            # f32
    s = jnp.sum(acc, axis=0, keepdims=True)                 # (1, C_out_pad)
    ss = jnp.sum(acc * acc, axis=0, keepdims=True)          # (1, C_out_pad)
    stats_ref[...] = jnp.concatenate([s, ss], axis=0)


# -------- Pass 2: conv recompute + fused BN scale/shift + ReLU ----------------

def _conv_bn_relu_kernel(x_ref, w9_ref, scale_ref, shift_ref, out_ref, *, th, k):
    row0 = pl.multiple_of(pl.program_id(1) * th, th)
    acc = _conv_rows(x_ref, w9_ref, row0, th, k)            # (th*W, C_out_pad) f32
    z = jnp.maximum(acc * scale_ref[...] + shift_ref[...], 0.0)
    # Channel-major, lane-dense store: (C_out, th*W) with th*W a multiple of 128.
    out_ref[...] = jnp.transpose(z)[:out_ref.shape[0], :]


# -------- Host-side wrapper ---------------------------------------------------

@functools.partial(jax.jit, static_argnames=("k", "pad", "pool"))
def conv_block_forward(x, weight, bias, gamma, beta, *, k=3, pad=1, pool=False):
    """x: (N, C_in, H, W) NCHW f32.  weight: (C_out, C_in, k, k).  Returns NCHW f32."""
    if pool:
        # nn.MaxPool2d(2) in front of the conv: plain-JAX glue ahead of the kernels.
        x = lax.reduce_window(x, -jnp.inf, lax.max,
                              (1, 1, 2, 2), (1, 1, 2, 2), "VALID")

    n, c_in, h, w = x.shape
    c_out = weight.shape[0]
    h_out = h + 2 * pad - (k - 1)
    w_out = w + 2 * pad - (k - 1)
    hp, wp = h + 2 * pad, w + 2 * pad
    m = n * h_out * w_out
    c_out_pad = _round_up(c_out, LANE)

    th = _pick_row_tile(n, h_out, w_out)
    r_tiles = h_out // th
    grid = (n, r_tiles)

    # Spatially padded NHWC bf16 image (1x input traffic; no im2col blowup).
    x_nhwc = jnp.pad(x, ((0, 0), (0, 0), (pad, pad), (pad, pad)))
    x_nhwc = x_nhwc.transpose(0, 2, 3, 1).astype(jnp.bfloat16)     # (N, Hp, Wp, C_in)

    # Per-tap weight matrices: (k*k, C_in, C_out_pad) bf16, zero-padded channels.
    w9 = jnp.transpose(weight, (2, 3, 1, 0)).reshape(k * k, c_in, c_out)
    w9 = jnp.pad(w9, ((0, 0), (0, 0), (0, c_out_pad - c_out))).astype(jnp.bfloat16)

    # Conv bias is exactly cancelled by train-mode BN mean subtraction.
    del bias

    cparams = pltpu.CompilerParams(
        dimension_semantics=("parallel", "parallel"),
        vmem_limit_bytes=VMEM_LIMIT)

    ckk = c_in * k * k
    conv_flops = 2 * m * ckk * c_out_pad
    x_bytes = n * hp * wp * c_in * 2
    w_bytes = k * k * c_in * c_out_pad * 2

    # -- Pass 1: conv + partial (sum, sum-of-squares) per tile ----------------
    stats = pl.pallas_call(
        functools.partial(_conv_stats_kernel, th=th, k=k),
        out_shape=jax.ShapeDtypeStruct((n, r_tiles, 2, c_out_pad), jnp.float32),
        grid=grid,
        in_specs=[
            # Whole padded image resident per n (index_map ignores r -> no re-DMA).
            pl.BlockSpec((None, hp, wp, c_in), lambda i, r: (i, 0, 0, 0)),
            pl.BlockSpec((k * k, c_in, c_out_pad), lambda i, r: (0, 0, 0)),
        ],
        out_specs=pl.BlockSpec((None, None, 2, c_out_pad), lambda i, r: (i, r, 0, 0)),
        compiler_params=cparams,
        cost_estimate=pl.CostEstimate(
            flops=conv_flops, transcendentals=0,
            bytes_accessed=x_bytes + w_bytes + n * r_tiles * 2 * c_out_pad * 4),
    )(x_nhwc, w9)

    # Combine partials -> global batch statistics -> fused scale/shift (tiny JAX).
    sums = jnp.sum(stats, axis=(0, 1))                      # (2, c_out_pad)
    mean = sums[0] / m
    var = jnp.maximum(sums[1] / m - mean * mean, 0.0)       # biased variance
    gamma_p = jnp.pad(gamma, (0, c_out_pad - c_out))
    beta_p = jnp.pad(beta, (0, c_out_pad - c_out))
    scale_vec = gamma_p * lax.rsqrt(var + EPS)
    shift_vec = beta_p - mean * scale_vec
    scale = scale_vec.reshape(1, c_out_pad).astype(jnp.float32)
    shift = shift_vec.reshape(1, c_out_pad).astype(jnp.float32)

    # -- Pass 2: conv recompute + BN + ReLU, channel-major lane-dense output --
    out = pl.pallas_call(
        functools.partial(_conv_bn_relu_kernel, th=th, k=k),
        out_shape=jax.ShapeDtypeStruct((n, c_out, h_out * w_out), jnp.float32),
        grid=grid,
        in_specs=[
            pl.BlockSpec((None, hp, wp, c_in), lambda i, r: (i, 0, 0, 0)),
            pl.BlockSpec((k * k, c_in, c_out_pad), lambda i, r: (0, 0, 0)),
            pl.BlockSpec((1, c_out_pad), lambda i, r: (0, 0)),
            pl.BlockSpec((1, c_out_pad), lambda i, r: (0, 0)),
        ],
        out_specs=pl.BlockSpec((None, c_out, th * w_out), lambda i, r: (i, 0, r)),
        compiler_params=cparams,
        cost_estimate=pl.CostEstimate(
            flops=conv_flops, transcendentals=0,
            bytes_accessed=x_bytes + w_bytes + m * c_out * 4),
    )(x_nhwc, w9, scale, shift)

    # (N, C_out, H*W) -> (N, C_out, H, W): pure reshape, no transpose.
    return out.reshape(n, c_out, h_out, w_out)


def _reference(x, weight, bias, gamma, beta, pad=1):
    """Pure-JAX f32 reference (conv + train-mode batchnorm + relu)."""
    y = lax.conv_general_dilated(
        x, weight, window_strides=(1, 1), padding=[(pad, pad), (pad, pad)],
        dimension_numbers=("NCHW", "OIHW", "NCHW"))
    y = y + bias.reshape(1, -1, 1, 1)
    mean = jnp.mean(y, axis=(0, 2, 3), keepdims=True)
    var = jnp.mean((y - mean) ** 2, axis=(0, 2, 3), keepdims=True)
    y = (y - mean) * lax.rsqrt(var + EPS)
    y = y * gamma.reshape(1, -1, 1, 1) + beta.reshape(1, -1, 1, 1)
    return jnp.maximum(y, 0.0)


if __name__ == "__main__":
    # Shapes consistent with conv_block(in_c=4, out_c=8, size=3, padding=1, pool=False)
    N, C_IN, C_OUT, H, W, K = 2, 4, 8, 16, 16, 3

    key = jax.random.PRNGKey(0)
    kx, kw_, kb = jax.random.split(key, 3)

    x = jax.random.normal(kx, (N, C_IN, H, W), dtype=jnp.float32)

    # Deterministic parameter init (PyTorch-like uniform bound for Conv2d).
    fan_in = C_IN * K * K
    bound = fan_in ** -0.5
    weight = jax.random.uniform(kw_, (C_OUT, C_IN, K, K), jnp.float32, -bound, bound)
    bias = jax.random.uniform(kb, (C_OUT,), jnp.float32, -bound, bound)
    gamma = jnp.ones((C_OUT,), jnp.float32)   # BatchNorm2d weight init
    beta = jnp.zeros((C_OUT,), jnp.float32)   # BatchNorm2d bias init

    out = conv_block_forward(x, weight, bias, gamma, beta, k=K, pad=1)
    out = jax.block_until_ready(out)

    ref = jax.block_until_ready(_reference(x, weight, bias, gamma, beta, pad=1))
    assert out.shape == (N, C_OUT, H, W)
    # bf16 MXU inputs -> loosened tolerance (f32 accumulation + f32 BN math).
    assert bool(jnp.allclose(out, ref, atol=5e-2, rtol=5e-2)), "mismatch vs reference"

    print("KERNEL_OK")
</pallas_src>

<mosaic_0001>
module attributes {stable_mosaic.version = 11 : i64} {
  func.func @_conv_stats_kernel(%arg0: i32, %arg1: i32, %arg2: memref<1x18x18x4xbf16, #tpu.memory_space<vmem>>, %arg3: memref<9x4x128xbf16, #tpu.memory_space<vmem>>, %arg4: memref<1x1x2x128xf32, #tpu.memory_space<vmem>>) attributes {dimension_semantics = [#tpu.dimension_semantics<parallel>, #tpu.dimension_semantics<parallel>], iteration_bounds = array<i64: 2, 2>, scalar_prefetch = 0 : i64, scratch_operands = 0 : i64, tpu.core_type = #tpu.core_type<tc>, window_params = [{transform_indices = @transform_0, window_bounds = array<i64: 1, 18, 18, 4>}, {pipeline_mode = #tpu.pipeline_mode<synchronous>, transform_indices = @transform_1, window_bounds = array<i64: 9, 4, 128>}, {transform_indices = @transform_2, window_bounds = array<i64: 1, 1, 2, 128>}]} {
    %c8_i32 = arith.constant 8 : i32
    %0 = arith.muli %arg1, %c8_i32 : i32
    %1 = tpu.assume_multiple %0, 8 : i32
    %c0 = arith.constant 0 : index
    %2 = arith.index_cast %1 : i32 to index
    %c0_0 = arith.constant 0 : index
    %c0_1 = arith.constant 0 : index
    %3 = vector.load %arg2[%c0, %2, %c0_0, %c0_1] : memref<1x18x18x4xbf16, #tpu.memory_space<vmem>>, vector<1x10x18x4xbf16>
    %4 = vector.shape_cast %3 : vector<1x10x18x4xbf16> to vector<10x18x4xbf16>
    %cst = arith.constant 0.000000e+00 : f32
    %5 = vector.broadcast %cst : f32 to vector<128x128xf32>
    %6 = vector.extract_strided_slice %4 {offsets = [0, 0, 0], sizes = [8, 16, 4], strides = [1, 1, 1]} : vector<10x18x4xbf16> to vector<8x16x4xbf16>
    %7 = vector.shape_cast %6 : vector<8x16x4xbf16> to vector<128x4xbf16>
    %c0_2 = arith.constant 0 : index
    %c0_3 = arith.constant 0 : index
    %c0_4 = arith.constant 0 : index
    %8 = vector.load %arg3[%c0_2, %c0_3, %c0_4] : memref<9x4x128xbf16, #tpu.memory_space<vmem>>, vector<1x4x128xbf16>
    %9 = vector.shape_cast %8 : vector<1x4x128xbf16> to vector<4x128xbf16>
    %cst_5 = arith.constant dense<0.000000e+00> : vector<128x128xf32>
    %10 = tpu.matmul %7, %9, %cst_5 {dimension_numbers = #tpu.dot_dimension_numbers<[1], [0], [0], [1], [0, 0, 1, 1], [], []>} : vector<128x4xbf16>, vector<4x128xbf16>, vector<128x128xf32> -> vector<128x128xf32>
    %11 = arith.addf %5, %10 : vector<128x128xf32>
    %12 = vector.extract_strided_slice %4 {offsets = [0, 1, 0], sizes = [8, 16, 4], strides = [1, 1, 1]} : vector<10x18x4xbf16> to vector<8x16x4xbf16>
    %13 = vector.shape_cast %12 : vector<8x16x4xbf16> to vector<128x4xbf16>
    %c1 = arith.constant 1 : index
    %c0_6 = arith.constant 0 : index
    %c0_7 = arith.constant 0 : index
    %14 = vector.load %arg3[%c1, %c0_6, %c0_7] : memref<9x4x128xbf16, #tpu.memory_space<vmem>>, vector<1x4x128xbf16>
    %15 = vector.shape_cast %14 : vector<1x4x128xbf16> to vector<4x128xbf16>
    %cst_8 = arith.constant dense<0.000000e+00> : vector<128x128xf32>
    %16 = tpu.matmul %13, %15, %cst_8 {dimension_numbers = #tpu.dot_dimension_numbers<[1], [0], [0], [1], [0, 0, 1, 1], [], []>} : vector<128x4xbf16>, vector<4x128xbf16>, vector<128x128xf32> -> vector<128x128xf32>
    %17 = arith.addf %11, %16 : vector<128x128xf32>
    %18 = vector.extract_strided_slice %4 {offsets = [0, 2, 0], sizes = [8, 16, 4], strides = [1, 1, 1]} : vector<10x18x4xbf16> to vector<8x16x4xbf16>
    %19 = vector.shape_cast %18 : vector<8x16x4xbf16> to vector<128x4xbf16>
    %c2 = arith.constant 2 : index
    %c0_9 = arith.constant 0 : index
    %c0_10 = arith.constant 0 : index
    %20 = vector.load %arg3[%c2, %c0_9, %c0_10] : memref<9x4x128xbf16, #tpu.memory_space<vmem>>, vector<1x4x128xbf16>
    %21 = vector.shape_cast %20 : vector<1x4x128xbf16> to vector<4x128xbf16>
    %cst_11 = arith.constant dense<0.000000e+00> : vector<128x128xf32>
    %22 = tpu.matmul %19, %21, %cst_11 {dimension_numbers = #tpu.dot_dimension_numbers<[1], [0], [0], [1], [0, 0, 1, 1], [], []>} : vector<128x4xbf16>, vector<4x128xbf16>, vector<128x128xf32> -> vector<128x128xf32>
    %23 = arith.addf %17, %22 : vector<128x128xf32>
    %24 = vector.extract_strided_slice %4 {offsets = [1, 0, 0], sizes = [8, 16, 4], strides = [1, 1, 1]} : vector<10x18x4xbf16> to vector<8x16x4xbf16>
    %25 = vector.shape_cast %24 : vector<8x16x4xbf16> to vector<128x4xbf16>
    %c3 = arith.constant 3 : index
    %c0_12 = arith.constant 0 : index
    %c0_13 = arith.constant 0 : index
    %26 = vector.load %arg3[%c3, %c0_12, %c0_13] : memref<9x4x128xbf16, #tpu.memory_space<vmem>>, vector<1x4x128xbf16>
    %27 = vector.shape_cast %26 : vector<1x4x128xbf16> to vector<4x128xbf16>
    %cst_14 = arith.constant dense<0.000000e+00> : vector<128x128xf32>
    %28 = tpu.matmul %25, %27, %cst_14 {dimension_numbers = #tpu.dot_dimension_numbers<[1], [0], [0], [1], [0, 0, 1, 1], [], []>} : vector<128x4xbf16>, vector<4x128xbf16>, vector<128x128xf32> -> vector<128x128xf32>
    %29 = arith.addf %23, %28 : vector<128x128xf32>
    %30 = vector.extract_strided_slice %4 {offsets = [1, 1, 0], sizes = [8, 16, 4], strides = [1, 1, 1]} : vector<10x18x4xbf16> to vector<8x16x4xbf16>
    %31 = vector.shape_cast %30 : vector<8x16x4xbf16> to vector<128x4xbf16>
    %c4 = arith.constant 4 : index
    %c0_15 = arith.constant 0 : index
    %c0_16 = arith.constant 0 : index
    %32 = vector.load %arg3[%c4, %c0_15, %c0_16] : memref<9x4x128xbf16, #tpu.memory_space<vmem>>, vector<1x4x128xbf16>
    %33 = vector.shape_cast %32 : vector<1x4x128xbf16> to vector<4x128xbf16>
    %cst_17 = arith.constant dense<0.000000e+00> : vector<128x128xf32>
    %34 = tpu.matmul %31, %33, %cst_17 {dimension_numbers = #tpu.dot_dimension_numbers<[1], [0], [0], [1], [0, 0, 1, 1], [], []>} : vector<128x4xbf16>, vector<4x128xbf16>, vector<128x128xf32> -> vector<128x128xf32>
    %35 = arith.addf %29, %34 : vector<128x128xf32>
    %36 = vector.extract_strided_slice %4 {offsets = [1, 2, 0], sizes = [8, 16, 4], strides = [1, 1, 1]} : vector<10x18x4xbf16> to vector<8x16x4xbf16>
    %37 = vector.shape_cast %36 : vector<8x16x4xbf16> to vector<128x4xbf16>
    %c5 = arith.constant 5 : index
    %c0_18 = arith.constant 0 : index
    %c0_19 = arith.constant 0 : index
    %38 = vector.load %arg3[%c5, %c0_18, %c0_19] : memref<9x4x128xbf16, #tpu.memory_space<vmem>>, vector<1x4x128xbf16>
    %39 = vector.shape_cast %38 : vector<1x4x128xbf16> to vector<4x128xbf16>
    %cst_20 = arith.constant dense<0.000000e+00> : vector<128x128xf32>
    %40 = tpu.matmul %37, %39, %cst_20 {dimension_numbers = #tpu.dot_dimension_numbers<[1], [0], [0], [1], [0, 0, 1, 1], [], []>} : vector<128x4xbf16>, vector<4x128xbf16>, vector<128x128xf32> -> vector<128x128xf32>
    %41 = arith.addf %35, %40 : vector<128x128xf32>
    %42 = vector.extract_strided_slice %4 {offsets = [2, 0, 0], sizes = [8, 16, 4], strides = [1, 1, 1]} : vector<10x18x4xbf16> to vector<8x16x4xbf16>
    %43 = vector.shape_cast %42 : vector<8x16x4xbf16> to vector<128x4xbf16>
    %c6 = arith.constant 6 : index
    %c0_21 = arith.constant 0 : index
    %c0_22 = arith.constant 0 : index
    %44 = vector.load %arg3[%c6, %c0_21, %c0_22] : memref<9x4x128xbf16, #tpu.memory_space<vmem>>, vector<1x4x128xbf16>
    %45 = vector.shape_cast %44 : vector<1x4x128xbf16> to vector<4x128xbf16>
    %cst_23 = arith.constant dense<0.000000e+00> : vector<128x128xf32>
    %46 = tpu.matmul %43, %45, %cst_23 {dimension_numbers = #tpu.dot_dimension_numbers<[1], [0], [0], [1], [0, 0, 1, 1], [], []>} : vector<128x4xbf16>, vector<4x128xbf16>, vector<128x128xf32> -> vector<128x128xf32>
    %47 = arith.addf %41, %46 : vector<128x128xf32>
    %48 = vector.extract_strided_slice %4 {offsets = [2, 1, 0], sizes = [8, 16, 4], strides = [1, 1, 1]} : vector<10x18x4xbf16> to vector<8x16x4xbf16>
    %49 = vector.shape_cast %48 : vector<8x16x4xbf16> to vector<128x4xbf16>
    %c7 = arith.constant 7 : index
    %c0_24 = arith.constant 0 : index
    %c0_25 = arith.constant 0 : index
    %50 = vector.load %arg3[%c7, %c0_24, %c0_25] : memref<9x4x128xbf16, #tpu.memory_space<vmem>>, vector<1x4x128xbf16>
    %51 = vector.shape_cast %50 : vector<1x4x128xbf16> to vector<4x128xbf16>
    %cst_26 = arith.constant dense<0.000000e+00> : vector<128x128xf32>
    %52 = tpu.matmul %49, %51, %cst_26 {dimension_numbers = #tpu.dot_dimension_numbers<[1], [0], [0], [1], [0, 0, 1, 1], [], []>} : vector<128x4xbf16>, vector<4x128xbf16>, vector<128x128xf32> -> vector<128x128xf32>
    %53 = arith.addf %47, %52 : vector<128x128xf32>
    %54 = vector.extract_strided_slice %4 {offsets = [2, 2, 0], sizes = [8, 16, 4], strides = [1, 1, 1]} : vector<10x18x4xbf16> to vector<8x16x4xbf16>
    %55 = vector.shape_cast %54 : vector<8x16x4xbf16> to vector<128x4xbf16>
    %c8 = arith.constant 8 : index
    %c0_27 = arith.constant 0 : index
    %c0_28 = arith.constant 0 : index
    %56 = vector.load %arg3[%c8, %c0_27, %c0_28] : memref<9x4x128xbf16, #tpu.memory_space<vmem>>, vector<1x4x128xbf16>
    %57 = vector.shape_cast %56 : vector<1x4x128xbf16> to vector<4x128xbf16>
    %cst_29 = arith.constant dense<0.000000e+00> : vector<128x128xf32>
    %58 = tpu.matmul %55, %57, %cst_29 {dimension_numbers = #tpu.dot_dimension_numbers<[1], [0], [0], [1], [0, 0, 1, 1], [], []>} : vector<128x4xbf16>, vector<4x128xbf16>, vector<128x128xf32> -> vector<128x128xf32>
    %59 = arith.addf %53, %58 : vector<128x128xf32>
    %cst_30 = arith.constant dense<0.000000e+00> : vector<128xf32>
    %60 = vector.multi_reduction <add>, %59, %cst_30 [0] : vector<128x128xf32> to vector<128xf32>
    %61 = vector.shape_cast %60 : vector<128xf32> to vector<1x128xf32>
    %62 = arith.mulf %59, %59 : vector<128x128xf32>
    %cst_31 = arith.constant dense<0.000000e+00> : vector<128xf32>
    %63 = vector.multi_reduction <add>, %62, %cst_31 [0] : vector<128x128xf32> to vector<128xf32>
    %64 = vector.shape_cast %63 : vector<128xf32> to vector<1x128xf32>
    %65 = tpu.concatenate %61, %64 in 0 : vector<1x128xf32>, vector<1x128xf32> -> vector<2x128xf32>
    %c0_32 = arith.constant 0 : index
    %c0_33 = arith.constant 0 : index
    %c0_34 = arith.constant 0 : index
    %c0_35 = arith.constant 0 : index
    %66 = vector.load %arg4[%c0_32, %c0_33, %c0_34, %c0_35] : memref<1x1x2x128xf32, #tpu.memory_space<vmem>>, vector<1x1x2x128xf32>
    %67 = vector.shape_cast %66 : vector<1x1x2x128xf32> to vector<2x128xf32>
    %68 = vector.shape_cast %65 : vector<2x128xf32> to vector<1x1x2x128xf32>
    tpu.vector_store %arg4[%c0_32, %c0_33, %c0_34, %c0_35], %68 {strides = array<i32>} : memref<1x1x2x128xf32, #tpu.memory_space<vmem>>, vector<1x1x2x128xf32>,
    return
  }
  func.func @transform_0(%arg0: i32, %arg1: i32) -> (i32, i32, i32, i32) {
    %c0_i32 = arith.constant 0 : i32
    %c0_i32_0 = arith.constant 0 : i32
    %c0_i32_1 = arith.constant 0 : i32
    %c0_i32_2 = arith.constant 0 : i32
    return %arg0, %c0_i32, %c0_i32_0, %c0_i32_1 : i32, i32, i32, i32
  }
  func.func @transform_1(%arg0: i32, %arg1: i32) -> (i32, i32, i32) {
    %c0_i32 = arith.constant 0 : i32
    %c0_i32_0 = arith.constant 0 : i32
    %c0_i32_1 = arith.constant 0 : i32
    %c0_i32_2 = arith.constant 0 : i32
    return %c0_i32, %c0_i32_0, %c0_i32_1 : i32, i32, i32
  }
  func.func @transform_2(%arg0: i32, %arg1: i32) -> (i32, i32, i32, i32) {
    %c0_i32 = arith.constant 0 : i32
    %c0_i32_0 = arith.constant 0 : i32
    %c0_i32_1 = arith.constant 0 : i32
    return %arg0, %arg1, %c0_i32, %c0_i32_0 : i32, i32, i32, i32
  }
}

module attributes {stable_mosaic.version = 11 : i64} {
  func.func @_conv_bn_relu_kernel(%arg0: i32, %arg1: i32, %arg2: memref<1x18x18x4xbf16, #tpu.memory_space<vmem>>, %arg3: memref<9x4x128xbf16, #tpu.memory_space<vmem>>, %arg4: memref<1x128xf32, #tpu.memory_space<vmem>>, %arg5: memref<1x128xf32, #tpu.memory_space<vmem>>, %arg6: memref<1x8x128xf32, #tpu.memory_space<vmem>>) attributes {dimension_semantics = [#tpu.dimension_semantics<parallel>, #tpu.dimension_semantics<parallel>], iteration_bounds = array<i64: 2, 2>, scalar_prefetch = 0 : i64, scratch_operands = 0 : i64, tpu.core_type = #tpu.core_type<tc>, window_params = [{transform_indices = @transform_0, window_bounds = array<i64: 1, 18, 18, 4>}, {pipeline_mode = #tpu.pipeline_mode<synchronous>, transform_indices = @transform_1, window_bounds = array<i64: 9, 4, 128>}, {pipeline_mode = #tpu.pipeline_mode<synchronous>, transform_indices = @transform_2, window_bounds = array<i64: 1, 128>}, {pipeline_mode = #tpu.pipeline_mode<synchronous>, transform_indices = @transform_3, window_bounds = array<i64: 1, 128>}, {transform_indices = @transform_4, window_bounds = array<i64: 1, 8, 128>}]} {
    %c8_i32 = arith.constant 8 : i32
    %0 = arith.muli %arg1, %c8_i32 : i32
    %1 = tpu.assume_multiple %0, 8 : i32
    %c0 = arith.constant 0 : index
    %2 = arith.index_cast %1 : i32 to index
    %c0_0 = arith.constant 0 : index
    %c0_1 = arith.constant 0 : index
    %3 = vector.load %arg2[%c0, %2, %c0_0, %c0_1] : memref<1x18x18x4xbf16, #tpu.memory_space<vmem>>, vector<1x10x18x4xbf16>
    %4 = vector.shape_cast %3 : vector<1x10x18x4xbf16> to vector<10x18x4xbf16>
    %cst = arith.constant 0.000000e+00 : f32
    %5 = vector.broadcast %cst : f32 to vector<128x128xf32>
    %6 = vector.extract_strided_slice %4 {offsets = [0, 0, 0], sizes = [8, 16, 4], strides = [1, 1, 1]} : vector<10x18x4xbf16> to vector<8x16x4xbf16>
    %7 = vector.shape_cast %6 : vector<8x16x4xbf16> to vector<128x4xbf16>
    %c0_2 = arith.constant 0 : index
    %c0_3 = arith.constant 0 : index
    %c0_4 = arith.constant 0 : index
    %8 = vector.load %arg3[%c0_2, %c0_3, %c0_4] : memref<9x4x128xbf16, #tpu.memory_space<vmem>>, vector<1x4x128xbf16>
    %9 = vector.shape_cast %8 : vector<1x4x128xbf16> to vector<4x128xbf16>
    %cst_5 = arith.constant dense<0.000000e+00> : vector<128x128xf32>
    %10 = tpu.matmul %7, %9, %cst_5 {dimension_numbers = #tpu.dot_dimension_numbers<[1], [0], [0], [1], [0, 0, 1, 1], [], []>} : vector<128x4xbf16>, vector<4x128xbf16>, vector<128x128xf32> -> vector<128x128xf32>
    %11 = arith.addf %5, %10 : vector<128x128xf32>
    %12 = vector.extract_strided_slice %4 {offsets = [0, 1, 0], sizes = [8, 16, 4], strides = [1, 1, 1]} : vector<10x18x4xbf16> to vector<8x16x4xbf16>
    %13 = vector.shape_cast %12 : vector<8x16x4xbf16> to vector<128x4xbf16>
    %c1 = arith.constant 1 : index
    %c0_6 = arith.constant 0 : index
    %c0_7 = arith.constant 0 : index
    %14 = vector.load %arg3[%c1, %c0_6, %c0_7] : memref<9x4x128xbf16, #tpu.memory_space<vmem>>, vector<1x4x128xbf16>
    %15 = vector.shape_cast %14 : vector<1x4x128xbf16> to vector<4x128xbf16>
    %cst_8 = arith.constant dense<0.000000e+00> : vector<128x128xf32>
    %16 = tpu.matmul %13, %15, %cst_8 {dimension_numbers = #tpu.dot_dimension_numbers<[1], [0], [0], [1], [0, 0, 1, 1], [], []>} : vector<128x4xbf16>, vector<4x128xbf16>, vector<128x128xf32> -> vector<128x128xf32>
    %17 = arith.addf %11, %16 : vector<128x128xf32>
    %18 = vector.extract_strided_slice %4 {offsets = [0, 2, 0], sizes = [8, 16, 4], strides = [1, 1, 1]} : vector<10x18x4xbf16> to vector<8x16x4xbf16>
    %19 = vector.shape_cast %18 : vector<8x16x4xbf16> to vector<128x4xbf16>
    %c2 = arith.constant 2 : index
    %c0_9 = arith.constant 0 : index
    %c0_10 = arith.constant 0 : index
    %20 = vector.load %arg3[%c2, %c0_9, %c0_10] : memref<9x4x128xbf16, #tpu.memory_space<vmem>>, vector<1x4x128xbf16>
    %21 = vector.shape_cast %20 : vector<1x4x128xbf16> to vector<4x128xbf16>
    %cst_11 = arith.constant dense<0.000000e+00> : vector<128x128xf32>
    %22 = tpu.matmul %19, %21, %cst_11 {dimension_numbers = #tpu.dot_dimension_numbers<[1], [0], [0], [1], [0, 0, 1, 1], [], []>} : vector<128x4xbf16>, vector<4x128xbf16>, vector<128x128xf32> -> vector<128x128xf32>
    %23 = arith.addf %17, %22 : vector<128x128xf32>
    %24 = vector.extract_strided_slice %4 {offsets = [1, 0, 0], sizes = [8, 16, 4], strides = [1, 1, 1]} : vector<10x18x4xbf16> to vector<8x16x4xbf16>
    %25 = vector.shape_cast %24 : vector<8x16x4xbf16> to vector<128x4xbf16>
    %c3 = arith.constant 3 : index
    %c0_12 = arith.constant 0 : index
    %c0_13 = arith.constant 0 : index
    %26 = vector.load %arg3[%c3, %c0_12, %c0_13] : memref<9x4x128xbf16, #tpu.memory_space<vmem>>, vector<1x4x128xbf16>
    %27 = vector.shape_cast %26 : vector<1x4x128xbf16> to vector<4x128xbf16>
    %cst_14 = arith.constant dense<0.000000e+00> : vector<128x128xf32>
    %28 = tpu.matmul %25, %27, %cst_14 {dimension_numbers = #tpu.dot_dimension_numbers<[1], [0], [0], [1], [0, 0, 1, 1], [], []>} : vector<128x4xbf16>, vector<4x128xbf16>, vector<128x128xf32> -> vector<128x128xf32>
    %29 = arith.addf %23, %28 : vector<128x128xf32>
    %30 = vector.extract_strided_slice %4 {offsets = [1, 1, 0], sizes = [8, 16, 4], strides = [1, 1, 1]} : vector<10x18x4xbf16> to vector<8x16x4xbf16>
    %31 = vector.shape_cast %30 : vector<8x16x4xbf16> to vector<128x4xbf16>
    %c4 = arith.constant 4 : index
    %c0_15 = arith.constant 0 : index
    %c0_16 = arith.constant 0 : index
    %32 = vector.load %arg3[%c4, %c0_15, %c0_16] : memref<9x4x128xbf16, #tpu.memory_space<vmem>>, vector<1x4x128xbf16>
    %33 = vector.shape_cast %32 : vector<1x4x128xbf16> to vector<4x128xbf16>
    %cst_17 = arith.constant dense<0.000000e+00> : vector<128x128xf32>
    %34 = tpu.matmul %31, %33, %cst_17 {dimension_numbers = #tpu.dot_dimension_numbers<[1], [0], [0], [1], [0, 0, 1, 1], [], []>} : vector<128x4xbf16>, vector<4x128xbf16>, vector<128x128xf32> -> vector<128x128xf32>
    %35 = arith.addf %29, %34 : vector<128x128xf32>
    %36 = vector.extract_strided_slice %4 {offsets = [1, 2, 0], sizes = [8, 16, 4], strides = [1, 1, 1]} : vector<10x18x4xbf16> to vector<8x16x4xbf16>
    %37 = vector.shape_cast %36 : vector<8x16x4xbf16> to vector<128x4xbf16>
    %c5 = arith.constant 5 : index
    %c0_18 = arith.constant 0 : index
    %c0_19 = arith.constant 0 : index
    %38 = vector.load %arg3[%c5, %c0_18, %c0_19] : memref<9x4x128xbf16, #tpu.memory_space<vmem>>, vector<1x4x128xbf16>
    %39 = vector.shape_cast %38 : vector<1x4x128xbf16> to vector<4x128xbf16>
    %cst_20 = arith.constant dense<0.000000e+00> : vector<128x128xf32>
    %40 = tpu.matmul %37, %39, %cst_20 {dimension_numbers = #tpu.dot_dimension_numbers<[1], [0], [0], [1], [0, 0, 1, 1], [], []>} : vector<128x4xbf16>, vector<4x128xbf16>, vector<128x128xf32> -> vector<128x128xf32>
    %41 = arith.addf %35, %40 : vector<128x128xf32>
    %42 = vector.extract_strided_slice %4 {offsets = [2, 0, 0], sizes = [8, 16, 4], strides = [1, 1, 1]} : vector<10x18x4xbf16> to vector<8x16x4xbf16>
    %43 = vector.shape_cast %42 : vector<8x16x4xbf16> to vector<128x4xbf16>
    %c6 = arith.constant 6 : index
    %c0_21 = arith.constant 0 : index
    %c0_22 = arith.constant 0 : index
    %44 = vector.load %arg3[%c6, %c0_21, %c0_22] : memref<9x4x128xbf16, #tpu.memory_space<vmem>>, vector<1x4x128xbf16>
    %45 = vector.shape_cast %44 : vector<1x4x128xbf16> to vector<4x128xbf16>
    %cst_23 = arith.constant dense<0.000000e+00> : vector<128x128xf32>
    %46 = tpu.matmul %43, %45, %cst_23 {dimension_numbers = #tpu.dot_dimension_numbers<[1], [0], [0], [1], [0, 0, 1, 1], [], []>} : vector<128x4xbf16>, vector<4x128xbf16>, vector<128x128xf32> -> vector<128x128xf32>
    %47 = arith.addf %41, %46 : vector<128x128xf32>
    %48 = vector.extract_strided_slice %4 {offsets = [2, 1, 0], sizes = [8, 16, 4], strides = [1, 1, 1]} : vector<10x18x4xbf16> to vector<8x16x4xbf16>
    %49 = vector.shape_cast %48 : vector<8x16x4xbf16> to vector<128x4xbf16>
    %c7 = arith.constant 7 : index
    %c0_24 = arith.constant 0 : index
    %c0_25 = arith.constant 0 : index
    %50 = vector.load %arg3[%c7, %c0_24, %c0_25] : memref<9x4x128xbf16, #tpu.memory_space<vmem>>, vector<1x4x128xbf16>
    %51 = vector.shape_cast %50 : vector<1x4x128xbf16> to vector<4x128xbf16>
    %cst_26 = arith.constant dense<0.000000e+00> : vector<128x128xf32>
    %52 = tpu.matmul %49, %51, %cst_26 {dimension_numbers = #tpu.dot_dimension_numbers<[1], [0], [0], [1], [0, 0, 1, 1], [], []>} : vector<128x4xbf16>, vector<4x128xbf16>, vector<128x128xf32> -> vector<128x128xf32>
    %53 = arith.addf %47, %52 : vector<128x128xf32>
    %54 = vector.extract_strided_slice %4 {offsets = [2, 2, 0], sizes = [8, 16, 4], strides = [1, 1, 1]} : vector<10x18x4xbf16> to vector<8x16x4xbf16>
    %55 = vector.shape_cast %54 : vector<8x16x4xbf16> to vector<128x4xbf16>
    %c8 = arith.constant 8 : index
    %c0_27 = arith.constant 0 : index
    %c0_28 = arith.constant 0 : index
    %56 = vector.load %arg3[%c8, %c0_27, %c0_28] : memref<9x4x128xbf16, #tpu.memory_space<vmem>>, vector<1x4x128xbf16>
    %57 = vector.shape_cast %56 : vector<1x4x128xbf16> to vector<4x128xbf16>
    %cst_29 = arith.constant dense<0.000000e+00> : vector<128x128xf32>
    %58 = tpu.matmul %55, %57, %cst_29 {dimension_numbers = #tpu.dot_dimension_numbers<[1], [0], [0], [1], [0, 0, 1, 1], [], []>} : vector<128x4xbf16>, vector<4x128xbf16>, vector<128x128xf32> -> vector<128x128xf32>
    %59 = arith.addf %53, %58 : vector<128x128xf32>
    %c0_30 = arith.constant 0 : index
    %c0_31 = arith.constant 0 : index
    %60 = vector.load %arg4[%c0_30, %c0_31] : memref<1x128xf32, #tpu.memory_space<vmem>>, vector<1x128xf32>
    %61 = vector.broadcast %60 : vector<1x128xf32> to vector<128x128xf32>
    %62 = arith.mulf %59, %61 : vector<128x128xf32>
    %c0_32 = arith.constant 0 : index
    %c0_33 = arith.constant 0 : index
    %63 = vector.load %arg5[%c0_32, %c0_33] : memref<1x128xf32, #tpu.memory_space<vmem>>, vector<1x128xf32>
    %64 = vector.broadcast %63 : vector<1x128xf32> to vector<128x128xf32>
    %65 = arith.addf %62, %64 : vector<128x128xf32>
    %cst_34 = arith.constant 0.000000e+00 : f32
    %66 = vector.broadcast %cst_34 : f32 to vector<128x128xf32>
    %67 = arith.maximumf %65, %66 : vector<128x128xf32>
    %68 = tpu.transpose %67, [1, 0] : vector<128x128xf32> -> vector<128x128xf32>
    %69 = vector.extract_strided_slice %68 {offsets = [0, 0], sizes = [8, 128], strides = [1, 1]} : vector<128x128xf32> to vector<8x128xf32>
    %c0_35 = arith.constant 0 : index
    %c0_36 = arith.constant 0 : index
    %c0_37 = arith.constant 0 : index
    %70 = vector.load %arg6[%c0_35, %c0_36, %c0_37] : memref<1x8x128xf32, #tpu.memory_space<vmem>>, vector<1x8x128xf32>
    %71 = vector.shape_cast %70 : vector<1x8x128xf32> to vector<8x128xf32>
    %72 = vector.shape_cast %69 : vector<8x128xf32> to vector<1x8x128xf32>
    tpu.vector_store %arg6[%c0_35, %c0_36, %c0_37], %72 {strides = array<i32>} : memref<1x8x128xf32, #tpu.memory_space<vmem>>, vector<1x8x128xf32>,
    return
  }
  func.func @transform_0(%arg0: i32, %arg1: i32) -> (i32, i32, i32, i32) {
    %c0_i32 = arith.constant 0 : i32
    %c0_i32_0 = arith.constant 0 : i32
    %c0_i32_1 = arith.constant 0 : i32
    %c0_i32_2 = arith.constant 0 : i32
    return %arg0, %c0_i32, %c0_i32_0, %c0_i32_1 : i32, i32, i32, i32
  }
  func.func @transform_1(%arg0: i32, %arg1: i32) -> (i32, i32, i32) {
    %c0_i32 = arith.constant 0 : i32
    %c0_i32_0 = arith.constant 0 : i32
    %c0_i32_1 = arith.constant 0 : i32
    %c0_i32_2 = arith.constant 0 : i32
    return %c0_i32, %c0_i32_0, %c0_i32_1 : i32, i32, i32
  }
  func.func @transform_2(%arg0: i32, %arg1: i32) -> (i32, i32) {
    %c0_i32 = arith.constant 0 : i32
    %c0_i32_0 = arith.constant 0 : i32
    %c0_i32_1 = arith.constant 0 : i32
    return %c0_i32, %c0_i32_0 : i32, i32
  }
  func.func @transform_3(%arg0: i32, %arg1: i32) -> (i32, i32) {
    %c0_i32 = arith.constant 0 : i32
    %c0_i32_0 = arith.constant 0 : i32
    %c0_i32_1 = arith.constant 0 : i32
    return %c0_i32, %c0_i32_0 : i32, i32
  }
  func.func @transform_4(%arg0: i32, %arg1: i32) -> (i32, i32, i32) {
    %c0_i32 = arith.constant 0 : i32
    %c0_i32_0 = arith.constant 0 : i32
    return %arg0, %c0_i32, %arg1 : i32, i32, i32
  }
}

</mosaic_0001>

<llo_original>
// kernel: conv_block_forward.3
$region0: #{conv_block_forward.3}
  #allocation0 [shape = 'u32[]', space=smem, size = 0x4, offset = 0x4, fixed_abs, tag = 'smem constant byte address 0x4 - core index']
  #allocation1 [shape = 'u32[144,128]{1,0:T(1,128)}', space=vmem, size = 0x12000, scoped, tag = 'internal scratch']
  %s0 = inlined_call_operand.vmem [shape: bf16[2,18,18,4], index: 0, kind: input, shape index: {}]
  %s1 = inlined_call_operand.vmem [shape: bf16[9,4,128], index: 1, kind: input, shape index: {}]
  %s2 = inlined_call_operand.vmem [shape: f32[1,128], index: 2, kind: input, shape index: {}]
  %s3 = inlined_call_operand.vmem [shape: f32[1,128], index: 3, kind: input, shape index: {}]
  %s4 = inlined_call_operand.vmem [shape: f32[2,8,256], index: 4, kind: output, shape index: {}]
  %s5 = sld [smem:[#allocation0]]
  $region49: #{conv_block_forward.3} parent=0
    _
  %s7 = ssub.s32 1, %s5
  %s8 = scalar_select 0, %s7, %s5
  loop: start=0, step=1, limit=6
  $region2: #{conv_block_forward.3} parent=0 // loop_pre_header
    _
  $region3: #{conv_block_forward.3} parent=0 // loop_header
    %s10 = sphi 0, %s14
    %p11 = scmp.ge.s32.totalorder %s10, 6
    %s17 = sphi 0, %s29
    %s18 = sphi 0, %s25
    %s19 = sphi 0, %s17
    %s20 = sphi 0, %s18
    %s21 = sphi 0, %s19
    %s22 = sphi 0, %s20
    %s32 = sphi 0, %s34
    %s35 = sphi 0, %s32
    %s36 = sphi 0, %s35
    %s52 = sphi 0, %s36
    %s56 = sphi 0, %s56
    %s58 = sphi 0, %s56
    %s59 = sphi 0, %s58
    %s73 = sphi 0, %s59
    %s77 = sphi 0, %s77
    %s79 = sphi 0, %s77
    %s80 = sphi 0, %s79
    %s94 = sphi 0, %s80
    %s98 = sphi 0, %s98
    %s100 = sphi 0, %s98
    %s101 = sphi 0, %s100
    %s115 = sphi 0, %s101
    %s123 = sphi 0, %s125
    %s126 = sphi 0, %s123
    %s127 = sphi 0, %s126
    %s143 = sphi 0, %s127
  $region4: #{conv_block_forward.3} parent=0 // loop_header_branch
    %13 = sbr.rel (%p11) target = $region8
  $region5: #{conv_block_forward.3} parent=0 // loop_body
    %s15 = ssub.s32 %s10, 1
    %s16 = ssub.s32 %s10, 2
    %s23 = sadd.s32 1, %s18
    %p24 = scmp.ge.s32.totalorder %s23, 2
    %s25 = scalar_select %p24, 0, %s23
    %s26 = sadd.s32 1, %s17
    %s27 = scalar_select %p24, %s26, %s17
    %p28 = scmp.ge.s32.totalorder %s27, 2
    %s29 = scalar_select %p28, 0, %s27
    %s30 = ssub.s32 %s17, %s29
    %p31 = scmp.eq.s32.totalorder %s30, 0
    %s33 = sadd.s32 %s32, 1
    %s34 = scalar_select %p31, %s32, %s33
    %p37 = pneg %p31
    %p38 = scmp.eq.s32.totalorder %s10, 3
    %p39 = por %p37, %p38
    %p40 = scmp.ne.s32.totalorder %s32, %s35
    %p41 = scmp.eq.s32.totalorder %s10, 0
    %p42 = por %p40, %p41
    %p43 = scmp.ne.s32.totalorder %s32, %s35
    %p44 = scmp.eq.s32.totalorder %s15, 3
    %p45 = por %p43, %p44
    %p46 = scmp.ne.s32.totalorder %s35, %s36
    %p47 = scmp.eq.s32.totalorder %s15, 0
    %p48 = por %p46, %p47
    %p49 = scmp.ne.s32.totalorder %s35, %s36
    %p50 = scmp.eq.s32.totalorder %s16, 3
    %p51 = por %p49, %p50
    %p53 = scmp.ne.s32.totalorder %s36, %s52
    %p54 = scmp.eq.s32.totalorder %s16, 0
    %p55 = por %p53, %p54
    %s57 = sadd.s32 %s56, 1
    %p60 = scmp.eq.s32.totalorder %s10, 3
    %p61 = scmp.ne.s32.totalorder %s56, %s58
    %p62 = scmp.eq.s32.totalorder %s10, 0
    %p63 = por %p61, %p62
    %p64 = scmp.ne.s32.totalorder %s56, %s58
    %p65 = scmp.eq.s32.totalorder %s15, 3
    %p66 = por %p64, %p65
    %p67 = scmp.ne.s32.totalorder %s58, %s59
    %p68 = scmp.eq.s32.totalorder %s15, 0
    %p69 = por %p67, %p68
    %p70 = scmp.ne.s32.totalorder %s58, %s59
    %p71 = scmp.eq.s32.totalorder %s16, 3
    %p72 = por %p70, %p71
    %p74 = scmp.ne.s32.totalorder %s59, %s73
    %p75 = scmp.eq.s32.totalorder %s16, 0
    %p76 = por %p74, %p75
    %s78 = sadd.s32 %s77, 1
    %p81 = scmp.eq.s32.totalorder %s10, 3
    %p82 = scmp.ne.s32.totalorder %s77, %s79
    %p83 = scmp.eq.s32.totalorder %s10, 0
    %p84 = por %p82, %p83
    %p85 = scmp.ne.s32.totalorder %s77, %s79
    %p86 = scmp.eq.s32.totalorder %s15, 3
    %p87 = por %p85, %p86
    %p88 = scmp.ne.s32.totalorder %s79, %s80
    %p89 = scmp.eq.s32.totalorder %s15, 0
    %p90 = por %p88, %p89
    %p91 = scmp.ne.s32.totalorder %s79, %s80
    %p92 = scmp.eq.s32.totalorder %s16, 3
    %p93 = por %p91, %p92
    %p95 = scmp.ne.s32.totalorder %s80, %s94
    %p96 = scmp.eq.s32.totalorder %s16, 0
    %p97 = por %p95, %p96
    %s99 = sadd.s32 %s98, 1
    %p102 = scmp.eq.s32.totalorder %s10, 3
    %p103 = scmp.ne.s32.totalorder %s98, %s100
    %p104 = scmp.eq.s32.totalorder %s10, 0
    %p105 = por %p103, %p104
    %p106 = scmp.ne.s32.totalorder %s98, %s100
    %p107 = scmp.eq.s32.totalorder %s15, 3
    %p108 = por %p106, %p107
    %p109 = scmp.ne.s32.totalorder %s100, %s101
    %p110 = scmp.eq.s32.totalorder %s15, 0
    %p111 = por %p109, %p110
    %p112 = scmp.ne.s32.totalorder %s100, %s101
    %p113 = scmp.eq.s32.totalorder %s16, 3
    %p114 = por %p112, %p113
    %p116 = scmp.ne.s32.totalorder %s101, %s115
    %p117 = scmp.eq.s32.totalorder %s16, 0
    %p118 = por %p116, %p117
    %s119 = ssub.s32 %s17, %s29
    %s120 = ssub.s32 %s18, %s25
    %s121 = sor.u32 %s119, %s120
    %p122 = scmp.eq.s32.totalorder %s121, 0
    %s124 = sadd.s32 %s123, 1
    %s125 = scalar_select %p122, %s123, %s124
    %p128 = pneg %p122
    %p129 = scmp.eq.s32.totalorder %s10, 3
    %p130 = por %p128, %p129
    %p131 = scmp.ne.s32.totalorder %s123, %s126
    %p132 = scmp.eq.s32.totalorder %s10, 0
    %p133 = por %p131, %p132
    %p134 = scmp.ne.s32.totalorder %s123, %s126
    %p135 = scmp.eq.s32.totalorder %s15, 3
    %p136 = por %p134, %p135
    %p137 = scmp.ne.s32.totalorder %s126, %s127
    %p138 = scmp.eq.s32.totalorder %s15, 0
    %p139 = por %p137, %p138
    %p140 = scmp.ne.s32.totalorder %s126, %s127
    %p141 = scmp.eq.s32.totalorder %s16, 3
    %p142 = por %p140, %p141
    %p144 = scmp.ne.s32.totalorder %s127, %s143
    %p145 = scmp.eq.s32.totalorder %s16, 0
    %p146 = por %p144, %p145
    %p147 = scmp.le.s32.totalorder 1, %s10
    %p148 = scmp.lt.s32.totalorder %s10, 5
    %p149 = pnand %p147, %p148
    %p150 = pneg %p149
    // Predicated region
    $region9: #{conv_block_forward.3} parent=5 // pred_check
      _
    $region10: #{conv_block_forward.3} parent=5 // pred_check_branch
      %152 = sbr.rel (%p149) target = $region12
    $region11: #{conv_block_forward.3} parent=5 // pred_region
      %s153 = ssub.s32 %s10, 1
      // Predicated region
      $region13: #{conv_block_forward.3} parent=11 // pred_check
        %p154 = pneg %p69
      $region14: #{conv_block_forward.3} parent=11 // pred_check_branch
        %156 = sbr.rel (%p154) target = $region16
      $region15: #{conv_block_forward.3} parent=11 // pred_region
        _
      $region16: #{conv_block_forward.3} parent=11 // pred_fallthru
        _
      // Predicated region
      $region17: #{conv_block_forward.3} parent=11 // pred_check
        %p157 = pneg %p90
      $region18: #{conv_block_forward.3} parent=11 // pred_check_branch
        %159 = sbr.rel (%p157) target = $region20
      $region19: #{conv_block_forward.3} parent=11 // pred_region
        _
      $region20: #{conv_block_forward.3} parent=11 // pred_fallthru
        _
      // Predicated region
      $region21: #{conv_block_forward.3} parent=11 // pred_check
        %p160 = pneg %p111
      $region22: #{conv_block_forward.3} parent=11 // pred_check_branch
        %162 = sbr.rel (%p160) target = $region24
      $region23: #{conv_block_forward.3} parent=11 // pred_region
        _
      $region24: #{conv_block_forward.3} parent=11 // pred_fallthru
        _
    $region12: #{conv_block_forward.3} parent=5 // pred_fallthru
      _
    %p163 = scmp.lt.s32.totalorder %s10, 4
    // Predicated region
    $region25: #{conv_block_forward.3} parent=5 // pred_check
      %p164 = pneg %p163
    $region26: #{conv_block_forward.3} parent=5 // pred_check_branch
      %166 = sbr.rel (%p164) target = $region28
    $region27: #{conv_block_forward.3} parent=5 // pred_region
      // Predicated region
      $region29: #{conv_block_forward.3} parent=27 // pred_check
        %p167 = pneg %p42
      $region30: #{conv_block_forward.3} parent=27 // pred_check_branch
        %169 = sbr.rel (%p167) target = $region32
      $region31: #{conv_block_forward.3} parent=27 // pred_region
        %p170 = scmp.lt.s32.totalorder %s17, 1
        %s171 = scalar_select %p170, %s17, 1
        %s172 = smul.addr %s171, 54
        %s173 = smul.addr %s172, 4
        %s174 = scalar_lea.vmem %s0, %s173
      $region32: #{conv_block_forward.3} parent=27 // pred_fallthru
        _
    $region28: #{conv_block_forward.3} parent=5 // pred_fallthru
      _
    %p175 = scmp.le.s32.totalorder 1, %s10
    %p176 = scmp.lt.s32.totalorder %s10, 5
    %p177 = pnand %p175, %p176
    %p178 = pneg %p177
    // Predicated region
    $region33: #{conv_block_forward.3} parent=5 // pred_check
      _
    $region34: #{conv_block_forward.3} parent=5 // pred_check_branch
      %180 = sbr.rel (%p177) target = $region36
    $region35: #{conv_block_forward.3} parent=5 // pred_region
      %s181 = ssub.s32 %s10, 1
      %p182 = scmp.lt.s32.totalorder %s19, 1
      %s183 = scalar_select %p182, %s19, 1
      %s184 = smul.addr %s183, 54
      %s185 = smul.addr %s184, 4
      %s186 = scalar_lea.vmem %s0, %s185
      %p187 = pneg %p48
      %p188 = pneg %p45
      %p189 = pneg %p69
      %p190 = pneg %p66
      %p191 = pneg %p90
      %p192 = pneg %p87
      %p193 = pneg %p111
      %p194 = pneg %p108
      %p195 = pneg %p139
      %p196 = pneg %p136
      %p197 = scmp.lt.s32.totalorder %s19, 1
      %s198 = scalar_select %p197, %s19, 1
      %p199 = scmp.lt.s32.totalorder %s20, 1
      %s200 = scalar_select %p199, %s20, 1
      %s201 = smul.addr %s198, 2
      %s202 = sadd.s32 %s200, %s201
      %s203 = smul.addr %s202, 8
      %s204 = scalar_lea.vmem %s4, %s203
      %p205 = scmp.lt.s32.totalorder %s19, 1
      %s206 = scalar_select %p205, %s19, 1
      %s207 = smul.addr %s206, 54
      %s208 = smul.addr %s207, 4
      %s209 = scalar_lea.vmem %s0, %s208
      %p210 = scmp.lt.s32.totalorder %s19, 1
      %s211 = scalar_select %p210, %s19, 1
      %p212 = scmp.lt.s32.totalorder %s20, 1
      %s213 = scalar_select %p212, %s20, 1
      %s214 = smul.addr %s211, 2
      %s215 = sadd.s32 %s213, %s214
      %s216 = smul.addr %s215, 8
      %s217 = scalar_lea.vmem %s4, %s216
      %s219 = smul.u32 %s20, 8
      %s220 = smul.u32 %s219, 3
      %s221 = smul.addr %s220, 4
      %s222 = scalar_lea.vmem %s209, %s221
      %v223 = vld [vmem:[%s222] sm:$0xf]
      %v224 = vld [vmem:[%s222 + $0x4] sm:$0xf]
      %v225 = vld [vmem:[%s222 + $0x8] sm:$0x1]
      %v226 = vld [vmem:[%s222 + $0xc] sm:$0xf]
      %v227 = vld [vmem:[%s222 + $0x10] sm:$0xf]
      %v228 = vld [vmem:[%s222 + $0x14] sm:$0x1]
      %v229 = vld [vmem:[%s222 + $0x18] sm:$0xf]
      %v230 = vld [vmem:[%s222 + $0x1c] sm:$0xf]
      %v231 = vld [vmem:[%s222 + $0x20] sm:$0x1]
      %v232 = vld [vmem:[%s222 + $0x24] sm:$0xf]
      %v233 = vld [vmem:[%s222 + $0x28] sm:$0xf]
      %v234 = vld [vmem:[%s222 + $0x2c] sm:$0x1]
      %v235 = vld [vmem:[%s222 + $0x30] sm:$0xf]
      %v236 = vld [vmem:[%s222 + $0x34] sm:$0xf]
      %v237 = vld [vmem:[%s222 + $0x38] sm:$0x1]
      %v238 = vld [vmem:[%s222 + $0x3c] sm:$0xf]
      %v239 = vld [vmem:[%s222 + $0x40] sm:$0xf]
      %v240 = vld [vmem:[%s222 + $0x44] sm:$0x1]
      %v241 = vld [vmem:[%s222 + $0x48] sm:$0xf]
      %v242 = vld [vmem:[%s222 + $0x4c] sm:$0xf]
      %v243 = vld [vmem:[%s222 + $0x50] sm:$0x1]
      %v244 = vld [vmem:[%s222 + $0x54] sm:$0xf]
      %v245 = vld [vmem:[%s222 + $0x58] sm:$0xf]
      %v246 = vld [vmem:[%s222 + $0x5c] sm:$0x1]
      %v247 = vld [vmem:[%s222 + $0x60] sm:$0xf]
      %v248 = vld [vmem:[%s222 + $0x64] sm:$0xf]
      %v249 = vld [vmem:[%s222 + $0x68] sm:$0x1]
      %v250 = vld [vmem:[%s222 + $0x6c] sm:$0xf]
      %v251 = vld [vmem:[%s222 + $0x70] sm:$0xf]
      %v252 = vld [vmem:[%s222 + $0x74] sm:$0x1]
      %v253 = vld [vmem:[%s1] sm:$0x3]
      %vm254 = vsmask.f32 3328
      %vm255 = vsmask.f32 7440
      %vm256 = vmor %vm254, %vm255
      %v258 = vshrl.u32 %v223, 16
      %v260 = vrot.slane %v258, 4
      %v261 = vshll.u32 %v223, 16
      %v263 = vrot.slane %v261, 5
      %v264 = vor.u32 %v260, %v263
      %v265 = vrot.slane %v264, 4
      %v267 = vshll.u32 %v224, 16
      %v269 = vrot.slane %v267, 5
      %v270 = vsel %vm256, %v265, %v269
      %v271 = vshrl.u32 %v224, 16
      %v273 = vrot.slane %v271, 4
      %v274 = vor.u32 %v273, %v269
      %v275 = vrot.slane %v274, 4
      %v277 = vshll.u32 %v225, 16
      %v279 = vrot.slane %v277, 5
      %v280 = vsel %vm256, %v275, %v279
      %v282 = vshrl.u32 %v226, 16
      %v284 = vrot.slane %v282, 4
      %v285 = vshll.u32 %v226, 16
      %v287 = vrot.slane %v285, 5
      %v288 = vor.u32 %v284, %v287
      %v289 = vrot.slane %v288, 4
      %v291 = vshll.u32 %v227, 16
      %v293 = vrot.slane %v291, 5
      %v294 = vsel %vm256, %v289, %v293
      %v295 = vshrl.u32 %v227, 16
      %v297 = vrot.slane %v295, 4
      %v298 = vor.u32 %v297, %v293
      %v299 = vrot.slane %v298, 4
      %v301 = vshll.u32 %v228, 16
      %v303 = vrot.slane %v301, 5
      %v304 = vsel %vm256, %v299, %v303
      %v306 = vshrl.u32 %v229, 16
      %v308 = vrot.slane %v306, 4
      %v309 = vshll.u32 %v229, 16
      %v311 = vrot.slane %v309, 5
      %v312 = vor.u32 %v308, %v311
      %v313 = vrot.slane %v312, 4
      %v315 = vshll.u32 %v230, 16
      %v317 = vrot.slane %v315, 5
      %v318 = vsel %vm256, %v313, %v317
      %v319 = vshrl.u32 %v230, 16
      %v321 = vrot.slane %v319, 4
      %v322 = vor.u32 %v321, %v317
      %v323 = vrot.slane %v322, 4
      %v325 = vshll.u32 %v231, 16
      %v327 = vrot.slane %v325, 5
      %v328 = vsel %vm256, %v323, %v327
      %v330 = vshrl.u32 %v232, 16
      %v332 = vrot.slane %v330, 4
      %v333 = vshll.u32 %v232, 16
      %v335 = vrot.slane %v333, 5
      %v336 = vor.u32 %v332, %v335
      %v337 = vrot.slane %v336, 4
      %v339 = vshll.u32 %v233, 16
      %v341 = vrot.slane %v339, 5
      %v342 = vsel %vm256, %v337, %v341
      %v343 = vshrl.u32 %v233, 16
      %v345 = vrot.slane %v343, 4
      %v346 = vor.u32 %v345, %v341
      %v347 = vrot.slane %v346, 4
      %v349 = vshll.u32 %v234, 16
      %v351 = vrot.slane %v349, 5
      %v352 = vsel %vm256, %v347, %v351
      %v354 = vshrl.u32 %v235, 16
      %v356 = vrot.slane %v354, 4
      %v357 = vshll.u32 %v235, 16
      %v359 = vrot.slane %v357, 5
      %v360 = vor.u32 %v356, %v359
      %v361 = vrot.slane %v360, 4
      %v363 = vshll.u32 %v236, 16
      %v365 = vrot.slane %v363, 5
      %v366 = vsel %vm256, %v361, %v365
      %v367 = vshrl.u32 %v236, 16
      %v369 = vrot.slane %v367, 4
      %v370 = vor.u32 %v369, %v365
      %v371 = vrot.slane %v370, 4
      %v373 = vshll.u32 %v237, 16
      %v375 = vrot.slane %v373, 5
      %v376 = vsel %vm256, %v371, %v375
      %v378 = vshrl.u32 %v238, 16
      %v380 = vrot.slane %v378, 4
      %v381 = vshll.u32 %v238, 16
      %v383 = vrot.slane %v381, 5
      %v384 = vor.u32 %v380, %v383
      %v385 = vrot.slane %v384, 4
      %v387 = vshll.u32 %v239, 16
      %v389 = vrot.slane %v387, 5
      %v390 = vsel %vm256, %v385, %v389
      %v391 = vshrl.u32 %v239, 16
      %v393 = vrot.slane %v391, 4
      %v394 = vor.u32 %v393, %v389
      %v395 = vrot.slane %v394, 4
      %v397 = vshll.u32 %v240, 16
      %v399 = vrot.slane %v397, 5
      %v400 = vsel %vm256, %v395, %v399
      %v402 = vshrl.u32 %v241, 16
      %v404 = vrot.slane %v402, 4
      %v405 = vshll.u32 %v241, 16
      %v407 = vrot.slane %v405, 5
      %v408 = vor.u32 %v404, %v407
      %v409 = vrot.slane %v408, 4
      %v411 = vshll.u32 %v242, 16
      %v413 = vrot.slane %v411, 5
      %v414 = vsel %vm256, %v409, %v413
      %v415 = vshrl.u32 %v242, 16
      %v417 = vrot.slane %v415, 4
      %v418 = vor.u32 %v417, %v413
      %v419 = vrot.slane %v418, 4
      %v421 = vshll.u32 %v243, 16
      %v423 = vrot.slane %v421, 5
      %v424 = vsel %vm256, %v419, %v423
      %v426 = vshrl.u32 %v244, 16
      %v428 = vrot.slane %v426, 4
      %v429 = vshll.u32 %v244, 16
      %v431 = vrot.slane %v429, 5
      %v432 = vor.u32 %v428, %v431
      %v433 = vrot.slane %v432, 4
      %v435 = vshll.u32 %v245, 16
      %v437 = vrot.slane %v435, 5
      %v438 = vsel %vm256, %v433, %v437
      %v439 = vshrl.u32 %v245, 16
      %v441 = vrot.slane %v439, 4
      %v442 = vor.u32 %v441, %v437
      %v443 = vrot.slane %v442, 4
      %v445 = vshll.u32 %v246, 16
      %v447 = vrot.slane %v445, 5
      %v448 = vsel %vm256, %v443, %v447
      %s449 = scalar_lea.vmem %s1, 2
      %v450 = vld [vmem:[%s449] sm:$0x3]
      %v451 = vunpack.c.l.b16 %v270
      %v452 = vunpack.c.l.b16 %v280
      %v453 = vunpack.c.l.b16 %v294
      %v454 = vunpack.c.l.b16 %v304
      %v455 = vunpack.c.l.b16 %v318
      %v456 = vunpack.c.l.b16 %v328
      %v457 = vunpack.c.l.b16 %v342
      %v458 = vunpack.c.l.b16 %v352
      %v459 = vunpack.c.l.b16 %v366
      %v460 = vunpack.c.l.b16 %v376
      %v461 = vunpack.c.l.b16 %v390
      %v462 = vunpack.c.l.b16 %v400
      %v463 = vunpack.c.l.b16 %v414
      %v464 = vunpack.c.l.b16 %v424
      %v465 = vunpack.c.l.b16 %v438
      %v466 = vunpack.c.l.b16 %v448
      %v467 = vpack.c.b16 %v452, %v451
      %v468 = vpack.c.b16 %v454, %v453
      %v469 = vpack.c.b16 %v456, %v455
      %v470 = vpack.c.b16 %v458, %v457
      %v471 = vpack.c.b16 %v460, %v459
      %v472 = vpack.c.b16 %v462, %v461
      %v473 = vpack.c.b16 %v464, %v463
      %v474 = vpack.c.b16 %v466, %v465
      %vm475 = vcmask 31744
      %v477 = vsel %vm475, %v467, 0
      %v480 = vsel %vm475, %v468, 0
      %v483 = vsel %vm475, %v469, 0
      %v486 = vsel %vm475, %v470, 0
      %v489 = vsel %vm475, %v471, 0
      %v492 = vsel %vm475, %v472, 0
      %v495 = vsel %vm475, %v473, 0
      %v498 = vsel %vm475, %v474, 0
      %vm500 = vcmask 1041408
      %v502 = vsel %vm500, %v450, 0
      %504 = vmatprep.subr.bf16.mxu0 0
      %505 = vmatpush1.bf16.msra.mxu0 %v502
      %506 = vmatprep.subr.bf16.mxu0 0
      %507 = vmatpush1.bf16.msra.mxu0 0
      %508 = vmatprep.subr.bf16.mxu0 0
      %509 = vmatpush1.bf16.msra.mxu0 0
      %510 = vmatprep.subr.bf16.mxu0 0
      %511 = vmatpush1.bf16.msra.mxu0 0
      %512 = vmatprep.subr.bf16.mxu0 0
      %513 = vmatpush1.bf16.msra.mxu0 0
      %514 = vmatprep.subr.bf16.mxu0 0
      %515 = vmatpush1.bf16.msra.mxu0 0
      %516 = vmatprep.subr.bf16.mxu0 0
      %517 = vmatpush1.bf16.msra.mxu0 0
      %518 = vmatprep.subr.bf16.mxu0 0
      %519 = vmatpush1.bf16.msra.mxu0 0
      %520 = vmatprep.subr.bf16.mxu0 0
      %521 = vmatpush1.bf16.msra.mxu0 0
      %522 = vmatprep.subr.bf16.mxu0 0
      %523 = vmatpush1.bf16.msra.mxu0 0
      %524 = vmatprep.subr.bf16.mxu0 0
      %525 = vmatpush1.bf16.msra.mxu0 0
      %526 = vmatprep.subr.bf16.mxu0 0
      %527 = vmatpush1.bf16.msra.mxu0 0
      %528 = vmatprep.subr.bf16.mxu0 0
      %529 = vmatpush1.bf16.msra.mxu0 0
      %530 = vmatprep.subr.bf16.mxu0 0
      %531 = vmatpush1.bf16.msra.mxu0 0
      %532 = vmatprep.subr.bf16.mxu0 0
      %533 = vmatpush1.bf16.msra.mxu0 0
      %534 = vmatprep.subr.bf16.mxu0 0
      %535 = vmatpush1.bf16.msra.mxu0 0
      %536 = vmatprep.mubr.bf16.mxu0 0
      %537 = vmatmul.mubr.bf16.gmra.mrb[0].mxu0 %v477
      %v538 = vpop.f32.mrb[0].mxu0
      %v539 = vadd.f32 0.0, %v538
      %v540 = vpop.f32.mrb[0].mxu0
      %v541 = vpop.f32.mrb[0].mxu0
      %v542 = vadd.f32 0.0, %v541
      %v543 = vpop.f32.mrb[0].mxu0
      %544 = vmatprep.mubr.bf16.mxu0 0
      %545 = vmatmul.mubr.bf16.gmra.mrb[0].mxu0 %v480
      %v546 = vpop.f32.mrb[0].mxu0
      %v547 = vadd.f32 0.0, %v546
      %v548 = vpop.f32.mrb[0].mxu0
      %v549 = vpop.f32.mrb[0].mxu0
      %v550 = vadd.f32 0.0, %v549
      %v551 = vpop.f32.mrb[0].mxu0
      %552 = vmatprep.mubr.bf16.mxu0 0
      %553 = vmatmul.mubr.bf16.gmra.mrb[0].mxu0 %v483
      %v554 = vpop.f32.mrb[0].mxu0
      %v555 = vadd.f32 0.0, %v554
      %v556 = vpop.f32.mrb[0].mxu0
      %v557 = vpop.f32.mrb[0].mxu0
      %v558 = vadd.f32 0.0, %v557
      %v559 = vpop.f32.mrb[0].mxu0
      %560 = vmatprep.mubr.bf16.mxu0 0
      %561 = vmatmul.mubr.bf16.gmra.mrb[0].mxu0 %v486
      %v562 = vpop.f32.mrb[0].mxu0
      %v563 = vadd.f32 0.0, %v562
      %v564 = vpop.f32.mrb[0].mxu0
      %v565 = vpop.f32.mrb[0].mxu0
      %v566 = vadd.f32 0.0, %v565
      %v567 = vpop.f32.mrb[0].mxu0
      %568 = vmatprep.mubr.bf16.mxu0 0
      %569 = vmatmul.mubr.bf16.gmra.mrb[0].mxu0 %v489
      %v570 = vpop.f32.mrb[0].mxu0
      %v571 = vadd.f32 0.0, %v570
      %v572 = vpop.f32.mrb[0].mxu0
      %v573 = vpop.f32.mrb[0].mxu0
      %v574 = vadd.f32 0.0, %v573
      %v575 = vpop.f32.mrb[0].mxu0
      %576 = vmatprep.mubr.bf16.mxu0 0
      %577 = vmatmul.mubr.bf16.gmra.mrb[0].mxu0 %v492
      %v578 = vpop.f32.mrb[0].mxu0
      %v579 = vadd.f32 0.0, %v578
      %v580 = vpop.f32.mrb[0].mxu0
      %v581 = vpop.f32.mrb[0].mxu0
      %v582 = vadd.f32 0.0, %v581
      %v583 = vpop.f32.mrb[0].mxu0
      %584 = vmatprep.mubr.bf16.mxu0 0
      %585 = vmatmul.mubr.bf16.gmra.mrb[0].mxu0 %v495
      %v586 = vpop.f32.mrb[0].mxu0
      %v587 = vadd.f32 0.0, %v586
      %v588 = vpop.f32.mrb[0].mxu0
      %v589 = vpop.f32.mrb[0].mxu0
      %v590 = vadd.f32 0.0, %v589
      %v591 = vpop.f32.mrb[0].mxu0
      %592 = vmatprep.mubr.bf16.mxu0 0
      %593 = vmatmul.mubr.bf16.gmra.mrb[0].mxu0 %v498
      %v594 = vpop.f32.mrb[0].mxu0
      %v595 = vadd.f32 0.0, %v594
      %v596 = vpop.f32.mrb[0].mxu0
      %v597 = vpop.f32.mrb[0].mxu0
      %v598 = vadd.f32 0.0, %v597
      %v599 = vpop.f32.mrb[0].mxu0
      %600 = vdwg.mxu0
      %v617 = vunpack.c.l.b16 %v223
      %v618 = vunpack.c.l.b16 %v224
      %v619 = vunpack.c.l.b16 %v226
      %v620 = vunpack.c.l.b16 %v227
      %v621 = vunpack.c.l.b16 %v229
      %v622 = vunpack.c.l.b16 %v230
      %v623 = vunpack.c.l.b16 %v232
      %v624 = vunpack.c.l.b16 %v233
      %v625 = vunpack.c.l.b16 %v235
      %v626 = vunpack.c.l.b16 %v236
      %v627 = vunpack.c.l.b16 %v238
      %v628 = vunpack.c.l.b16 %v239
      %v629 = vunpack.c.l.b16 %v241
      %v630 = vunpack.c.l.b16 %v242
      %v631 = vunpack.c.l.b16 %v244
      %v632 = vunpack.c.l.b16 %v245
      %v633 = vpack.c.b16 %v618, %v617
      %v634 = vpack.c.b16 %v620, %v619
      %v635 = vpack.c.b16 %v622, %v621
      %v636 = vpack.c.b16 %v624, %v623
      %v637 = vpack.c.b16 %v626, %v625
      %v638 = vpack.c.b16 %v628, %v627
      %v639 = vpack.c.b16 %v630, %v629
      %v640 = vpack.c.b16 %v632, %v631
      %v642 = vsel %vm475, %v633, 0
      %v645 = vsel %vm475, %v634, 0
      %v648 = vsel %vm475, %v635, 0
      %v651 = vsel %vm475, %v636, 0
      %v654 = vsel %vm475, %v637, 0
      %v657 = vsel %vm475, %v638, 0
      %v660 = vsel %vm475, %v639, 0
      %v663 = vsel %vm475, %v640, 0
      %v666 = vsel %vm500, %v253, 0
      %668 = vmatprep.subr.bf16.mxu0 0
      %669 = vmatpush1.bf16.msra.mxu0 %v666
      %670 = vmatprep.subr.bf16.mxu0 0
      %671 = vmatpush1.bf16.msra.mxu0 0
      %672 = vmatprep.subr.bf16.mxu0 0
      %673 = vmatpush1.bf16.msra.mxu0 0
      %674 = vmatprep.subr.bf16.mxu0 0
      %675 = vmatpush1.bf16.msra.mxu0 0
      %676 = vmatprep.subr.bf16.mxu0 0
      %677 = vmatpush1.bf16.msra.mxu0 0
      %678 = vmatprep.subr.bf16.mxu0 0
      %679 = vmatpush1.bf16.msra.mxu0 0
      %680 = vmatprep.subr.bf16.mxu0 0
      %681 = vmatpush1.bf16.msra.mxu0 0
      %682 = vmatprep.subr.bf16.mxu0 0
      %683 = vmatpush1.bf16.msra.mxu0 0
      %684 = vmatprep.subr.bf16.mxu0 0
      %685 = vmatpush1.bf16.msra.mxu0 0
      %686 = vmatprep.subr.bf16.mxu0 0
      %687 = vmatpush1.bf16.msra.mxu0 0
      %688 = vmatprep.subr.bf16.mxu0 0
      %689 = vmatpush1.bf16.msra.mxu0 0
      %690 = vmatprep.subr.bf16.mxu0 0
      %691 = vmatpush1.bf16.msra.mxu0 0
      %692 = vmatprep.subr.bf16.mxu0 0
      %693 = vmatpush1.bf16.msra.mxu0 0
      %694 = vmatprep.subr.bf16.mxu0 0
      %695 = vmatpush1.bf16.msra.mxu0 0
      %696 = vmatprep.subr.bf16.mxu0 0
      %697 = vmatpush1.bf16.msra.mxu0 0
      %698 = vmatprep.subr.bf16.mxu0 0
      %699 = vmatpush1.bf16.msra.mxu0 0
      %700 = vmatprep.mubr.bf16.mxu0 0
      %701 = vmatmul.mubr.bf16.gmra.mrb[0].mxu0 %v642
      %v702 = vpop.f32.mrb[0].mxu0
      %v703 = vadd.f32 %v539, %v702
      %v704 = vpop.f32.mrb[0].mxu0
      %v705 = vpop.f32.mrb[0].mxu0
      %v706 = vadd.f32 %v542, %v705
      %v707 = vpop.f32.mrb[0].mxu0
      %708 = vmatprep.mubr.bf16.mxu0 0
      %709 = vmatmul.mubr.bf16.gmra.mrb[0].mxu0 %v645
      %v710 = vpop.f32.mrb[0].mxu0
      %v711 = vadd.f32 %v547, %v710
      %v712 = vpop.f32.mrb[0].mxu0
      %v713 = vpop.f32.mrb[0].mxu0
      %v714 = vadd.f32 %v550, %v713
      %v715 = vpop.f32.mrb[0].mxu0
      %716 = vmatprep.mubr.bf16.mxu0 0
      %717 = vmatmul.mubr.bf16.gmra.mrb[0].mxu0 %v648
      %v718 = vpop.f32.mrb[0].mxu0
      %v719 = vadd.f32 %v555, %v718
      %v720 = vpop.f32.mrb[0].mxu0
      %v721 = vpop.f32.mrb[0].mxu0
      %v722 = vadd.f32 %v558, %v721
      %v723 = vpop.f32.mrb[0].mxu0
      %724 = vmatprep.mubr.bf16.mxu0 0
      %725 = vmatmul.mubr.bf16.gmra.mrb[0].mxu0 %v651
      %v726 = vpop.f32.mrb[0].mxu0
      %v727 = vadd.f32 %v563, %v726
      %v728 = vpop.f32.mrb[0].mxu0
      %v729 = vpop.f32.mrb[0].mxu0
      %v730 = vadd.f32 %v566, %v729
      %v731 = vpop.f32.mrb[0].mxu0
      %732 = vmatprep.mubr.bf16.mxu0 0
      %733 = vmatmul.mubr.bf16.gmra.mrb[0].mxu0 %v654
      %v734 = vpop.f32.mrb[0].mxu0
      %v735 = vadd.f32 %v571, %v734
      %v736 = vpop.f32.mrb[0].mxu0
      %v737 = vpop.f32.mrb[0].mxu0
      %v738 = vadd.f32 %v574, %v737
      %v739 = vpop.f32.mrb[0].mxu0
      %740 = vmatprep.mubr.bf16.mxu0 0
      %741 = vmatmul.mubr.bf16.gmra.mrb[0].mxu0 %v657
      %v742 = vpop.f32.mrb[0].mxu0
      %v743 = vadd.f32 %v579, %v742
      %v744 = vpop.f32.mrb[0].mxu0
      %v745 = vpop.f32.mrb[0].mxu0
      %v746 = vadd.f32 %v582, %v745
      %v747 = vpop.f32.mrb[0].mxu0
      %748 = vmatprep.mubr.bf16.mxu0 0
      %749 = vmatmul.mubr.bf16.gmra.mrb[0].mxu0 %v660
      %v750 = vpop.f32.mrb[0].mxu0
      %v751 = vadd.f32 %v587, %v750
      %v752 = vpop.f32.mrb[0].mxu0
      %v753 = vpop.f32.mrb[0].mxu0
      %v754 = vadd.f32 %v590, %v753
      %v755 = vpop.f32.mrb[0].mxu0
      %756 = vmatprep.mubr.bf16.mxu0 0
      %757 = vmatmul.mubr.bf16.gmra.mrb[0].mxu0 %v663
      %v758 = vpop.f32.mrb[0].mxu0
      %v759 = vadd.f32 %v595, %v758
      %v760 = vpop.f32.mrb[0].mxu0
      %v761 = vpop.f32.mrb[0].mxu0
      %v762 = vadd.f32 %v598, %v761
      %v763 = vpop.f32.mrb[0].mxu0
      %764 = vdwg.mxu0
      %vm773 = vcmask 1042432
      %vm774 = vcmask 1046532
      %vm775 = vmor %vm773, %vm774
      %v776 = vrot.slane %v223, 5
      %v777 = vrot.slane %v776, 4
      %v778 = vrot.slane %v224, 5
      %v779 = vsel %vm775, %v777, %v778
      %v780 = vrot.slane %v778, 4
      %v781 = vrot.slane %v225, 5
      %v782 = vsel %vm775, %v780, %v781
      %v783 = vrot.slane %v226, 5
      %v784 = vrot.slane %v783, 4
      %v785 = vrot.slane %v227, 5
      %v786 = vsel %vm775, %v784, %v785
      %v787 = vrot.slane %v785, 4
      %v788 = vrot.slane %v228, 5
      %v789 = vsel %vm775, %v787, %v788
      %v790 = vrot.slane %v229, 5
      %v791 = vrot.slane %v790, 4
      %v792 = vrot.slane %v230, 5
      %v793 = vsel %vm775, %v791, %v792
      %v794 = vrot.slane %v792, 4
      %v795 = vrot.slane %v231, 5
      %v796 = vsel %vm775, %v794, %v795
      %v797 = vrot.slane %v232, 5
      %v798 = vrot.slane %v797, 4
      %v799 = vrot.slane %v233, 5
      %v800 = vsel %vm775, %v798, %v799
      %v801 = vrot.slane %v799, 4
      %v802 = vrot.slane %v234, 5
      %v803 = vsel %vm775, %v801, %v802
      %v804 = vrot.slane %v235, 5
      %v805 = vrot.slane %v804, 4
      %v806 = vrot.slane %v236, 5
      %v807 = vsel %vm775, %v805, %v806
      %v808 = vrot.slane %v806, 4
      %v809 = vrot.slane %v237, 5
      %v810 = vsel %vm775, %v808, %v809
      %v811 = vrot.slane %v238, 5
      %v812 = vrot.slane %v811, 4
      %v813 = vrot.slane %v239, 5
      %v814 = vsel %vm775, %v812, %v813
      %v815 = vrot.slane %v813, 4
      %v816 = vrot.slane %v240, 5
      %v817 = vsel %vm775, %v815, %v816
      %v818 = vrot.slane %v241, 5
      %v819 = vrot.slane %v818, 4
      %v820 = vrot.slane %v242, 5
      %v821 = vsel %vm775, %v819, %v820
      %v822 = vrot.slane %v820, 4
      %v823 = vrot.slane %v243, 5
      %v824 = vsel %vm775, %v822, %v823
      %v825 = vrot.slane %v244, 5
      %v826 = vrot.slane %v825, 4
      %v827 = vrot.slane %v245, 5
      %v828 = vsel %vm775, %v826, %v827
      %v829 = vrot.slane %v827, 4
      %v830 = vrot.slane %v246, 5
      %v831 = vsel %vm775, %v829, %v830
      %s832 = scalar_lea.vmem %s1, 4
      %v833 = vld [vmem:[%s832] sm:$0x3]
      %v834 = vunpack.c.l.b16 %v779
      %v835 = vunpack.c.l.b16 %v782
      %v836 = vunpack.c.l.b16 %v786
      %v837 = vunpack.c.l.b16 %v789
      %v838 = vunpack.c.l.b16 %v793
      %v839 = vunpack.c.l.b16 %v796
      %v840 = vunpack.c.l.b16 %v800
      %v841 = vunpack.c.l.b16 %v803
      %v842 = vunpack.c.l.b16 %v807
      %v843 = vunpack.c.l.b16 %v810
      %v844 = vunpack.c.l.b16 %v814
      %v845 = vunpack.c.l.b16 %v817
      %v846 = vunpack.c.l.b16 %v821
      %v847 = vunpack.c.l.b16 %v824
      %v848 = vunpack.c.l.b16 %v828
      %v849 = vunpack.c.l.b16 %v831
      %v850 = vpack.c.b16 %v835, %v834
      %v851 = vpack.c.b16 %v837, %v836
      %v852 = vpack.c.b16 %v839, %v838
      %v853 = vpack.c.b16 %v841, %v840
      %v854 = vpack.c.b16 %v843, %v842
      %v855 = vpack.c.b16 %v845, %v844
      %v856 = vpack.c.b16 %v847, %v846
      %v857 = vpack.c.b16 %v849, %v848
      %v859 = vsel %vm475, %v850, 0
      %v862 = vsel %vm475, %v851, 0
      %v865 = vsel %vm475, %v852, 0
      %v868 = vsel %vm475, %v853, 0
      %v871 = vsel %vm475, %v854, 0
      %v874 = vsel %vm475, %v855, 0
      %v877 = vsel %vm475, %v856, 0
      %v880 = vsel %vm475, %v857, 0
      %v883 = vsel %vm500, %v833, 0
      %885 = vmatprep.subr.bf16.mxu0 0
      %886 = vmatpush1.bf16.msra.mxu0 %v883
      %887 = vmatprep.subr.bf16.mxu0 0
      %888 = vmatpush1.bf16.msra.mxu0 0
      %889 = vmatprep.subr.bf16.mxu0 0
      %890 = vmatpush1.bf16.msra.mxu0 0
      %891 = vmatprep.subr.bf16.mxu0 0
      %892 = vmatpush1.bf16.msra.mxu0 0
      %893 = vmatprep.subr.bf16.mxu0 0
      %894 = vmatpush1.bf16.msra.mxu0 0
      %895 = vmatprep.subr.bf16.mxu0 0
      %896 = vmatpush1.bf16.msra.mxu0 0
      %897 = vmatprep.subr.bf16.mxu0 0
      %898 = vmatpush1.bf16.msra.mxu0 0
      %899 = vmatprep.subr.bf16.mxu0 0
      %900 = vmatpush1.bf16.msra.mxu0 0
      %901 = vmatprep.subr.bf16.mxu0 0
      %902 = vmatpush1.bf16.msra.mxu0 0
      %903 = vmatprep.subr.bf16.mxu0 0
      %904 = vmatpush1.bf16.msra.mxu0 0
      %905 = vmatprep.subr.bf16.mxu0 0
      %906 = vmatpush1.bf16.msra.mxu0 0
      %907 = vmatprep.subr.bf16.mxu0 0
      %908 = vmatpush1.bf16.msra.mxu0 0
      %909 = vmatprep.subr.bf16.mxu0 0
      %910 = vmatpush1.bf16.msra.mxu0 0
      %911 = vmatprep.subr.bf16.mxu0 0
      %912 = vmatpush1.bf16.msra.mxu0 0
      %913 = vmatprep.subr.bf16.mxu0 0
      %914 = vmatpush1.bf16.msra.mxu0 0
      %915 = vmatprep.subr.bf16.mxu0 0
      %916 = vmatpush1.bf16.msra.mxu0 0
      %917 = vmatprep.mubr.bf16.mxu0 0
      %918 = vmatmul.mubr.bf16.gmra.mrb[0].mxu0 %v859
      %v919 = vpop.f32.mrb[0].mxu0
      %v920 = vadd.f32 0.0, %v919
      %v921 = vpop.f32.mrb[0].mxu0
      %v922 = vpop.f32.mrb[0].mxu0
      %v923 = vadd.f32 0.0, %v922
      %v924 = vpop.f32.mrb[0].mxu0
      %925 = vmatprep.mubr.bf16.mxu0 0
      %926 = vmatmul.mubr.bf16.gmra.mrb[0].mxu0 %v862
      %v927 = vpop.f32.mrb[0].mxu0
      %v928 = vadd.f32 0.0, %v927
      %v929 = vpop.f32.mrb[0].mxu0
      %v930 = vpop.f32.mrb[0].mxu0
      %v931 = vadd.f32 0.0, %v930
      %v932 = vpop.f32.mrb[0].mxu0
      %933 = vmatprep.mubr.bf16.mxu0 0
      %934 = vmatmul.mubr.bf16.gmra.mrb[0].mxu0 %v865
      %v935 = vpop.f32.mrb[0].mxu0
      %v936 = vadd.f32 0.0, %v935
      %v937 = vpop.f32.mrb[0].mxu0
      %v938 = vpop.f32.mrb[0].mxu0
      %v939 = vadd.f32 0.0, %v938
      %v940 = vpop.f32.mrb[0].mxu0
      %941 = vmatprep.mubr.bf16.mxu0 0
      %942 = vmatmul.mubr.bf16.gmra.mrb[0].mxu0 %v868
      %v943 = vpop.f32.mrb[0].mxu0
      %v944 = vadd.f32 0.0, %v943
      %v945 = vpop.f32.mrb[0].mxu0
      %v946 = vpop.f32.mrb[0].mxu0
      %v947 = vadd.f32 0.0, %v946
      %v948 = vpop.f32.mrb[0].mxu0
      %949 = vmatprep.mubr.bf16.mxu0 0
      %950 = vmatmul.mubr.bf16.gmra.mrb[0].mxu0 %v871
      %v951 = vpop.f32.mrb[0].mxu0
      %v952 = vadd.f32 0.0, %v951
      %v953 = vpop.f32.mrb[0].mxu0
      %v954 = vpop.f32.mrb[0].mxu0
      %v955 = vadd.f32 0.0, %v954
      %v956 = vpop.f32.mrb[0].mxu0
      %957 = vmatprep.mubr.bf16.mxu0 0
      %958 = vmatmul.mubr.bf16.gmra.mrb[0].mxu0 %v874
      %v959 = vpop.f32.mrb[0].mxu0
      %v960 = vadd.f32 0.0, %v959
      %v961 = vpop.f32.mrb[0].mxu0
      %v962 = vpop.f32.mrb[0].mxu0
      %v963 = vadd.f32 0.0, %v962
      %v964 = vpop.f32.mrb[0].mxu0
      %965 = vmatprep.mubr.bf16.mxu0 0
      %966 = vmatmul.mubr.bf16.gmra.mrb[0].mxu0 %v877
      %v967 = vpop.f32.mrb[0].mxu0
      %v968 = vadd.f32 0.0, %v967
      %v969 = vpop.f32.mrb[0].mxu0
      %v970 = vpop.f32.mrb[0].mxu0
      %v971 = vadd.f32 0.0, %v970
      %v972 = vpop.f32.mrb[0].mxu0
      %973 = vmatprep.mubr.bf16.mxu0 0
      %974 = vmatmul.mubr.bf16.gmra.mrb[0].mxu0 %v880
      %v975 = vpop.f32.mrb[0].mxu0
      %v976 = vadd.f32 0.0, %v975
      %v977 = vpop.f32.mrb[0].mxu0
      %v978 = vpop.f32.mrb[0].mxu0
      %v979 = vadd.f32 0.0, %v978
      %v980 = vpop.f32.mrb[0].mxu0
      %981 = vdwg.mxu0
      %v982 = vadd.f32 %v703, %v920
      %v983 = vadd.f32 %v706, %v923
      %v984 = vadd.f32 %v711, %v928
      %v985 = vadd.f32 %v714, %v931
      %v986 = vadd.f32 %v719, %v936
      %v987 = vadd.f32 %v722, %v939
      %v988 = vadd.f32 %v727, %v944
      %v989 = vadd.f32 %v730, %v947
      %v990 = vadd.f32 %v735, %v952
      %v991 = vadd.f32 %v738, %v955
      %v992 = vadd.f32 %v743, %v960
      %v993 = vadd.f32 %v746, %v963
      %v994 = vadd.f32 %v751, %v968
      %v995 = vadd.f32 %v754, %v971
      %v996 = vadd.f32 %v759, %v976
      %v997 = vadd.f32 %v762, %v979
      %s998 = scalar_lea.vmem %s1, 6
      %v999 = vld [vmem:[%s998] sm:$0x3]
      %v1002 = vunpack.c.l.b16 %v247
      %v1003 = vunpack.c.l.b16 %v248
      %v1004 = vpack.c.b16 %v1003, %v1002
      %v1006 = vsel %vm475, %v1004, 0
      %v1009 = vsel %vm500, %v999, 0
      %1011 = vmatprep.subr.bf16.mxu0 0
      %1012 = vmatpush1.bf16.msra.mxu0 %v1009
      %1013 = vmatprep.subr.bf16.mxu0 0
      %1014 = vmatpush1.bf16.msra.mxu0 0
      %1015 = vmatprep.subr.bf16.mxu0 0
      %1016 = vmatpush1.bf16.msra.mxu0 0
      %1017 = vmatprep.subr.bf16.mxu0 0
      %1018 = vmatpush1.bf16.msra.mxu0 0
      %1019 = vmatprep.subr.bf16.mxu0 0
      %1020 = vmatpush1.bf16.msra.mxu0 0
      %1021 = vmatprep.subr.bf16.mxu0 0
      %1022 = vmatpush1.bf16.msra.mxu0 0
      %1023 = vmatprep.subr.bf16.mxu0 0
      %1024 = vmatpush1.bf16.msra.mxu0 0
      %1025 = vmatprep.subr.bf16.mxu0 0
      %1026 = vmatpush1.bf16.msra.mxu0 0
      %1027 = vmatprep.subr.bf16.mxu0 0
      %1028 = vmatpush1.bf16.msra.mxu0 0
      %1029 = vmatprep.subr.bf16.mxu0 0
      %1030 = vmatpush1.bf16.msra.mxu0 0
      %1031 = vmatprep.subr.bf16.mxu0 0
      %1032 = vmatpush1.bf16.msra.mxu0 0
      %1033 = vmatprep.subr.bf16.mxu0 0
      %1034 = vmatpush1.bf16.msra.mxu0 0
      %1035 = vmatprep.subr.bf16.mxu0 0
      %1036 = vmatpush1.bf16.msra.mxu0 0
      %1037 = vmatprep.subr.bf16.mxu0 0
      %1038 = vmatpush1.bf16.msra.mxu0 0
      %1039 = vmatprep.subr.bf16.mxu0 0
      %1040 = vmatpush1.bf16.msra.mxu0 0
      %1041 = vmatprep.subr.bf16.mxu0 0
      %1042 = vmatpush1.bf16.msra.mxu0 0
      %1043 = vmatprep.mubr.bf16.mxu0 0
      %1044 = vmatmul.mubr.bf16.gmra.mrb[0].mxu0 %v645
      %v1045 = vpop.f32.mrb[0].mxu0
      %v1046 = vadd.f32 0.0, %v1045
      %v1047 = vpop.f32.mrb[0].mxu0
      %v1048 = vpop.f32.mrb[0].mxu0
      %v1049 = vadd.f32 0.0, %v1048
      %v1050 = vpop.f32.mrb[0].mxu0
      %1051 = vmatprep.mubr.bf16.mxu0 0
      %1052 = vmatmul.mubr.bf16.gmra.mrb[0].mxu0 %v648
      %v1053 = vpop.f32.mrb[0].mxu0
      %v1054 = vadd.f32 0.0, %v1053
      %v1055 = vpop.f32.mrb[0].mxu0
      %v1056 = vpop.f32.mrb[0].mxu0
      %v1057 = vadd.f32 0.0, %v1056
      %v1058 = vpop.f32.mrb[0].mxu0
      %1059 = vmatprep.mubr.bf16.mxu0 0
      %1060 = vmatmul.mubr.bf16.gmra.mrb[0].mxu0 %v651
      %v1061 = vpop.f32.mrb[0].mxu0
      %v1062 = vadd.f32 0.0, %v1061
      %v1063 = vpop.f32.mrb[0].mxu0
      %v1064 = vpop.f32.mrb[0].mxu0
      %v1065 = vadd.f32 0.0, %v1064
      %v1066 = vpop.f32.mrb[0].mxu0
      %1067 = vmatprep.mubr.bf16.mxu0 0
      %1068 = vmatmul.mubr.bf16.gmra.mrb[0].mxu0 %v654
      %v1069 = vpop.f32.mrb[0].mxu0
      %v1070 = vadd.f32 0.0, %v1069
      %v1071 = vpop.f32.mrb[0].mxu0
      %v1072 = vpop.f32.mrb[0].mxu0
      %v1073 = vadd.f32 0.0, %v1072
      %v1074 = vpop.f32.mrb[0].mxu0
      %1075 = vmatprep.mubr.bf16.mxu0 0
      %1076 = vmatmul.mubr.bf16.gmra.mrb[0].mxu0 %v657
      %v1077 = vpop.f32.mrb[0].mxu0
      %v1078 = vadd.f32 0.0, %v1077
      %v1079 = vpop.f32.mrb[0].mxu0
      %v1080 = vpop.f32.mrb[0].mxu0
      %v1081 = vadd.f32 0.0, %v1080
      %v1082 = vpop.f32.mrb[0].mxu0
      %1083 = vmatprep.mubr.bf16.mxu0 0
      %1084 = vmatmul.mubr.bf16.gmra.mrb[0].mxu0 %v660
      %v1085 = vpop.f32.mrb[0].mxu0
      %v1086 = vadd.f32 0.0, %v1085
      %v1087 = vpop.f32.mrb[0].mxu0
      %v1088 = vpop.f32.mrb[0].mxu0
      %v1089 = vadd.f32 0.0, %v1088
      %v1090 = vpop.f32.mrb[0].mxu0
      %1091 = vmatprep.mubr.bf16.mxu0 0
      %1092 = vmatmul.mubr.bf16.gmra.mrb[0].mxu0 %v663
      %v1093 = vpop.f32.mrb[0].mxu0
      %v1094 = vadd.f32 0.0, %v1093
      %v1095 = vpop.f32.mrb[0].mxu0
      %v1096 = vpop.f32.mrb[0].mxu0
      %v1097 = vadd.f32 0.0, %v1096
      %v1098 = vpop.f32.mrb[0].mxu0
      %1099 = vmatprep.mubr.bf16.mxu0 0
      %1100 = vmatmul.mubr.bf16.gmra.mrb[0].mxu0 %v1006
      %v1101 = vpop.f32.mrb[0].mxu0
      %v1102 = vadd.f32 0.0, %v1101
      %v1103 = vpop.f32.mrb[0].mxu0
      %v1104 = vpop.f32.mrb[0].mxu0
      %v1105 = vadd.f32 0.0, %v1104
      %v1106 = vpop.f32.mrb[0].mxu0
      %1107 = vdwg.mxu0
      %v1108 = vadd.f32 %v982, %v1046
      %v1109 = vadd.f32 %v983, %v1049
      %v1110 = vadd.f32 %v984, %v1054
      %v1111 = vadd.f32 %v985, %v1057
      %v1112 = vadd.f32 %v986, %v1062
      %v1113 = vadd.f32 %v987, %v1065
      %v1114 = vadd.f32 %v988, %v1070
      %v1115 = vadd.f32 %v989, %v1073
      %v1116 = vadd.f32 %v990, %v1078
      %v1117 = vadd.f32 %v991, %v1081
      %v1118 = vadd.f32 %v992, %v1086
      %v1119 = vadd.f32 %v993, %v1089
      %v1120 = vadd.f32 %v994, %v1094
      %v1121 = vadd.f32 %v995, %v1097
      %v1122 = vadd.f32 %v996, %v1102
      %v1123 = vadd.f32 %v997, %v1105
      %v1125 = vshrl.u32 %v247, 16
      %v1127 = vrot.slane %v1125, 4
      %v1128 = vshll.u32 %v247, 16
      %v1130 = vrot.slane %v1128, 5
      %v1131 = vor.u32 %v1127, %v1130
      %v1132 = vrot.slane %v1131, 4
      %v1134 = vshll.u32 %v248, 16
      %v1136 = vrot.slane %v1134, 5
      %v1137 = vsel %vm256, %v1132, %v1136
      %v1138 = vshrl.u32 %v248, 16
      %v1140 = vrot.slane %v1138, 4
      %v1141 = vor.u32 %v1140, %v1136
      %v1142 = vrot.slane %v1141, 4
      %v1144 = vshll.u32 %v249, 16
      %v1146 = vrot.slane %v1144, 5
      %v1147 = vsel %vm256, %v1142, %v1146
      %s1148 = scalar_lea.vmem %s1, 8
      %v1149 = vld [vmem:[%s1148] sm:$0x3]
      %v1150 = vunpack.c.l.b16 %v1137
      %v1151 = vunpack.c.l.b16 %v1147
      %v1152 = vpack.c.b16 %v1151, %v1150
      %v1154 = vsel %vm475, %v1152, 0
      %v1157 = vsel %vm500, %v1149, 0
      %1159 = vmatprep.subr.bf16.mxu0 0
      %1160 = vmatpush1.bf16.msra.mxu0 %v1157
      %1161 = vmatprep.subr.bf16.mxu0 0
      %1162 = vmatpush1.bf16.msra.mxu0 0
      %1163 = vmatprep.subr.bf16.mxu0 0
      %1164 = vmatpush1.bf16.msra.mxu0 0
      %1165 = vmatprep.subr.bf16.mxu0 0
      %1166 = vmatpush1.bf16.msra.mxu0 0
      %1167 = vmatprep.subr.bf16.mxu0 0
      %1168 = vmatpush1.bf16.msra.mxu0 0
      %1169 = vmatprep.subr.bf16.mxu0 0
      %1170 = vmatpush1.bf16.msra.mxu0 0
      %1171 = vmatprep.subr.bf16.mxu0 0
      %1172 = vmatpush1.bf16.msra.mxu0 0
      %1173 = vmatprep.subr.bf16.mxu0 0
      %1174 = vmatpush1.bf16.msra.mxu0 0
      %1175 = vmatprep.subr.bf16.mxu0 0
      %1176 = vmatpush1.bf16.msra.mxu0 0
      %1177 = vmatprep.subr.bf16.mxu0 0
      %1178 = vmatpush1.bf16.msra.mxu0 0
      %1179 = vmatprep.subr.bf16.mxu0 0
      %1180 = vmatpush1.bf16.msra.mxu0 0
      %1181 = vmatprep.subr.bf16.mxu0 0
      %1182 = vmatpush1.bf16.msra.mxu0 0
      %1183 = vmatprep.subr.bf16.mxu0 0
      %1184 = vmatpush1.bf16.msra.mxu0 0
      %1185 = vmatprep.subr.bf16.mxu0 0
      %1186 = vmatpush1.bf16.msra.mxu0 0
      %1187 = vmatprep.subr.bf16.mxu0 0
      %1188 = vmatpush1.bf16.msra.mxu0 0
      %1189 = vmatprep.subr.bf16.mxu0 0
      %1190 = vmatpush1.bf16.msra.mxu0 0
      %1191 = vmatprep.mubr.bf16.mxu0 0
      %1192 = vmatmul.mubr.bf16.gmra.mrb[0].mxu0 %v480
      %v1193 = vpop.f32.mrb[0].mxu0
      %v1194 = vadd.f32 0.0, %v1193
      %v1195 = vpop.f32.mrb[0].mxu0
      %v1196 = vpop.f32.mrb[0].mxu0
      %v1197 = vadd.f32 0.0, %v1196
      %v1198 = vpop.f32.mrb[0].mxu0
      %1199 = vmatprep.mubr.bf16.mxu0 0
      %1200 = vmatmul.mubr.bf16.gmra.mrb[0].mxu0 %v483
      %v1201 = vpop.f32.mrb[0].mxu0
      %v1202 = vadd.f32 0.0, %v1201
      %v1203 = vpop.f32.mrb[0].mxu0
      %v1204 = vpop.f32.mrb[0].mxu0
      %v1205 = vadd.f32 0.0, %v1204
      %v1206 = vpop.f32.mrb[0].mxu0
      %1207 = vmatprep.mubr.bf16.mxu0 0
      %1208 = vmatmul.mubr.bf16.gmra.mrb[0].mxu0 %v486
      %v1209 = vpop.f32.mrb[0].mxu0
      %v1210 = vadd.f32 0.0, %v1209
      %v1211 = vpop.f32.mrb[0].mxu0
      %v1212 = vpop.f32.mrb[0].mxu0
      %v1213 = vadd.f32 0.0, %v1212
      %v1214 = vpop.f32.mrb[0].mxu0
      %1215 = vmatprep.mubr.bf16.mxu0 0
      %1216 = vmatmul.mubr.bf16.gmra.mrb[0].mxu0 %v489
      %v1217 = vpop.f32.mrb[0].mxu0
      %v1218 = vadd.f32 0.0, %v1217
      %v1219 = vpop.f32.mrb[0].mxu0
      %v1220 = vpop.f32.mrb[0].mxu0
      %v1221 = vadd.f32 0.0, %v1220
      %v1222 = vpop.f32.mrb[0].mxu0
      %1223 = vmatprep.mubr.bf16.mxu0 0
      %1224 = vmatmul.mubr.bf16.gmra.mrb[0].mxu0 %v492
      %v1225 = vpop.f32.mrb[0].mxu0
      %v1226 = vadd.f32 0.0, %v1225
      %v1227 = vpop.f32.mrb[0].mxu0
      %v1228 = vpop.f32.mrb[0].mxu0
      %v1229 = vadd.f32 0.0, %v1228
      %v1230 = vpop.f32.mrb[0].mxu0
      %1231 = vmatprep.mubr.bf16.mxu0 0
      %1232 = vmatmul.mubr.bf16.gmra.mrb[0].mxu0 %v495
      %v1233 = vpop.f32.mrb[0].mxu0
      %v1234 = vadd.f32 0.0, %v1233
      %v1235 = vpop.f32.mrb[0].mxu0
      %v1236 = vpop.f32.mrb[0].mxu0
      %v1237 = vadd.f32 0.0, %v1236
      %v1238 = vpop.f32.mrb[0].mxu0
      %1239 = vmatprep.mubr.bf16.mxu0 0
      %1240 = vmatmul.mubr.bf16.gmra.mrb[0].mxu0 %v498
      %v1241 = vpop.f32.mrb[0].mxu0
      %v1242 = vadd.f32 0.0, %v1241
      %v1243 = vpop.f32.mrb[0].mxu0
      %v1244 = vpop.f32.mrb[0].mxu0
      %v1245 = vadd.f32 0.0, %v1244
      %v1246 = vpop.f32.mrb[0].mxu0
      %1247 = vmatprep.mubr.bf16.mxu0 0
      %1248 = vmatmul.mubr.bf16.gmra.mrb[0].mxu0 %v1154
      %v1249 = vpop.f32.mrb[0].mxu0
      %v1250 = vadd.f32 0.0, %v1249
      %v1251 = vpop.f32.mrb[0].mxu0
      %v1252 = vpop.f32.mrb[0].mxu0
      %v1253 = vadd.f32 0.0, %v1252
      %v1254 = vpop.f32.mrb[0].mxu0
      %1255 = vdwg.mxu0
      %v1256 = vadd.f32 %v1108, %v1194
      %v1257 = vadd.f32 %v1109, %v1197
      %v1258 = vadd.f32 %v1110, %v1202
      %v1259 = vadd.f32 %v1111, %v1205
      %v1260 = vadd.f32 %v1112, %v1210
      %v1261 = vadd.f32 %v1113, %v1213
      %v1262 = vadd.f32 %v1114, %v1218
      %v1263 = vadd.f32 %v1115, %v1221
      %v1264 = vadd.f32 %v1116, %v1226
      %v1265 = vadd.f32 %v1117, %v1229
      %v1266 = vadd.f32 %v1118, %v1234
      %v1267 = vadd.f32 %v1119, %v1237
      %v1268 = vadd.f32 %v1120, %v1242
      %v1269 = vadd.f32 %v1121, %v1245
      %v1270 = vadd.f32 %v1122, %v1250
      %v1271 = vadd.f32 %v1123, %v1253
      %v1273 = vrot.slane %v247, 5
      %v1274 = vrot.slane %v1273, 4
      %v1275 = vrot.slane %v248, 5
      %v1276 = vsel %vm775, %v1274, %v1275
      %v1277 = vrot.slane %v1275, 4
      %v1278 = vrot.slane %v249, 5
      %v1279 = vsel %vm775, %v1277, %v1278
      %s1280 = scalar_lea.vmem %s1, 10
      %v1281 = vld [vmem:[%s1280] sm:$0x3]
      %v1282 = vunpack.c.l.b16 %v1276
      %v1283 = vunpack.c.l.b16 %v1279
      %v1284 = vpack.c.b16 %v1283, %v1282
      %v1286 = vsel %vm475, %v1284, 0
      %v1289 = vsel %vm500, %v1281, 0
      %1291 = vmatprep.subr.bf16.mxu0 0
      %1292 = vmatpush1.bf16.msra.mxu0 %v1289
      %1293 = vmatprep.subr.bf16.mxu0 0
      %1294 = vmatpush1.bf16.msra.mxu0 0
      %1295 = vmatprep.subr.bf16.mxu0 0
      %1296 = vmatpush1.bf16.msra.mxu0 0
      %1297 = vmatprep.subr.bf16.mxu0 0
      %1298 = vmatpush1.bf16.msra.mxu0 0
      %1299 = vmatprep.subr.bf16.mxu0 0
      %1300 = vmatpush1.bf16.msra.mxu0 0
      %1301 = vmatprep.subr.bf16.mxu0 0
      %1302 = vmatpush1.bf16.msra.mxu0 0
      %1303 = vmatprep.subr.bf16.mxu0 0
      %1304 = vmatpush1.bf16.msra.mxu0 0
      %1305 = vmatprep.subr.bf16.mxu0 0
      %1306 = vmatpush1.bf16.msra.mxu0 0
      %1307 = vmatprep.subr.bf16.mxu0 0
      %1308 = vmatpush1.bf16.msra.mxu0 0
      %1309 = vmatprep.subr.bf16.mxu0 0
      %1310 = vmatpush1.bf16.msra.mxu0 0
      %1311 = vmatprep.subr.bf16.mxu0 0
      %1312 = vmatpush1.bf16.msra.mxu0 0
      %1313 = vmatprep.subr.bf16.mxu0 0
      %1314 = vmatpush1.bf16.msra.mxu0 0
      %1315 = vmatprep.subr.bf16.mxu0 0
      %1316 = vmatpush1.bf16.msra.mxu0 0
      %1317 = vmatprep.subr.bf16.mxu0 0
      %1318 = vmatpush1.bf16.msra.mxu0 0
      %1319 = vmatprep.subr.bf16.mxu0 0
      %1320 = vmatpush1.bf16.msra.mxu0 0
      %1321 = vmatprep.subr.bf16.mxu0 0
      %1322 = vmatpush1.bf16.msra.mxu0 0
      %1323 = vmatprep.mubr.bf16.mxu0 0
      %1324 = vmatmul.mubr.bf16.gmra.mrb[0].mxu0 %v862
      %v1325 = vpop.f32.mrb[0].mxu0
      %v1326 = vadd.f32 0.0, %v1325
      %v1327 = vpop.f32.mrb[0].mxu0
      %v1328 = vpop.f32.mrb[0].mxu0
      %v1329 = vadd.f32 0.0, %v1328
      %v1330 = vpop.f32.mrb[0].mxu0
      %1331 = vmatprep.mubr.bf16.mxu0 0
      %1332 = vmatmul.mubr.bf16.gmra.mrb[0].mxu0 %v865
      %v1333 = vpop.f32.mrb[0].mxu0
      %v1334 = vadd.f32 0.0, %v1333
      %v1335 = vpop.f32.mrb[0].mxu0
      %v1336 = vpop.f32.mrb[0].mxu0
      %v1337 = vadd.f32 0.0, %v1336
      %v1338 = vpop.f32.mrb[0].mxu0
      %1339 = vmatprep.mubr.bf16.mxu0 0
      %1340 = vmatmul.mubr.bf16.gmra.mrb[0].mxu0 %v868
      %v1341 = vpop.f32.mrb[0].mxu0
      %v1342 = vadd.f32 0.0, %v1341
      %v1343 = vpop.f32.mrb[0].mxu0
      %v1344 = vpop.f32.mrb[0].mxu0
      %v1345 = vadd.f32 0.0, %v1344
      %v1346 = vpop.f32.mrb[0].mxu0
      %1347 = vmatprep.mubr.bf16.mxu0 0
      %1348 = vmatmul.mubr.bf16.gmra.mrb[0].mxu0 %v871
      %v1349 = vpop.f32.mrb[0].mxu0
      %v1350 = vadd.f32 0.0, %v1349
      %v1351 = vpop.f32.mrb[0].mxu0
      %v1352 = vpop.f32.mrb[0].mxu0
      %v1353 = vadd.f32 0.0, %v1352
      %v1354 = vpop.f32.mrb[0].mxu0
      %1355 = vmatprep.mubr.bf16.mxu0 0
      %1356 = vmatmul.mubr.bf16.gmra.mrb[0].mxu0 %v874
      %v1357 = vpop.f32.mrb[0].mxu0
      %v1358 = vadd.f32 0.0, %v1357
      %v1359 = vpop.f32.mrb[0].mxu0
      %v1360 = vpop.f32.mrb[0].mxu0
      %v1361 = vadd.f32 0.0, %v1360
      %v1362 = vpop.f32.mrb[0].mxu0
      %1363 = vmatprep.mubr.bf16.mxu0 0
      %1364 = vmatmul.mubr.bf16.gmra.mrb[0].mxu0 %v877
      %v1365 = vpop.f32.mrb[0].mxu0
      %v1366 = vadd.f32 0.0, %v1365
      %v1367 = vpop.f32.mrb[0].mxu0
      %v1368 = vpop.f32.mrb[0].mxu0
      %v1369 = vadd.f32 0.0, %v1368
      %v1370 = vpop.f32.mrb[0].mxu0
      %1371 = vmatprep.mubr.bf16.mxu0 0
      %1372 = vmatmul.mubr.bf16.gmra.mrb[0].mxu0 %v880
      %v1373 = vpop.f32.mrb[0].mxu0
      %v1374 = vadd.f32 0.0, %v1373
      %v1375 = vpop.f32.mrb[0].mxu0
      %v1376 = vpop.f32.mrb[0].mxu0
      %v1377 = vadd.f32 0.0, %v1376
      %v1378 = vpop.f32.mrb[0].mxu0
      %1379 = vmatprep.mubr.bf16.mxu0 0
      %1380 = vmatmul.mubr.bf16.gmra.mrb[0].mxu0 %v1286
      %v1381 = vpop.f32.mrb[0].mxu0
      %v1382 = vadd.f32 0.0, %v1381
      %v1383 = vpop.f32.mrb[0].mxu0
      %v1384 = vpop.f32.mrb[0].mxu0
      %v1385 = vadd.f32 0.0, %v1384
      %v1386 = vpop.f32.mrb[0].mxu0
      %1387 = vdwg.mxu0
      %v1388 = vadd.f32 %v1256, %v1326
      %v1389 = vadd.f32 %v1257, %v1329
      %v1390 = vadd.f32 %v1258, %v1334
      %v1391 = vadd.f32 %v1259, %v1337
      %v1392 = vadd.f32 %v1260, %v1342
      %v1393 = vadd.f32 %v1261, %v1345
      %v1394 = vadd.f32 %v1262, %v1350
      %v1395 = vadd.f32 %v1263, %v1353
      %v1396 = vadd.f32 %v1264, %v1358
      %v1397 = vadd.f32 %v1265, %v1361
      %v1398 = vadd.f32 %v1266, %v1366
      %v1399 = vadd.f32 %v1267, %v1369
      %v1400 = vadd.f32 %v1268, %v1374
      %v1401 = vadd.f32 %v1269, %v1377
      %v1402 = vadd.f32 %v1270, %v1382
      %v1403 = vadd.f32 %v1271, %v1385
      %s1404 = scalar_lea.vmem %s1, 12
      %v1405 = vld [vmem:[%s1404] sm:$0x3]
      %v1408 = vunpack.c.l.b16 %v250
      %v1409 = vunpack.c.l.b16 %v251
      %v1410 = vpack.c.b16 %v1409, %v1408
      %v1412 = vsel %vm475, %v1410, 0
      %v1415 = vsel %vm500, %v1405, 0
      %1417 = vmatprep.subr.bf16.mxu0 0
      %1418 = vmatpush1.bf16.msra.mxu0 %v1415
      %1419 = vmatprep.subr.bf16.mxu0 0
      %1420 = vmatpush1.bf16.msra.mxu0 0
      %1421 = vmatprep.subr.bf16.mxu0 0
      %1422 = vmatpush1.bf16.msra.mxu0 0
      %1423 = vmatprep.subr.bf16.mxu0 0
      %1424 = vmatpush1.bf16.msra.mxu0 0
      %1425 = vmatprep.subr.bf16.mxu0 0
      %1426 = vmatpush1.bf16.msra.mxu0 0
      %1427 = vmatprep.subr.bf16.mxu0 0
      %1428 = vmatpush1.bf16.msra.mxu0 0
      %1429 = vmatprep.subr.bf16.mxu0 0
      %1430 = vmatpush1.bf16.msra.mxu0 0
      %1431 = vmatprep.subr.bf16.mxu0 0
      %1432 = vmatpush1.bf16.msra.mxu0 0
      %1433 = vmatprep.subr.bf16.mxu0 0
      %1434 = vmatpush1.bf16.msra.mxu0 0
      %1435 = vmatprep.subr.bf16.mxu0 0
      %1436 = vmatpush1.bf16.msra.mxu0 0
      %1437 = vmatprep.subr.bf16.mxu0 0
      %1438 = vmatpush1.bf16.msra.mxu0 0
      %1439 = vmatprep.subr.bf16.mxu0 0
      %1440 = vmatpush1.bf16.msra.mxu0 0
      %1441 = vmatprep.subr.bf16.mxu0 0
      %1442 = vmatpush1.bf16.msra.mxu0 0
      %1443 = vmatprep.subr.bf16.mxu0 0
      %1444 = vmatpush1.bf16.msra.mxu0 0
      %1445 = vmatprep.subr.bf16.mxu0 0
      %1446 = vmatpush1.bf16.msra.mxu0 0
      %1447 = vmatprep.subr.bf16.mxu0 0
      %1448 = vmatpush1.bf16.msra.mxu0 0
      %1449 = vmatprep.mubr.bf16.mxu0 0
      %1450 = vmatmul.mubr.bf16.gmra.mrb[0].mxu0 %v648
      %v1451 = vpop.f32.mrb[0].mxu0
      %v1452 = vadd.f32 0.0, %v1451
      %v1453 = vpop.f32.mrb[0].mxu0
      %v1454 = vpop.f32.mrb[0].mxu0
      %v1455 = vadd.f32 0.0, %v1454
      %v1456 = vpop.f32.mrb[0].mxu0
      %1457 = vmatprep.mubr.bf16.mxu0 0
      %1458 = vmatmul.mubr.bf16.gmra.mrb[0].mxu0 %v651
      %v1459 = vpop.f32.mrb[0].mxu0
      %v1460 = vadd.f32 0.0, %v1459
      %v1461 = vpop.f32.mrb[0].mxu0
      %v1462 = vpop.f32.mrb[0].mxu0
      %v1463 = vadd.f32 0.0, %v1462
      %v1464 = vpop.f32.mrb[0].mxu0
      %1465 = vmatprep.mubr.bf16.mxu0 0
      %1466 = vmatmul.mubr.bf16.gmra.mrb[0].mxu0 %v654
      %v1467 = vpop.f32.mrb[0].mxu0
      %v1468 = vadd.f32 0.0, %v1467
      %v1469 = vpop.f32.mrb[0].mxu0
      %v1470 = vpop.f32.mrb[0].mxu0
      %v1471 = vadd.f32 0.0, %v1470
      %v1472 = vpop.f32.mrb[0].mxu0
      %1473 = vmatprep.mubr.bf16.mxu0 0
      %1474 = vmatmul.mubr.bf16.gmra.mrb[0].mxu0 %v657
      %v1475 = vpop.f32.mrb[0].mxu0
      %v1476 = vadd.f32 0.0, %v1475
      %v1477 = vpop.f32.mrb[0].mxu0
      %v1478 = vpop.f32.mrb[0].mxu0
      %v1479 = vadd.f32 0.0, %v1478
      %v1480 = vpop.f32.mrb[0].mxu0
      %1481 = vmatprep.mubr.bf16.mxu0 0
      %1482 = vmatmul.mubr.bf16.gmra.mrb[0].mxu0 %v660
      %v1483 = vpop.f32.mrb[0].mxu0
      %v1484 = vadd.f32 0.0, %v1483
      %v1485 = vpop.f32.mrb[0].mxu0
      %v1486 = vpop.f32.mrb[0].mxu0
      %v1487 = vadd.f32 0.0, %v1486
      %v1488 = vpop.f32.mrb[0].mxu0
      %1489 = vmatprep.mubr.bf16.mxu0 0
      %1490 = vmatmul.mubr.bf16.gmra.mrb[0].mxu0 %v663
      %v1491 = vpop.f32.mrb[0].mxu0
      %v1492 = vadd.f32 0.0, %v1491
      %v1493 = vpop.f32.mrb[0].mxu0
      %v1494 = vpop.f32.mrb[0].mxu0
      %v1495 = vadd.f32 0.0, %v1494
      %v1496 = vpop.f32.mrb[0].mxu0
      %1497 = vmatprep.mubr.bf16.mxu0 0
      %1498 = vmatmul.mubr.bf16.gmra.mrb[0].mxu0 %v1006
      %v1499 = vpop.f32.mrb[0].mxu0
      %v1500 = vadd.f32 0.0, %v1499
      %v1501 = vpop.f32.mrb[0].mxu0
      %v1502 = vpop.f32.mrb[0].mxu0
      %v1503 = vadd.f32 0.0, %v1502
      %v1504 = vpop.f32.mrb[0].mxu0
      %1505 = vmatprep.mubr.bf16.mxu0 0
      %1506 = vmatmul.mubr.bf16.gmra.mrb[0].mxu0 %v1412
      %v1507 = vpop.f32.mrb[0].mxu0
      %v1508 = vadd.f32 0.0, %v1507
      %v1509 = vpop.f32.mrb[0].mxu0
      %v1510 = vpop.f32.mrb[0].mxu0
      %v1511 = vadd.f32 0.0, %v1510
      %v1512 = vpop.f32.mrb[0].mxu0
      %1513 = vdwg.mxu0
      %v1514 = vadd.f32 %v1388, %v1452
      %v1515 = vadd.f32 %v1389, %v1455
      %v1516 = vadd.f32 %v1390, %v1460
      %v1517 = vadd.f32 %v1391, %v1463
      %v1518 = vadd.f32 %v1392, %v1468
      %v1519 = vadd.f32 %v1393, %v1471
      %v1520 = vadd.f32 %v1394, %v1476
      %v1521 = vadd.f32 %v1395, %v1479
      %v1522 = vadd.f32 %v1396, %v1484
      %v1523 = vadd.f32 %v1397, %v1487
      %v1524 = vadd.f32 %v1398, %v1492
      %v1525 = vadd.f32 %v1399, %v1495
      %v1526 = vadd.f32 %v1400, %v1500
      %v1527 = vadd.f32 %v1401, %v1503
      %v1528 = vadd.f32 %v1402, %v1508
      %v1529 = vadd.f32 %v1403, %v1511
      %v1531 = vshrl.u32 %v250, 16
      %v1533 = vrot.slane %v1531, 4
      %v1534 = vshll.u32 %v250, 16
      %v1536 = vrot.slane %v1534, 5
      %v1537 = vor.u32 %v1533, %v1536
      %v1538 = vrot.slane %v1537, 4
      %v1540 = vshll.u32 %v251, 16
      %v1542 = vrot.slane %v1540, 5
      %v1543 = vsel %vm256, %v1538, %v1542
      %v1544 = vshrl.u32 %v251, 16
      %v1546 = vrot.slane %v1544, 4
      %v1547 = vor.u32 %v1546, %v1542
      %v1548 = vrot.slane %v1547, 4
      %v1550 = vshll.u32 %v252, 16
      %v1552 = vrot.slane %v1550, 5
      %v1553 = vsel %vm256, %v1548, %v1552
      %s1554 = scalar_lea.vmem %s1, 14
      %v1555 = vld [vmem:[%s1554] sm:$0x3]
      %v1556 = vunpack.c.l.b16 %v1543
      %v1557 = vunpack.c.l.b16 %v1553
      %v1558 = vpack.c.b16 %v1557, %v1556
      %v1560 = vsel %vm475, %v1558, 0
      %v1563 = vsel %vm500, %v1555, 0
      %1565 = vmatprep.subr.bf16.mxu0 0
      %1566 = vmatpush1.bf16.msra.mxu0 %v1563
      %1567 = vmatprep.subr.bf16.mxu0 0
      %1568 = vmatpush1.bf16.msra.mxu0 0
      %1569 = vmatprep.subr.bf16.mxu0 0
      %1570 = vmatpush1.bf16.msra.mxu0 0
      %1571 = vmatprep.subr.bf16.mxu0 0
      %1572 = vmatpush1.bf16.msra.mxu0 0
      %1573 = vmatprep.subr.bf16.mxu0 0
      %1574 = vmatpush1.bf16.msra.mxu0 0
      %1575 = vmatprep.subr.bf16.mxu0 0
      %1576 = vmatpush1.bf16.msra.mxu0 0
      %1577 = vmatprep.subr.bf16.mxu0 0
      %1578 = vmatpush1.bf16.msra.mxu0 0
      %1579 = vmatprep.subr.bf16.mxu0 0
      %1580 = vmatpush1.bf16.msra.mxu0 0
      %1581 = vmatprep.subr.bf16.mxu0 0
      %1582 = vmatpush1.bf16.msra.mxu0 0
      %1583 = vmatprep.subr.bf16.mxu0 0
      %1584 = vmatpush1.bf16.msra.mxu0 0
      %1585 = vmatprep.subr.bf16.mxu0 0
      %1586 = vmatpush1.bf16.msra.mxu0 0
      %1587 = vmatprep.subr.bf16.mxu0 0
      %1588 = vmatpush1.bf16.msra.mxu0 0
      %1589 = vmatprep.subr.bf16.mxu0 0
      %1590 = vmatpush1.bf16.msra.mxu0 0
      %1591 = vmatprep.subr.bf16.mxu0 0
      %1592 = vmatpush1.bf16.msra.mxu0 0
      %1593 = vmatprep.subr.bf16.mxu0 0
      %1594 = vmatpush1.bf16.msra.mxu0 0
      %1595 = vmatprep.subr.bf16.mxu0 0
      %1596 = vmatpush1.bf16.msra.mxu0 0
      %1597 = vmatprep.mubr.bf16.mxu0 0
      %1598 = vmatmul.mubr.bf16.gmra.mrb[0].mxu0 %v483
      %v1599 = vpop.f32.mrb[0].mxu0
      %v1600 = vadd.f32 0.0, %v1599
      %v1601 = vpop.f32.mrb[0].mxu0
      %v1602 = vpop.f32.mrb[0].mxu0
      %v1603 = vadd.f32 0.0, %v1602
      %v1604 = vpop.f32.mrb[0].mxu0
      %1605 = vmatprep.mubr.bf16.mxu0 0
      %1606 = vmatmul.mubr.bf16.gmra.mrb[0].mxu0 %v486
      %v1607 = vpop.f32.mrb[0].mxu0
      %v1608 = vadd.f32 0.0, %v1607
      %v1609 = vpop.f32.mrb[0].mxu0
      %v1610 = vpop.f32.mrb[0].mxu0
      %v1611 = vadd.f32 0.0, %v1610
      %v1612 = vpop.f32.mrb[0].mxu0
      %1613 = vmatprep.mubr.bf16.mxu0 0
      %1614 = vmatmul.mubr.bf16.gmra.mrb[0].mxu0 %v489
      %v1615 = vpop.f32.mrb[0].mxu0
      %v1616 = vadd.f32 0.0, %v1615
      %v1617 = vpop.f32.mrb[0].mxu0
      %v1618 = vpop.f32.mrb[0].mxu0
      %v1619 = vadd.f32 0.0, %v1618
      %v1620 = vpop.f32.mrb[0].mxu0
      %1621 = vmatprep.mubr.bf16.mxu0 0
      %1622 = vmatmul.mubr.bf16.gmra.mrb[0].mxu0 %v492
      %v1623 = vpop.f32.mrb[0].mxu0
      %v1624 = vadd.f32 0.0, %v1623
      %v1625 = vpop.f32.mrb[0].mxu0
      %v1626 = vpop.f32.mrb[0].mxu0
      %v1627 = vadd.f32 0.0, %v1626
      %v1628 = vpop.f32.mrb[0].mxu0
      %1629 = vmatprep.mubr.bf16.mxu0 0
      %1630 = vmatmul.mubr.bf16.gmra.mrb[0].mxu0 %v495
      %v1631 = vpop.f32.mrb[0].mxu0
      %v1632 = vadd.f32 0.0, %v1631
      %v1633 = vpop.f32.mrb[0].mxu0
      %v1634 = vpop.f32.mrb[0].mxu0
      %v1635 = vadd.f32 0.0, %v1634
      %v1636 = vpop.f32.mrb[0].mxu0
      %1637 = vmatprep.mubr.bf16.mxu0 0
      %1638 = vmatmul.mubr.bf16.gmra.mrb[0].mxu0 %v498
      %v1639 = vpop.f32.mrb[0].mxu0
      %v1640 = vadd.f32 0.0, %v1639
      %v1641 = vpop.f32.mrb[0].mxu0
      %v1642 = vpop.f32.mrb[0].mxu0
      %v1643 = vadd.f32 0.0, %v1642
      %v1644 = vpop.f32.mrb[0].mxu0
      %1645 = vmatprep.mubr.bf16.mxu0 0
      %1646 = vmatmul.mubr.bf16.gmra.mrb[0].mxu0 %v1154
      %v1647 = vpop.f32.mrb[0].mxu0
      %v1648 = vadd.f32 0.0, %v1647
      %v1649 = vpop.f32.mrb[0].mxu0
      %v1650 = vpop.f32.mrb[0].mxu0
      %v1651 = vadd.f32 0.0, %v1650
      %v1652 = vpop.f32.mrb[0].mxu0
      %1653 = vmatprep.mubr.bf16.mxu0 0
      %1654 = vmatmul.mubr.bf16.gmra.mrb[0].mxu0 %v1560
      %v1655 = vpop.f32.mrb[0].mxu0
      %v1656 = vadd.f32 0.0, %v1655
      %v1657 = vpop.f32.mrb[0].mxu0
      %v1658 = vpop.f32.mrb[0].mxu0
      %v1659 = vadd.f32 0.0, %v1658
      %v1660 = vpop.f32.mrb[0].mxu0
      %1661 = vdwg.mxu0
      %v1662 = vadd.f32 %v1514, %v1600
      %v1663 = vadd.f32 %v1515, %v1603
      %v1664 = vadd.f32 %v1516, %v1608
      %v1665 = vadd.f32 %v1517, %v1611
      %v1666 = vadd.f32 %v1518, %v1616
      %v1667 = vadd.f32 %v1519, %v1619
      %v1668 = vadd.f32 %v1520, %v1624
      %v1669 = vadd.f32 %v1521, %v1627
      %v1670 = vadd.f32 %v1522, %v1632
      %v1671 = vadd.f32 %v1523, %v1635
      %v1672 = vadd.f32 %v1524, %v1640
      %v1673 = vadd.f32 %v1525, %v1643
      %v1674 = vadd.f32 %v1526, %v1648
      %v1675 = vadd.f32 %v1527, %v1651
      %v1676 = vadd.f32 %v1528, %v1656
      %v1677 = vadd.f32 %v1529, %v1659
      %v1679 = vrot.slane %v250, 5
      %v1680 = vrot.slane %v1679, 4
      %v1681 = vrot.slane %v251, 5
      %v1682 = vsel %vm775, %v1680, %v1681
      %v1683 = vrot.slane %v1681, 4
      %v1684 = vrot.slane %v252, 5
      %v1685 = vsel %vm775, %v1683, %v1684
      %s1686 = scalar_lea.vmem %s1, 16
      %v1687 = vld [vmem:[%s1686] sm:$0x3]
      %v1688 = vunpack.c.l.b16 %v1682
      %v1689 = vunpack.c.l.b16 %v1685
      %v1690 = vpack.c.b16 %v1689, %v1688
      %v1692 = vsel %vm475, %v1690, 0
      %v1695 = vsel %vm500, %v1687, 0
      %1697 = vmatprep.subr.bf16.mxu0 0
      %1698 = vmatpush1.bf16.msra.mxu0 %v1695
      %1699 = vmatprep.subr.bf16.mxu0 0
      %1700 = vmatpush1.bf16.msra.mxu0 0
      %1701 = vmatprep.subr.bf16.mxu0 0
      %1702 = vmatpush1.bf16.msra.mxu0 0
      %1703 = vmatprep.subr.bf16.mxu0 0
      %1704 = vmatpush1.bf16.msra.mxu0 0
      %1705 = vmatprep.subr.bf16.mxu0 0
      %1706 = vmatpush1.bf16.msra.mxu0 0
      %1707 = vmatprep.subr.bf16.mxu0 0
      %1708 = vmatpush1.bf16.msra.mxu0 0
      %1709 = vmatprep.subr.bf16.mxu0 0
      %1710 = vmatpush1.bf16.msra.mxu0 0
      %1711 = vmatprep.subr.bf16.mxu0 0
      %1712 = vmatpush1.bf16.msra.mxu0 0
      %1713 = vmatprep.subr.bf16.mxu0 0
      %1714 = vmatpush1.bf16.msra.mxu0 0
      %1715 = vmatprep.subr.bf16.mxu0 0
      %1716 = vmatpush1.bf16.msra.mxu0 0
      %1717 = vmatprep.subr.bf16.mxu0 0
      %1718 = vmatpush1.bf16.msra.mxu0 0
      %1719 = vmatprep.subr.bf16.mxu0 0
      %1720 = vmatpush1.bf16.msra.mxu0 0
      %1721 = vmatprep.subr.bf16.mxu0 0
      %1722 = vmatpush1.bf16.msra.mxu0 0
      %1723 = vmatprep.subr.bf16.mxu0 0
      %1724 = vmatpush1.bf16.msra.mxu0 0
      %1725 = vmatprep.subr.bf16.mxu0 0
      %1726 = vmatpush1.bf16.msra.mxu0 0
      %1727 = vmatprep.subr.bf16.mxu0 0
      %1728 = vmatpush1.bf16.msra.mxu0 0
      %1729 = vmatprep.mubr.bf16.mxu0 0
      %1730 = vmatmul.mubr.bf16.gmra.mrb[0].mxu0 %v865
      %v1731 = vpop.f32.mrb[0].mxu0
      %v1732 = vadd.f32 0.0, %v1731
      %v1733 = vpop.f32.mrb[0].mxu0
      %v1734 = vpop.f32.mrb[0].mxu0
      %v1735 = vadd.f32 0.0, %v1734
      %v1736 = vpop.f32.mrb[0].mxu0
      %1737 = vmatprep.mubr.bf16.mxu0 0
      %1738 = vmatmul.mubr.bf16.gmra.mrb[0].mxu0 %v868
      %v1739 = vpop.f32.mrb[0].mxu0
      %v1740 = vadd.f32 0.0, %v1739
      %v1741 = vpop.f32.mrb[0].mxu0
      %v1742 = vpop.f32.mrb[0].mxu0
      %v1743 = vadd.f32 0.0, %v1742
      %v1744 = vpop.f32.mrb[0].mxu0
      %1745 = vmatprep.mubr.bf16.mxu0 0
      %1746 = vmatmul.mubr.bf16.gmra.mrb[0].mxu0 %v871
      %v1747 = vpop.f32.mrb[0].mxu0
      %v1748 = vadd.f32 0.0, %v1747
      %v1749 = vpop.f32.mrb[0].mxu0
      %v1750 = vpop.f32.mrb[0].mxu0
      %v1751 = vadd.f32 0.0, %v1750
      %v1752 = vpop.f32.mrb[0].mxu0
      %1753 = vmatprep.mubr.bf16.mxu0 0
      %1754 = vmatmul.mubr.bf16.gmra.mrb[0].mxu0 %v874
      %v1755 = vpop.f32.mrb[0].mxu0
      %v1756 = vadd.f32 0.0, %v1755
      %v1757 = vpop.f32.mrb[0].mxu0
      %v1758 = vpop.f32.mrb[0].mxu0
      %v1759 = vadd.f32 0.0, %v1758
      %v1760 = vpop.f32.mrb[0].mxu0
      %1761 = vmatprep.mubr.bf16.mxu0 0
      %1762 = vmatmul.mubr.bf16.gmra.mrb[0].mxu0 %v877
      %v1763 = vpop.f32.mrb[0].mxu0
      %v1764 = vadd.f32 0.0, %v1763
      %v1765 = vpop.f32.mrb[0].mxu0
      %v1766 = vpop.f32.mrb[0].mxu0
      %v1767 = vadd.f32 0.0, %v1766
      %v1768 = vpop.f32.mrb[0].mxu0
      %1769 = vmatprep.mubr.bf16.mxu0 0
      %1770 = vmatmul.mubr.bf16.gmra.mrb[0].mxu0 %v880
      %v1771 = vpop.f32.mrb[0].mxu0
      %v1772 = vadd.f32 0.0, %v1771
      %v1773 = vpop.f32.mrb[0].mxu0
      %v1774 = vpop.f32.mrb[0].mxu0
      %v1775 = vadd.f32 0.0, %v1774
      %v1776 = vpop.f32.mrb[0].mxu0
      %1777 = vmatprep.mubr.bf16.mxu0 0
      %1778 = vmatmul.mubr.bf16.gmra.mrb[0].mxu0 %v1286
      %v1779 = vpop.f32.mrb[0].mxu0
      %v1780 = vadd.f32 0.0, %v1779
      %v1781 = vpop.f32.mrb[0].mxu0
      %v1782 = vpop.f32.mrb[0].mxu0
      %v1783 = vadd.f32 0.0, %v1782
      %v1784 = vpop.f32.mrb[0].mxu0
      %1785 = vmatprep.mubr.bf16.mxu0 0
      %1786 = vmatmul.mubr.bf16.gmra.mrb[0].mxu0 %v1692
      %v1787 = vpop.f32.mrb[0].mxu0
      %v1788 = vadd.f32 0.0, %v1787
      %v1789 = vpop.f32.mrb[0].mxu0
      %v1790 = vpop.f32.mrb[0].mxu0
      %v1791 = vadd.f32 0.0, %v1790
      %v1792 = vpop.f32.mrb[0].mxu0
      %1793 = vdwg.mxu0
      %v1794 = vadd.f32 %v1662, %v1732
      %v1795 = vadd.f32 %v1663, %v1735
      %v1796 = vadd.f32 %v1664, %v1740
      %v1797 = vadd.f32 %v1665, %v1743
      %v1798 = vadd.f32 %v1666, %v1748
      %v1799 = vadd.f32 %v1667, %v1751
      %v1800 = vadd.f32 %v1668, %v1756
      %v1801 = vadd.f32 %v1669, %v1759
      %v1802 = vadd.f32 %v1670, %v1764
      %v1803 = vadd.f32 %v1671, %v1767
      %v1804 = vadd.f32 %v1672, %v1772
      %v1805 = vadd.f32 %v1673, %v1775
      %v1806 = vadd.f32 %v1674, %v1780
      %v1807 = vadd.f32 %v1675, %v1783
      %v1808 = vadd.f32 %v1676, %v1788
      %v1809 = vadd.f32 %v1677, %v1791
      %v1810 = vld [vmem:[%s2] sm:$0x1]
      %v1812 = vlaneseq
      %v1813 = vshrl.u32 %v1812, 7
      %v1814 = vsub.s32 0, %v1813
      %v1815 = vrot.slane %v1810, %v1814
      %v1817 = vmul.f32 %v1794, %v1815
      %v1818 = vmul.f32 %v1795, %v1815
      %v1819 = vmul.f32 %v1796, %v1815
      %v1820 = vmul.f32 %v1797, %v1815
      %v1821 = vmul.f32 %v1798, %v1815
      %v1822 = vmul.f32 %v1799, %v1815
      %v1823 = vmul.f32 %v1800, %v1815
      %v1824 = vmul.f32 %v1801, %v1815
      %v1825 = vmul.f32 %v1802, %v1815
      %v1826 = vmul.f32 %v1803, %v1815
      %v1827 = vmul.f32 %v1804, %v1815
      %v1828 = vmul.f32 %v1805, %v1815
      %v1829 = vmul.f32 %v1806, %v1815
      %v1830 = vmul.f32 %v1807, %v1815
      %v1831 = vmul.f32 %v1808, %v1815
      %v1832 = vmul.f32 %v1809, %v1815
      %v1833 = vld [vmem:[%s3] sm:$0x1]
      %v1835 = vlaneseq
      %v1836 = vshrl.u32 %v1835, 7
      %v1837 = vsub.s32 0, %v1836
      %v1838 = vrot.slane %v1833, %v1837
      %v1840 = vadd.f32 %v1817, %v1838
      %v1841 = vadd.f32 %v1818, %v1838
      %v1842 = vadd.f32 %v1819, %v1838
      %v1843 = vadd.f32 %v1820, %v1838
      %v1844 = vadd.f32 %v1821, %v1838
      %v1845 = vadd.f32 %v1822, %v1838
      %v1846 = vadd.f32 %v1823, %v1838
      %v1847 = vadd.f32 %v1824, %v1838
      %v1848 = vadd.f32 %v1825, %v1838
      %v1849 = vadd.f32 %v1826, %v1838
      %v1850 = vadd.f32 %v1827, %v1838
      %v1851 = vadd.f32 %v1828, %v1838
      %v1852 = vadd.f32 %v1829, %v1838
      %v1853 = vadd.f32 %v1830, %v1838
      %v1854 = vadd.f32 %v1831, %v1838
      %v1855 = vadd.f32 %v1832, %v1838
      %v1856 = vmax.f32 %v1840, 0.0
      %v1857 = vmax.f32 %v1841, 0.0
      %v1858 = vmax.f32 %v1842, 0.0
      %v1859 = vmax.f32 %v1843, 0.0
      %v1860 = vmax.f32 %v1844, 0.0
      %v1861 = vmax.f32 %v1845, 0.0
      %v1862 = vmax.f32 %v1846, 0.0
      %v1863 = vmax.f32 %v1847, 0.0
      %v1864 = vmax.f32 %v1848, 0.0
      %v1865 = vmax.f32 %v1849, 0.0
      %v1866 = vmax.f32 %v1850, 0.0
      %v1867 = vmax.f32 %v1851, 0.0
      %v1868 = vmax.f32 %v1852, 0.0
      %v1869 = vmax.f32 %v1853, 0.0
      %v1870 = vmax.f32 %v1854, 0.0
      %v1871 = vmax.f32 %v1855, 0.0
      %1872 = vxpose.xlu0.b32.start [1/16] %v1856, 128
      %1873 = vxpose.xlu0.b32.cont [2/16] %v1857, 128
      %1874 = vxpose.xlu0.b32.cont [3/16] %v1858, 128
      %1875 = vxpose.xlu0.b32.cont [4/16] %v1859, 128
      %1876 = vxpose.xlu0.b32.cont [5/16] %v1860, 128
      %1877 = vxpose.xlu0.b32.cont [6/16] %v1861, 128
      %1878 = vxpose.xlu0.b32.cont [7/16] %v1862, 128
      %1879 = vxpose.xlu0.b32.cont [8/16] %v1863, 128
      %1880 = vxpose.xlu0.b32.cont [9/16] %v1864, 128
      %1881 = vxpose.xlu0.b32.cont [10/16] %v1865, 128
      %1882 = vxpose.xlu0.b32.cont [11/16] %v1866, 128
      %1883 = vxpose.xlu0.b32.cont [12/16] %v1867, 128
      %1884 = vxpose.xlu0.b32.cont [13/16] %v1868, 128
      %1885 = vxpose.xlu0.b32.cont [14/16] %v1869, 128
      %1886 = vxpose.xlu0.b32.cont [15/16] %v1870, 128
      %1887 = vxpose.xlu0.b32.end [16/16] %v1871, 128
      %v1888 = vpop.trf.xlu0
      %v1889 = vpop.trf.xlu0
      %v1890 = vpop.trf.xlu0
      %v1891 = vpop.trf.xlu0
      %v1892 = vpop.trf.xlu0
      %v1893 = vpop.trf.xlu0
      %v1894 = vpop.trf.xlu0
      %v1895 = vpop.trf.xlu0
      %v1896 = vpop.trf.xlu0
      %v1897 = vpop.trf.xlu0
      %v1898 = vpop.trf.xlu0
      %v1899 = vpop.trf.xlu0
      %v1900 = vpop.trf.xlu0
      %v1901 = vpop.trf.xlu0
      %v1902 = vpop.trf.xlu0
      %v1903 = vpop.trf.xlu0
      %1904 = vst [vmem:[%s217] sm:$0xff] %v1888
      %p1905 = scmp.lt.s32.totalorder %s19, 1
      %s1906 = scalar_select %p1905, %s19, 1
      %p1907 = scmp.lt.s32.totalorder %s20, 1
      %s1908 = scalar_select %p1907, %s20, 1
      %s1909 = smul.addr %s1906, 2
      %s1910 = sadd.s32 %s1908, %s1909
      %s1911 = smul.addr %s1910, 8
      %s1912 = scalar_lea.vmem %s4, %s1911
      // Predicated region
      $region37: #{conv_block_forward.3} parent=35 // pred_check
        %p1913 = pneg %p136
      $region38: #{conv_block_forward.3} parent=35 // pred_check_branch
        %1915 = sbr.rel (%p1913) target = $region40
      $region39: #{conv_block_forward.3} parent=35 // pred_region
        _
      $region40: #{conv_block_forward.3} parent=35 // pred_fallthru
        _
    $region36: #{conv_block_forward.3} parent=5 // pred_fallthru
      _
    %p1916 = scmp.le.s32.totalorder 2, %s10
    // Predicated region
    $region41: #{conv_block_forward.3} parent=5 // pred_check
      %p1917 = pneg %p1916
    $region42: #{conv_block_forward.3} parent=5 // pred_check_branch
      %1919 = sbr.rel (%p1917) target = $region44
    $region43: #{conv_block_forward.3} parent=5 // pred_region
      %s1920 = ssub.s32 %s10, 2
      // Predicated region
      $region45: #{conv_block_forward.3} parent=43 // pred_check
        %p1921 = pneg %p142
      $region46: #{conv_block_forward.3} parent=43 // pred_check_branch
        %1923 = sbr.rel (%p1921) target = $region48
      $region47: #{conv_block_forward.3} parent=43 // pred_region
        %p1924 = scmp.lt.s32.totalorder %s21, 1
        %s1925 = scalar_select %p1924, %s21, 1
        %p1926 = scmp.lt.s32.totalorder %s22, 1
        %s1927 = scalar_select %p1926, %s22, 1
        %s1928 = smul.addr %s1925, 2
        %s1929 = sadd.s32 %s1927, %s1928
        %s1930 = smul.addr %s1929, 8
        %s1931 = scalar_lea.vmem %s4, %s1930
      $region48: #{conv_block_forward.3} parent=43 // pred_fallthru
        _
    $region44: #{conv_block_forward.3} parent=5 // pred_fallthru
      _
  $region6: #{conv_block_forward.3} parent=0 // loop_footer
    %s14 = sadd.s32 1, %s10
  $region7: #{conv_block_forward.3} parent=0 // loop_footer_branch
    %9 = sbr.rel target = $region3
  $region8: #{conv_block_forward.3} parent=0 // loop_exit
    _

// kernel: conv_block_forward.2
$region0: #{conv_block_forward.2}
  #allocation0 [shape = 'u32[]', space=smem, size = 0x4, offset = 0x4, fixed_abs, tag = 'smem constant byte address 0x4 - core index']
  #allocation1 [shape = 'u32[144,128]{1,0:T(1,128)}', space=vmem, size = 0x12000, scoped, tag = 'internal scratch']
  %s0 = inlined_call_operand.vmem [shape: bf16[2,18,18,4], index: 0, kind: input, shape index: {}]
  %s1 = inlined_call_operand.vmem [shape: bf16[9,4,128], index: 1, kind: input, shape index: {}]
  %s2 = inlined_call_operand.vmem [shape: f32[2,2,2,128], index: 2, kind: output, shape index: {}]
  %s3 = sld [smem:[#allocation0]]
  $region41: #{conv_block_forward.2} parent=0
    _
  %s5 = ssub.s32 1, %s3
  %s6 = scalar_select 0, %s5, %s3
  loop: start=0, step=1, limit=6
  $region2: #{conv_block_forward.2} parent=0 // loop_pre_header
    _
  $region3: #{conv_block_forward.2} parent=0 // loop_header
    %s8 = sphi 0, %s12
    %p9 = scmp.ge.s32.totalorder %s8, 6
    %s15 = sphi 0, %s27
    %s16 = sphi 0, %s23
    %s17 = sphi 0, %s15
    %s18 = sphi 0, %s16
    %s19 = sphi 0, %s17
    %s20 = sphi 0, %s18
    %s30 = sphi 0, %s32
    %s33 = sphi 0, %s30
    %s34 = sphi 0, %s33
    %s50 = sphi 0, %s34
    %s54 = sphi 0, %s54
    %s56 = sphi 0, %s54
    %s57 = sphi 0, %s56
    %s71 = sphi 0, %s57
    %s79 = sphi 0, %s81
    %s82 = sphi 0, %s79
    %s83 = sphi 0, %s82
    %s99 = sphi 0, %s83
  $region4: #{conv_block_forward.2} parent=0 // loop_header_branch
    %11 = sbr.rel (%p9) target = $region8
  $region5: #{conv_block_forward.2} parent=0 // loop_body
    %s13 = ssub.s32 %s8, 1
    %s14 = ssub.s32 %s8, 2
    %s21 = sadd.s32 1, %s16
    %p22 = scmp.ge.s32.totalorder %s21, 2
    %s23 = scalar_select %p22, 0, %s21
    %s24 = sadd.s32 1, %s15
    %s25 = scalar_select %p22, %s24, %s15
    %p26 = scmp.ge.s32.totalorder %s25, 2
    %s27 = scalar_select %p26, 0, %s25
    %s28 = ssub.s32 %s15, %s27
    %p29 = scmp.eq.s32.totalorder %s28, 0
    %s31 = sadd.s32 %s30, 1
    %s32 = scalar_select %p29, %s30, %s31
    %p35 = pneg %p29
    %p36 = scmp.eq.s32.totalorder %s8, 3
    %p37 = por %p35, %p36
    %p38 = scmp.ne.s32.totalorder %s30, %s33
    %p39 = scmp.eq.s32.totalorder %s8, 0
    %p40 = por %p38, %p39
    %p41 = scmp.ne.s32.totalorder %s30, %s33
    %p42 = scmp.eq.s32.totalorder %s13, 3
    %p43 = por %p41, %p42
    %p44 = scmp.ne.s32.totalorder %s33, %s34
    %p45 = scmp.eq.s32.totalorder %s13, 0
    %p46 = por %p44, %p45
    %p47 = scmp.ne.s32.totalorder %s33, %s34
    %p48 = scmp.eq.s32.totalorder %s14, 3
    %p49 = por %p47, %p48
    %p51 = scmp.ne.s32.totalorder %s34, %s50
    %p52 = scmp.eq.s32.totalorder %s14, 0
    %p53 = por %p51, %p52
    %s55 = sadd.s32 %s54, 1
    %p58 = scmp.eq.s32.totalorder %s8, 3
    %p59 = scmp.ne.s32.totalorder %s54, %s56
    %p60 = scmp.eq.s32.totalorder %s8, 0
    %p61 = por %p59, %p60
    %p62 = scmp.ne.s32.totalorder %s54, %s56
    %p63 = scmp.eq.s32.totalorder %s13, 3
    %p64 = por %p62, %p63
    %p65 = scmp.ne.s32.totalorder %s56, %s57
    %p66 = scmp.eq.s32.totalorder %s13, 0
    %p67 = por %p65, %p66
    %p68 = scmp.ne.s32.totalorder %s56, %s57
    %p69 = scmp.eq.s32.totalorder %s14, 3
    %p70 = por %p68, %p69
    %p72 = scmp.ne.s32.totalorder %s57, %s71
    %p73 = scmp.eq.s32.totalorder %s14, 0
    %p74 = por %p72, %p73
    %s75 = ssub.s32 %s15, %s27
    %s76 = ssub.s32 %s16, %s23
    %s77 = sor.u32 %s75, %s76
    %p78 = scmp.eq.s32.totalorder %s77, 0
    %s80 = sadd.s32 %s79, 1
    %s81 = scalar_select %p78, %s79, %s80
    %p84 = pneg %p78
    %p85 = scmp.eq.s32.totalorder %s8, 3
    %p86 = por %p84, %p85
    %p87 = scmp.ne.s32.totalorder %s79, %s82
    %p88 = scmp.eq.s32.totalorder %s8, 0
    %p89 = por %p87, %p88
    %p90 = scmp.ne.s32.totalorder %s79, %s82
    %p91 = scmp.eq.s32.totalorder %s13, 3
    %p92 = por %p90, %p91
    %p93 = scmp.ne.s32.totalorder %s82, %s83
    %p94 = scmp.eq.s32.totalorder %s13, 0
    %p95 = por %p93, %p94
    %p96 = scmp.ne.s32.totalorder %s82, %s83
    %p97 = scmp.eq.s32.totalorder %s14, 3
    %p98 = por %p96, %p97
    %p100 = scmp.ne.s32.totalorder %s83, %s99
    %p101 = scmp.eq.s32.totalorder %s14, 0
    %p102 = por %p100, %p101
    %p103 = scmp.le.s32.totalorder 1, %s8
    %p104 = scmp.lt.s32.totalorder %s8, 5
    %p105 = pnand %p103, %p104
    %p106 = pneg %p105
    // Predicated region
    $region9: #{conv_block_forward.2} parent=5 // pred_check
      _
    $region10: #{conv_block_forward.2} parent=5 // pred_check_branch
      %108 = sbr.rel (%p105) target = $region12
    $region11: #{conv_block_forward.2} parent=5 // pred_region
      %s109 = ssub.s32 %s8, 1
      // Predicated region
      $region13: #{conv_block_forward.2} parent=11 // pred_check
        %p110 = pneg %p67
      $region14: #{conv_block_forward.2} parent=11 // pred_check_branch
        %112 = sbr.rel (%p110) target = $region16
      $region15: #{conv_block_forward.2} parent=11 // pred_region
        _
      $region16: #{conv_block_forward.2} parent=11 // pred_fallthru
        _
    $region12: #{conv_block_forward.2} parent=5 // pred_fallthru
      _
    %p113 = scmp.lt.s32.totalorder %s8, 4
    // Predicated region
    $region17: #{conv_block_forward.2} parent=5 // pred_check
      %p114 = pneg %p113
    $region18: #{conv_block_forward.2} parent=5 // pred_check_branch
      %116 = sbr.rel (%p114) target = $region20
    $region19: #{conv_block_forward.2} parent=5 // pred_region
      // Predicated region
      $region21: #{conv_block_forward.2} parent=19 // pred_check
        %p117 = pneg %p40
      $region22: #{conv_block_forward.2} parent=19 // pred_check_branch
        %119 = sbr.rel (%p117) target = $region24
      $region23: #{conv_block_forward.2} parent=19 // pred_region
        %p120 = scmp.lt.s32.totalorder %s15, 1
        %s121 = scalar_select %p120, %s15, 1
        %s122 = smul.addr %s121, 54
        %s123 = smul.addr %s122, 4
        %s124 = scalar_lea.vmem %s0, %s123
      $region24: #{conv_block_forward.2} parent=19 // pred_fallthru
        _
    $region20: #{conv_block_forward.2} parent=5 // pred_fallthru
      _
    %p125 = scmp.le.s32.totalorder 1, %s8
    %p126 = scmp.lt.s32.totalorder %s8, 5
    %p127 = pnand %p125, %p126
    %p128 = pneg %p127
    // Predicated region
    $region25: #{conv_block_forward.2} parent=5 // pred_check
      _
    $region26: #{conv_block_forward.2} parent=5 // pred_check_branch
      %130 = sbr.rel (%p127) target = $region28
    $region27: #{conv_block_forward.2} parent=5 // pred_region
      %s131 = ssub.s32 %s8, 1
      %p132 = scmp.lt.s32.totalorder %s17, 1
      %s133 = scalar_select %p132, %s17, 1
      %s134 = smul.addr %s133, 54
      %s135 = smul.addr %s134, 4
      %s136 = scalar_lea.vmem %s0, %s135
      %p137 = pneg %p46
      %p138 = pneg %p43
      %p139 = pneg %p67
      %p140 = pneg %p64
      %p141 = pneg %p95
      %p142 = pneg %p92
      %p143 = scmp.lt.s32.totalorder %s17, 1
      %s144 = scalar_select %p143, %s17, 1
      %p145 = scmp.lt.s32.totalorder %s18, 1
      %s146 = scalar_select %p145, %s18, 1
      %s147 = smul.addr %s144, 2
      %s148 = sadd.s32 %s146, %s147
      %s149 = smul.addr %s148, 2
      %s150 = scalar_lea.vmem %s2, %s149
      %p151 = scmp.lt.s32.totalorder %s17, 1
      %s152 = scalar_select %p151, %s17, 1
      %s153 = smul.addr %s152, 54
      %s154 = smul.addr %s153, 4
      %s155 = scalar_lea.vmem %s0, %s154
      %p156 = scmp.lt.s32.totalorder %s17, 1
      %s157 = scalar_select %p156, %s17, 1
      %p158 = scmp.lt.s32.totalorder %s18, 1
      %s159 = scalar_select %p158, %s18, 1
      %s160 = smul.addr %s157, 2
      %s161 = sadd.s32 %s159, %s160
      %s162 = smul.addr %s161, 2
      %s163 = scalar_lea.vmem %s2, %s162
      %s165 = smul.u32 %s18, 8
      %s166 = smul.u32 %s165, 3
      %s167 = smul.addr %s166, 4
      %s168 = scalar_lea.vmem %s155, %s167
      %v169 = vld [vmem:[%s168] sm:$0xf]
      %v170 = vld [vmem:[%s168 + $0x4] sm:$0xf]
      %v171 = vld [vmem:[%s168 + $0x8] sm:$0x1]
      %v172 = vld [vmem:[%s168 + $0xc] sm:$0xf]
      %v173 = vld [vmem:[%s168 + $0x10] sm:$0xf]
      %v174 = vld [vmem:[%s168 + $0x14] sm:$0x1]
      %v175 = vld [vmem:[%s168 + $0x18] sm:$0xf]
      %v176 = vld [vmem:[%s168 + $0x1c] sm:$0xf]
      %v177 = vld [vmem:[%s168 + $0x20] sm:$0x1]
      %v178 = vld [vmem:[%s168 + $0x24] sm:$0xf]
      %v179 = vld [vmem:[%s168 + $0x28] sm:$0xf]
      %v180 = vld [vmem:[%s168 + $0x2c] sm:$0x1]
      %v181 = vld [vmem:[%s168 + $0x30] sm:$0xf]
      %v182 = vld [vmem:[%s168 + $0x34] sm:$0xf]
      %v183 = vld [vmem:[%s168 + $0x38] sm:$0x1]
      %v184 = vld [vmem:[%s168 + $0x3c] sm:$0xf]
      %v185 = vld [vmem:[%s168 + $0x40] sm:$0xf]
      %v186 = vld [vmem:[%s168 + $0x44] sm:$0x1]
      %v187 = vld [vmem:[%s168 + $0x48] sm:$0xf]
      %v188 = vld [vmem:[%s168 + $0x4c] sm:$0xf]
      %v189 = vld [vmem:[%s168 + $0x50] sm:$0x1]
      %v190 = vld [vmem:[%s168 + $0x54] sm:$0xf]
      %v191 = vld [vmem:[%s168 + $0x58] sm:$0xf]
      %v192 = vld [vmem:[%s168 + $0x5c] sm:$0x1]
      %v193 = vld [vmem:[%s168 + $0x60] sm:$0xf]
      %v194 = vld [vmem:[%s168 + $0x64] sm:$0xf]
      %v195 = vld [vmem:[%s168 + $0x68] sm:$0x1]
      %v196 = vld [vmem:[%s168 + $0x6c] sm:$0xf]
      %v197 = vld [vmem:[%s168 + $0x70] sm:$0xf]
      %v198 = vld [vmem:[%s168 + $0x74] sm:$0x1]
      %v199 = vld [vmem:[%s1] sm:$0x3]
      %vm200 = vsmask.f32 3328
      %vm201 = vsmask.f32 7440
      %vm202 = vmor %vm200, %vm201
      %v204 = vshrl.u32 %v169, 16
      %v206 = vrot.slane %v204, 4
      %v207 = vshll.u32 %v169, 16
      %v209 = vrot.slane %v207, 5
      %v210 = vor.u32 %v206, %v209
      %v211 = vrot.slane %v210, 4
      %v213 = vshll.u32 %v170, 16
      %v215 = vrot.slane %v213, 5
      %v216 = vsel %vm202, %v211, %v215
      %v217 = vshrl.u32 %v170, 16
      %v219 = vrot.slane %v217, 4
      %v220 = vor.u32 %v219, %v215
      %v221 = vrot.slane %v220, 4
      %v223 = vshll.u32 %v171, 16
      %v225 = vrot.slane %v223, 5
      %v226 = vsel %vm202, %v221, %v225
      %v228 = vshrl.u32 %v172, 16
      %v230 = vrot.slane %v228, 4
      %v231 = vshll.u32 %v172, 16
      %v233 = vrot.slane %v231, 5
      %v234 = vor.u32 %v230, %v233
      %v235 = vrot.slane %v234, 4
      %v237 = vshll.u32 %v173, 16
      %v239 = vrot.slane %v237, 5
      %v240 = vsel %vm202, %v235, %v239
      %v241 = vshrl.u32 %v173, 16
      %v243 = vrot.slane %v241, 4
      %v244 = vor.u32 %v243, %v239
      %v245 = vrot.slane %v244, 4
      %v247 = vshll.u32 %v174, 16
      %v249 = vrot.slane %v247, 5
      %v250 = vsel %vm202, %v245, %v249
      %v252 = vshrl.u32 %v175, 16
      %v254 = vrot.slane %v252, 4
      %v255 = vshll.u32 %v175, 16
      %v257 = vrot.slane %v255, 5
      %v258 = vor.u32 %v254, %v257
      %v259 = vrot.slane %v258, 4
      %v261 = vshll.u32 %v176, 16
      %v263 = vrot.slane %v261, 5
      %v264 = vsel %vm202, %v259, %v263
      %v265 = vshrl.u32 %v176, 16
      %v267 = vrot.slane %v265, 4
      %v268 = vor.u32 %v267, %v263
      %v269 = vrot.slane %v268, 4
      %v271 = vshll.u32 %v177, 16
      %v273 = vrot.slane %v271, 5
      %v274 = vsel %vm202, %v269, %v273
      %v276 = vshrl.u32 %v178, 16
      %v278 = vrot.slane %v276, 4
      %v279 = vshll.u32 %v178, 16
      %v281 = vrot.slane %v279, 5
      %v282 = vor.u32 %v278, %v281
      %v283 = vrot.slane %v282, 4
      %v285 = vshll.u32 %v179, 16
      %v287 = vrot.slane %v285, 5
      %v288 = vsel %vm202, %v283, %v287
      %v289 = vshrl.u32 %v179, 16
      %v291 = vrot.slane %v289, 4
      %v292 = vor.u32 %v291, %v287
      %v293 = vrot.slane %v292, 4
      %v295 = vshll.u32 %v180, 16
      %v297 = vrot.slane %v295, 5
      %v298 = vsel %vm202, %v293, %v297
      %v300 = vshrl.u32 %v181, 16
      %v302 = vrot.slane %v300, 4
      %v303 = vshll.u32 %v181, 16
      %v305 = vrot.slane %v303, 5
      %v306 = vor.u32 %v302, %v305
      %v307 = vrot.slane %v306, 4
      %v309 = vshll.u32 %v182, 16
      %v311 = vrot.slane %v309, 5
      %v312 = vsel %vm202, %v307, %v311
      %v313 = vshrl.u32 %v182, 16
      %v315 = vrot.slane %v313, 4
      %v316 = vor.u32 %v315, %v311
      %v317 = vrot.slane %v316, 4
      %v319 = vshll.u32 %v183, 16
      %v321 = vrot.slane %v319, 5
      %v322 = vsel %vm202, %v317, %v321
      %v324 = vshrl.u32 %v184, 16
      %v326 = vrot.slane %v324, 4
      %v327 = vshll.u32 %v184, 16
      %v329 = vrot.slane %v327, 5
      %v330 = vor.u32 %v326, %v329
      %v331 = vrot.slane %v330, 4
      %v333 = vshll.u32 %v185, 16
      %v335 = vrot.slane %v333, 5
      %v336 = vsel %vm202, %v331, %v335
      %v337 = vshrl.u32 %v185, 16
      %v339 = vrot.slane %v337, 4
      %v340 = vor.u32 %v339, %v335
      %v341 = vrot.slane %v340, 4
      %v343 = vshll.u32 %v186, 16
      %v345 = vrot.slane %v343, 5
      %v346 = vsel %vm202, %v341, %v345
      %v348 = vshrl.u32 %v187, 16
      %v350 = vrot.slane %v348, 4
      %v351 = vshll.u32 %v187, 16
      %v353 = vrot.slane %v351, 5
      %v354 = vor.u32 %v350, %v353
      %v355 = vrot.slane %v354, 4
      %v357 = vshll.u32 %v188, 16
      %v359 = vrot.slane %v357, 5
      %v360 = vsel %vm202, %v355, %v359
      %v361 = vshrl.u32 %v188, 16
      %v363 = vrot.slane %v361, 4
      %v364 = vor.u32 %v363, %v359
      %v365 = vrot.slane %v364, 4
      %v367 = vshll.u32 %v189, 16
      %v369 = vrot.slane %v367, 5
      %v370 = vsel %vm202, %v365, %v369
      %v372 = vshrl.u32 %v190, 16
      %v374 = vrot.slane %v372, 4
      %v375 = vshll.u32 %v190, 16
      %v377 = vrot.slane %v375, 5
      %v378 = vor.u32 %v374, %v377
      %v379 = vrot.slane %v378, 4
      %v381 = vshll.u32 %v191, 16
      %v383 = vrot.slane %v381, 5
      %v384 = vsel %vm202, %v379, %v383
      %v385 = vshrl.u32 %v191, 16
      %v387 = vrot.slane %v385, 4
      %v388 = vor.u32 %v387, %v383
      %v389 = vrot.slane %v388, 4
      %v391 = vshll.u32 %v192, 16
      %v393 = vrot.slane %v391, 5
      %v394 = vsel %vm202, %v389, %v393
      %s395 = scalar_lea.vmem %s1, 2
      %v396 = vld [vmem:[%s395] sm:$0x3]
      %v397 = vunpack.c.l.b16 %v216
      %v398 = vunpack.c.l.b16 %v226
      %v399 = vunpack.c.l.b16 %v240
      %v400 = vunpack.c.l.b16 %v250
      %v401 = vunpack.c.l.b16 %v264
      %v402 = vunpack.c.l.b16 %v274
      %v403 = vunpack.c.l.b16 %v288
      %v404 = vunpack.c.l.b16 %v298
      %v405 = vunpack.c.l.b16 %v312
      %v406 = vunpack.c.l.b16 %v322
      %v407 = vunpack.c.l.b16 %v336
      %v408 = vunpack.c.l.b16 %v346
      %v409 = vunpack.c.l.b16 %v360
      %v410 = vunpack.c.l.b16 %v370
      %v411 = vunpack.c.l.b16 %v384
      %v412 = vunpack.c.l.b16 %v394
      %v413 = vpack.c.b16 %v398, %v397
      %v414 = vpack.c.b16 %v400, %v399
      %v415 = vpack.c.b16 %v402, %v401
      %v416 = vpack.c.b16 %v404, %v403
      %v417 = vpack.c.b16 %v406, %v405
      %v418 = vpack.c.b16 %v408, %v407
      %v419 = vpack.c.b16 %v410, %v409
      %v420 = vpack.c.b16 %v412, %v411
      %vm421 = vcmask 31744
      %v423 = vsel %vm421, %v413, 0
      %v426 = vsel %vm421, %v414, 0
      %v429 = vsel %vm421, %v415, 0
      %v432 = vsel %vm421, %v416, 0
      %v435 = vsel %vm421, %v417, 0
      %v438 = vsel %vm421, %v418, 0
      %v441 = vsel %vm421, %v419, 0
      %v444 = vsel %vm421, %v420, 0
      %vm446 = vcmask 1041408
      %v448 = vsel %vm446, %v396, 0
      %450 = vmatprep.subr.bf16.mxu0 0
      %451 = vmatpush1.bf16.msra.mxu0 %v448
      %452 = vmatprep.subr.bf16.mxu0 0
      %453 = vmatpush1.bf16.msra.mxu0 0
      %454 = vmatprep.subr.bf16.mxu0 0
      %455 = vmatpush1.bf16.msra.mxu0 0
      %456 = vmatprep.subr.bf16.mxu0 0
      %457 = vmatpush1.bf16.msra.mxu0 0
      %458 = vmatprep.subr.bf16.mxu0 0
      %459 = vmatpush1.bf16.msra.mxu0 0
      %460 = vmatprep.subr.bf16.mxu0 0
      %461 = vmatpush1.bf16.msra.mxu0 0
      %462 = vmatprep.subr.bf16.mxu0 0
      %463 = vmatpush1.bf16.msra.mxu0 0
      %464 = vmatprep.subr.bf16.mxu0 0
      %465 = vmatpush1.bf16.msra.mxu0 0
      %466 = vmatprep.subr.bf16.mxu0 0
      %467 = vmatpush1.bf16.msra.mxu0 0
      %468 = vmatprep.subr.bf16.mxu0 0
      %469 = vmatpush1.bf16.msra.mxu0 0
      %470 = vmatprep.subr.bf16.mxu0 0
      %471 = vmatpush1.bf16.msra.mxu0 0
      %472 = vmatprep.subr.bf16.mxu0 0
      %473 = vmatpush1.bf16.msra.mxu0 0
      %474 = vmatprep.subr.bf16.mxu0 0
      %475 = vmatpush1.bf16.msra.mxu0 0
      %476 = vmatprep.subr.bf16.mxu0 0
      %477 = vmatpush1.bf16.msra.mxu0 0
      %478 = vmatprep.subr.bf16.mxu0 0
      %479 = vmatpush1.bf16.msra.mxu0 0
      %480 = vmatprep.subr.bf16.mxu0 0
      %481 = vmatpush1.bf16.msra.mxu0 0
      %482 = vmatprep.mubr.bf16.mxu0 0
      %483 = vmatmul.mubr.bf16.gmra.mrb[0].mxu0 %v423
      %v484 = vpop.f32.mrb[0].mxu0
      %v485 = vadd.f32 0.0, %v484
      %v486 = vpop.f32.mrb[0].mxu0
      %v487 = vpop.f32.mrb[0].mxu0
      %v488 = vadd.f32 0.0, %v487
      %v489 = vpop.f32.mrb[0].mxu0
      %490 = vmatprep.mubr.bf16.mxu0 0
      %491 = vmatmul.mubr.bf16.gmra.mrb[0].mxu0 %v426
      %v492 = vpop.f32.mrb[0].mxu0
      %v493 = vadd.f32 0.0, %v492
      %v494 = vpop.f32.mrb[0].mxu0
      %v495 = vpop.f32.mrb[0].mxu0
      %v496 = vadd.f32 0.0, %v495
      %v497 = vpop.f32.mrb[0].mxu0
      %498 = vmatprep.mubr.bf16.mxu0 0
      %499 = vmatmul.mubr.bf16.gmra.mrb[0].mxu0 %v429
      %v500 = vpop.f32.mrb[0].mxu0
      %v501 = vadd.f32 0.0, %v500
      %v502 = vpop.f32.mrb[0].mxu0
      %v503 = vpop.f32.mrb[0].mxu0
      %v504 = vadd.f32 0.0, %v503
      %v505 = vpop.f32.mrb[0].mxu0
      %506 = vmatprep.mubr.bf16.mxu0 0
      %507 = vmatmul.mubr.bf16.gmra.mrb[0].mxu0 %v432
      %v508 = vpop.f32.mrb[0].mxu0
      %v509 = vadd.f32 0.0, %v508
      %v510 = vpop.f32.mrb[0].mxu0
      %v511 = vpop.f32.mrb[0].mxu0
      %v512 = vadd.f32 0.0, %v511
      %v513 = vpop.f32.mrb[0].mxu0
      %514 = vmatprep.mubr.bf16.mxu0 0
      %515 = vmatmul.mubr.bf16.gmra.mrb[0].mxu0 %v435
      %v516 = vpop.f32.mrb[0].mxu0
      %v517 = vadd.f32 0.0, %v516
      %v518 = vpop.f32.mrb[0].mxu0
      %v519 = vpop.f32.mrb[0].mxu0
      %v520 = vadd.f32 0.0, %v519
      %v521 = vpop.f32.mrb[0].mxu0
      %522 = vmatprep.mubr.bf16.mxu0 0
      %523 = vmatmul.mubr.bf16.gmra.mrb[0].mxu0 %v438
      %v524 = vpop.f32.mrb[0].mxu0
      %v525 = vadd.f32 0.0, %v524
      %v526 = vpop.f32.mrb[0].mxu0
      %v527 = vpop.f32.mrb[0].mxu0
      %v528 = vadd.f32 0.0, %v527
      %v529 = vpop.f32.mrb[0].mxu0
      %530 = vmatprep.mubr.bf16.mxu0 0
      %531 = vmatmul.mubr.bf16.gmra.mrb[0].mxu0 %v441
      %v532 = vpop.f32.mrb[0].mxu0
      %v533 = vadd.f32 0.0, %v532
      %v534 = vpop.f32.mrb[0].mxu0
      %v535 = vpop.f32.mrb[0].mxu0
      %v536 = vadd.f32 0.0, %v535
      %v537 = vpop.f32.mrb[0].mxu0
      %538 = vmatprep.mubr.bf16.mxu0 0
      %539 = vmatmul.mubr.bf16.gmra.mrb[0].mxu0 %v444
      %v540 = vpop.f32.mrb[0].mxu0
      %v541 = vadd.f32 0.0, %v540
      %v542 = vpop.f32.mrb[0].mxu0
      %v543 = vpop.f32.mrb[0].mxu0
      %v544 = vadd.f32 0.0, %v543
      %v545 = vpop.f32.mrb[0].mxu0
      %546 = vdwg.mxu0
      %v563 = vunpack.c.l.b16 %v169
      %v564 = vunpack.c.l.b16 %v170
      %v565 = vunpack.c.l.b16 %v172
      %v566 = vunpack.c.l.b16 %v173
      %v567 = vunpack.c.l.b16 %v175
      %v568 = vunpack.c.l.b16 %v176
      %v569 = vunpack.c.l.b16 %v178
      %v570 = vunpack.c.l.b16 %v179
      %v571 = vunpack.c.l.b16 %v181
      %v572 = vunpack.c.l.b16 %v182
      %v573 = vunpack.c.l.b16 %v184
      %v574 = vunpack.c.l.b16 %v185
      %v575 = vunpack.c.l.b16 %v187
      %v576 = vunpack.c.l.b16 %v188
      %v577 = vunpack.c.l.b16 %v190
      %v578 = vunpack.c.l.b16 %v191
      %v579 = vpack.c.b16 %v564, %v563
      %v580 = vpack.c.b16 %v566, %v565
      %v581 = vpack.c.b16 %v568, %v567
      %v582 = vpack.c.b16 %v570, %v569
      %v583 = vpack.c.b16 %v572, %v571
      %v584 = vpack.c.b16 %v574, %v573
      %v585 = vpack.c.b16 %v576, %v575
      %v586 = vpack.c.b16 %v578, %v577
      %v588 = vsel %vm421, %v579, 0
      %v591 = vsel %vm421, %v580, 0
      %v594 = vsel %vm421, %v581, 0
      %v597 = vsel %vm421, %v582, 0
      %v600 = vsel %vm421, %v583, 0
      %v603 = vsel %vm421, %v584, 0
      %v606 = vsel %vm421, %v585, 0
      %v609 = vsel %vm421, %v586, 0
      %v612 = vsel %vm446, %v199, 0
      %614 = vmatprep.subr.bf16.mxu0 0
      %615 = vmatpush1.bf16.msra.mxu0 %v612
      %616 = vmatprep.subr.bf16.mxu0 0
      %617 = vmatpush1.bf16.msra.mxu0 0
      %618 = vmatprep.subr.bf16.mxu0 0
      %619 = vmatpush1.bf16.msra.mxu0 0
      %620 = vmatprep.subr.bf16.mxu0 0
      %621 = vmatpush1.bf16.msra.mxu0 0
      %622 = vmatprep.subr.bf16.mxu0 0
      %623 = vmatpush1.bf16.msra.mxu0 0
      %624 = vmatprep.subr.bf16.mxu0 0
      %625 = vmatpush1.bf16.msra.mxu0 0
      %626 = vmatprep.subr.bf16.mxu0 0
      %627 = vmatpush1.bf16.msra.mxu0 0
      %628 = vmatprep.subr.bf16.mxu0 0
      %629 = vmatpush1.bf16.msra.mxu0 0
      %630 = vmatprep.subr.bf16.mxu0 0
      %631 = vmatpush1.bf16.msra.mxu0 0
      %632 = vmatprep.subr.bf16.mxu0 0
      %633 = vmatpush1.bf16.msra.mxu0 0
      %634 = vmatprep.subr.bf16.mxu0 0
      %635 = vmatpush1.bf16.msra.mxu0 0
      %636 = vmatprep.subr.bf16.mxu0 0
      %637 = vmatpush1.bf16.msra.mxu0 0
      %638 = vmatprep.subr.bf16.mxu0 0
      %639 = vmatpush1.bf16.msra.mxu0 0
      %640 = vmatprep.subr.bf16.mxu0 0
      %641 = vmatpush1.bf16.msra.mxu0 0
      %642 = vmatprep.subr.bf16.mxu0 0
      %643 = vmatpush1.bf16.msra.mxu0 0
      %644 = vmatprep.subr.bf16.mxu0 0
      %645 = vmatpush1.bf16.msra.mxu0 0
      %646 = vmatprep.mubr.bf16.mxu0 0
      %647 = vmatmul.mubr.bf16.gmra.mrb[0].mxu0 %v588
      %v648 = vpop.f32.mrb[0].mxu0
      %v649 = vadd.f32 %v485, %v648
      %v650 = vpop.f32.mrb[0].mxu0
      %v651 = vpop.f32.mrb[0].mxu0
      %v652 = vadd.f32 %v488, %v651
      %v653 = vpop.f32.mrb[0].mxu0
      %654 = vmatprep.mubr.bf16.mxu0 0
      %655 = vmatmul.mubr.bf16.gmra.mrb[0].mxu0 %v591
      %v656 = vpop.f32.mrb[0].mxu0
      %v657 = vadd.f32 %v493, %v656
      %v658 = vpop.f32.mrb[0].mxu0
      %v659 = vpop.f32.mrb[0].mxu0
      %v660 = vadd.f32 %v496, %v659
      %v661 = vpop.f32.mrb[0].mxu0
      %662 = vmatprep.mubr.bf16.mxu0 0
      %663 = vmatmul.mubr.bf16.gmra.mrb[0].mxu0 %v594
      %v664 = vpop.f32.mrb[0].mxu0
      %v665 = vadd.f32 %v501, %v664
      %v666 = vpop.f32.mrb[0].mxu0
      %v667 = vpop.f32.mrb[0].mxu0
      %v668 = vadd.f32 %v504, %v667
      %v669 = vpop.f32.mrb[0].mxu0
      %670 = vmatprep.mubr.bf16.mxu0 0
      %671 = vmatmul.mubr.bf16.gmra.mrb[0].mxu0 %v597
      %v672 = vpop.f32.mrb[0].mxu0
      %v673 = vadd.f32 %v509, %v672
      %v674 = vpop.f32.mrb[0].mxu0
      %v675 = vpop.f32.mrb[0].mxu0
      %v676 = vadd.f32 %v512, %v675
      %v677 = vpop.f32.mrb[0].mxu0
      %678 = vmatprep.mubr.bf16.mxu0 0
      %679 = vmatmul.mubr.bf16.gmra.mrb[0].mxu0 %v600
      %v680 = vpop.f32.mrb[0].mxu0
      %v681 = vadd.f32 %v517, %v680
      %v682 = vpop.f32.mrb[0].mxu0
      %v683 = vpop.f32.mrb[0].mxu0
      %v684 = vadd.f32 %v520, %v683
      %v685 = vpop.f32.mrb[0].mxu0
      %686 = vmatprep.mubr.bf16.mxu0 0
      %687 = vmatmul.mubr.bf16.gmra.mrb[0].mxu0 %v603
      %v688 = vpop.f32.mrb[0].mxu0
      %v689 = vadd.f32 %v525, %v688
      %v690 = vpop.f32.mrb[0].mxu0
      %v691 = vpop.f32.mrb[0].mxu0
      %v692 = vadd.f32 %v528, %v691
      %v693 = vpop.f32.mrb[0].mxu0
      %694 = vmatprep.mubr.bf16.mxu0 0
      %695 = vmatmul.mubr.bf16.gmra.mrb[0].mxu0 %v606
      %v696 = vpop.f32.mrb[0].mxu0
      %v697 = vadd.f32 %v533, %v696
      %v698 = vpop.f32.mrb[0].mxu0
      %v699 = vpop.f32.mrb[0].mxu0
      %v700 = vadd.f32 %v536, %v699
      %v701 = vpop.f32.mrb[0].mxu0
      %702 = vmatprep.mubr.bf16.mxu0 0
      %703 = vmatmul.mubr.bf16.gmra.mrb[0].mxu0 %v609
      %v704 = vpop.f32.mrb[0].mxu0
      %v705 = vadd.f32 %v541, %v704
      %v706 = vpop.f32.mrb[0].mxu0
      %v707 = vpop.f32.mrb[0].mxu0
      %v708 = vadd.f32 %v544, %v707
      %v709 = vpop.f32.mrb[0].mxu0
      %710 = vdwg.mxu0
      %vm719 = vcmask 1042432
      %vm720 = vcmask 1046532
      %vm721 = vmor %vm719, %vm720
      %v722 = vrot.slane %v169, 5
      %v723 = vrot.slane %v722, 4
      %v724 = vrot.slane %v170, 5
      %v725 = vsel %vm721, %v723, %v724
      %v726 = vrot.slane %v724, 4
      %v727 = vrot.slane %v171, 5
      %v728 = vsel %vm721, %v726, %v727
      %v729 = vrot.slane %v172, 5
      %v730 = vrot.slane %v729, 4
      %v731 = vrot.slane %v173, 5
      %v732 = vsel %vm721, %v730, %v731
      %v733 = vrot.slane %v731, 4
      %v734 = vrot.slane %v174, 5
      %v735 = vsel %vm721, %v733, %v734
      %v736 = vrot.slane %v175, 5
      %v737 = vrot.slane %v736, 4
      %v738 = vrot.slane %v176, 5
      %v739 = vsel %vm721, %v737, %v738
      %v740 = vrot.slane %v738, 4
      %v741 = vrot.slane %v177, 5
      %v742 = vsel %vm721, %v740, %v741
      %v743 = vrot.slane %v178, 5
      %v744 = vrot.slane %v743, 4
      %v745 = vrot.slane %v179, 5
      %v746 = vsel %vm721, %v744, %v745
      %v747 = vrot.slane %v745, 4
      %v748 = vrot.slane %v180, 5
      %v749 = vsel %vm721, %v747, %v748
      %v750 = vrot.slane %v181, 5
      %v751 = vrot.slane %v750, 4
      %v752 = vrot.slane %v182, 5
      %v753 = vsel %vm721, %v751, %v752
      %v754 = vrot.slane %v752, 4
      %v755 = vrot.slane %v183, 5
      %v756 = vsel %vm721, %v754, %v755
      %v757 = vrot.slane %v184, 5
      %v758 = vrot.slane %v757, 4
      %v759 = vrot.slane %v185, 5
      %v760 = vsel %vm721, %v758, %v759
      %v761 = vrot.slane %v759, 4
      %v762 = vrot.slane %v186, 5
      %v763 = vsel %vm721, %v761, %v762
      %v764 = vrot.slane %v187, 5
      %v765 = vrot.slane %v764, 4
      %v766 = vrot.slane %v188, 5
      %v767 = vsel %vm721, %v765, %v766
      %v768 = vrot.slane %v766, 4
      %v769 = vrot.slane %v189, 5
      %v770 = vsel %vm721, %v768, %v769
      %v771 = vrot.slane %v190, 5
      %v772 = vrot.slane %v771, 4
      %v773 = vrot.slane %v191, 5
      %v774 = vsel %vm721, %v772, %v773
      %v775 = vrot.slane %v773, 4
      %v776 = vrot.slane %v192, 5
      %v777 = vsel %vm721, %v775, %v776
      %s778 = scalar_lea.vmem %s1, 4
      %v779 = vld [vmem:[%s778] sm:$0x3]
      %v780 = vunpack.c.l.b16 %v725
      %v781 = vunpack.c.l.b16 %v728
      %v782 = vunpack.c.l.b16 %v732
      %v783 = vunpack.c.l.b16 %v735
      %v784 = vunpack.c.l.b16 %v739
      %v785 = vunpack.c.l.b16 %v742
      %v786 = vunpack.c.l.b16 %v746
      %v787 = vunpack.c.l.b16 %v749
      %v788 = vunpack.c.l.b16 %v753
      %v789 = vunpack.c.l.b16 %v756
      %v790 = vunpack.c.l.b16 %v760
      %v791 = vunpack.c.l.b16 %v763
      %v792 = vunpack.c.l.b16 %v767
      %v793 = vunpack.c.l.b16 %v770
      %v794 = vunpack.c.l.b16 %v774
      %v795 = vunpack.c.l.b16 %v777
      %v796 = vpack.c.b16 %v781, %v780
      %v797 = vpack.c.b16 %v783, %v782
      %v798 = vpack.c.b16 %v785, %v784
      %v799 = vpack.c.b16 %v787, %v786
      %v800 = vpack.c.b16 %v789, %v788
      %v801 = vpack.c.b16 %v791, %v790
      %v802 = vpack.c.b16 %v793, %v792
      %v803 = vpack.c.b16 %v795, %v794
      %v805 = vsel %vm421, %v796, 0
      %v808 = vsel %vm421, %v797, 0
      %v811 = vsel %vm421, %v798, 0
      %v814 = vsel %vm421, %v799, 0
      %v817 = vsel %vm421, %v800, 0
      %v820 = vsel %vm421, %v801, 0
      %v823 = vsel %vm421, %v802, 0
      %v826 = vsel %vm421, %v803, 0
      %v829 = vsel %vm446, %v779, 0
      %831 = vmatprep.subr.bf16.mxu0 0
      %832 = vmatpush1.bf16.msra.mxu0 %v829
      %833 = vmatprep.subr.bf16.mxu0 0
      %834 = vmatpush1.bf16.msra.mxu0 0
      %835 = vmatprep.subr.bf16.mxu0 0
      %836 = vmatpush1.bf16.msra.mxu0 0
      %837 = vmatprep.subr.bf16.mxu0 0
      %838 = vmatpush1.bf16.msra.mxu0 0
      %839 = vmatprep.subr.bf16.mxu0 0
      %840 = vmatpush1.bf16.msra.mxu0 0
      %841 = vmatprep.subr.bf16.mxu0 0
      %842 = vmatpush1.bf16.msra.mxu0 0
      %843 = vmatprep.subr.bf16.mxu0 0
      %844 = vmatpush1.bf16.msra.mxu0 0
      %845 = vmatprep.subr.bf16.mxu0 0
      %846 = vmatpush1.bf16.msra.mxu0 0
      %847 = vmatprep.subr.bf16.mxu0 0
      %848 = vmatpush1.bf16.msra.mxu0 0
      %849 = vmatprep.subr.bf16.mxu0 0
      %850 = vmatpush1.bf16.msra.mxu0 0
      %851 = vmatprep.subr.bf16.mxu0 0
      %852 = vmatpush1.bf16.msra.mxu0 0
      %853 = vmatprep.subr.bf16.mxu0 0
      %854 = vmatpush1.bf16.msra.mxu0 0
      %855 = vmatprep.subr.bf16.mxu0 0
      %856 = vmatpush1.bf16.msra.mxu0 0
      %857 = vmatprep.subr.bf16.mxu0 0
      %858 = vmatpush1.bf16.msra.mxu0 0
      %859 = vmatprep.subr.bf16.mxu0 0
      %860 = vmatpush1.bf16.msra.mxu0 0
      %861 = vmatprep.subr.bf16.mxu0 0
      %862 = vmatpush1.bf16.msra.mxu0 0
      %863 = vmatprep.mubr.bf16.mxu0 0
      %864 = vmatmul.mubr.bf16.gmra.mrb[0].mxu0 %v805
      %v865 = vpop.f32.mrb[0].mxu0
      %v866 = vadd.f32 0.0, %v865
      %v867 = vpop.f32.mrb[0].mxu0
      %v868 = vpop.f32.mrb[0].mxu0
      %v869 = vadd.f32 0.0, %v868
      %v870 = vpop.f32.mrb[0].mxu0
      %871 = vmatprep.mubr.bf16.mxu0 0
      %872 = vmatmul.mubr.bf16.gmra.mrb[0].mxu0 %v808
      %v873 = vpop.f32.mrb[0].mxu0
      %v874 = vadd.f32 0.0, %v873
      %v875 = vpop.f32.mrb[0].mxu0
      %v876 = vpop.f32.mrb[0].mxu0
      %v877 = vadd.f32 0.0, %v876
      %v878 = vpop.f32.mrb[0].mxu0
      %879 = vmatprep.mubr.bf16.mxu0 0
      %880 = vmatmul.mubr.bf16.gmra.mrb[0].mxu0 %v811
      %v881 = vpop.f32.mrb[0].mxu0
      %v882 = vadd.f32 0.0, %v881
      %v883 = vpop.f32.mrb[0].mxu0
      %v884 = vpop.f32.mrb[0].mxu0
      %v885 = vadd.f32 0.0, %v884
      %v886 = vpop.f32.mrb[0].mxu0
      %887 = vmatprep.mubr.bf16.mxu0 0
      %888 = vmatmul.mubr.bf16.gmra.mrb[0].mxu0 %v814
      %v889 = vpop.f32.mrb[0].mxu0
      %v890 = vadd.f32 0.0, %v889
      %v891 = vpop.f32.mrb[0].mxu0
      %v892 = vpop.f32.mrb[0].mxu0
      %v893 = vadd.f32 0.0, %v892
      %v894 = vpop.f32.mrb[0].mxu0
      %895 = vmatprep.mubr.bf16.mxu0 0
      %896 = vmatmul.mubr.bf16.gmra.mrb[0].mxu0 %v817
      %v897 = vpop.f32.mrb[0].mxu0
      %v898 = vadd.f32 0.0, %v897
      %v899 = vpop.f32.mrb[0].mxu0
      %v900 = vpop.f32.mrb[0].mxu0
      %v901 = vadd.f32 0.0, %v900
      %v902 = vpop.f32.mrb[0].mxu0
      %903 = vmatprep.mubr.bf16.mxu0 0
      %904 = vmatmul.mubr.bf16.gmra.mrb[0].mxu0 %v820
      %v905 = vpop.f32.mrb[0].mxu0
      %v906 = vadd.f32 0.0, %v905
      %v907 = vpop.f32.mrb[0].mxu0
      %v908 = vpop.f32.mrb[0].mxu0
      %v909 = vadd.f32 0.0, %v908
      %v910 = vpop.f32.mrb[0].mxu0
      %911 = vmatprep.mubr.bf16.mxu0 0
      %912 = vmatmul.mubr.bf16.gmra.mrb[0].mxu0 %v823
      %v913 = vpop.f32.mrb[0].mxu0
      %v914 = vadd.f32 0.0, %v913
      %v915 = vpop.f32.mrb[0].mxu0
      %v916 = vpop.f32.mrb[0].mxu0
      %v917 = vadd.f32 0.0, %v916
      %v918 = vpop.f32.mrb[0].mxu0
      %919 = vmatprep.mubr.bf16.mxu0 0
      %920 = vmatmul.mubr.bf16.gmra.mrb[0].mxu0 %v826
      %v921 = vpop.f32.mrb[0].mxu0
      %v922 = vadd.f32 0.0, %v921
      %v923 = vpop.f32.mrb[0].mxu0
      %v924 = vpop.f32.mrb[0].mxu0
      %v925 = vadd.f32 0.0, %v924
      %v926 = vpop.f32.mrb[0].mxu0
      %927 = vdwg.mxu0
      %v928 = vadd.f32 %v649, %v866
      %v929 = vadd.f32 %v652, %v869
      %v930 = vadd.f32 %v657, %v874
      %v931 = vadd.f32 %v660, %v877
      %v932 = vadd.f32 %v665, %v882
      %v933 = vadd.f32 %v668, %v885
      %v934 = vadd.f32 %v673, %v890
      %v935 = vadd.f32 %v676, %v893
      %v936 = vadd.f32 %v681, %v898
      %v937 = vadd.f32 %v684, %v901
      %v938 = vadd.f32 %v689, %v906
      %v939 = vadd.f32 %v692, %v909
      %v940 = vadd.f32 %v697, %v914
      %v941 = vadd.f32 %v700, %v917
      %v942 = vadd.f32 %v705, %v922
      %v943 = vadd.f32 %v708, %v925
      %s944 = scalar_lea.vmem %s1, 6
      %v945 = vld [vmem:[%s944] sm:$0x3]
      %v948 = vunpack.c.l.b16 %v193
      %v949 = vunpack.c.l.b16 %v194
      %v950 = vpack.c.b16 %v949, %v948
      %v952 = vsel %vm421, %v950, 0
      %v955 = vsel %vm446, %v945, 0
      %957 = vmatprep.subr.bf16.mxu0 0
      %958 = vmatpush1.bf16.msra.mxu0 %v955
      %959 = vmatprep.subr.bf16.mxu0 0
      %960 = vmatpush1.bf16.msra.mxu0 0
      %961 = vmatprep.subr.bf16.mxu0 0
      %962 = vmatpush1.bf16.msra.mxu0 0
      %963 = vmatprep.subr.bf16.mxu0 0
      %964 = vmatpush1.bf16.msra.mxu0 0
      %965 = vmatprep.subr.bf16.mxu0 0
      %966 = vmatpush1.bf16.msra.mxu0 0
      %967 = vmatprep.subr.bf16.mxu0 0
      %968 = vmatpush1.bf16.msra.mxu0 0
      %969 = vmatprep.subr.bf16.mxu0 0
      %970 = vmatpush1.bf16.msra.mxu0 0
      %971 = vmatprep.subr.bf16.mxu0 0
      %972 = vmatpush1.bf16.msra.mxu0 0
      %973 = vmatprep.subr.bf16.mxu0 0
      %974 = vmatpush1.bf16.msra.mxu0 0
      %975 = vmatprep.subr.bf16.mxu0 0
      %976 = vmatpush1.bf16.msra.mxu0 0
      %977 = vmatprep.subr.bf16.mxu0 0
      %978 = vmatpush1.bf16.msra.mxu0 0
      %979 = vmatprep.subr.bf16.mxu0 0
      %980 = vmatpush1.bf16.msra.mxu0 0
      %981 = vmatprep.subr.bf16.mxu0 0
      %982 = vmatpush1.bf16.msra.mxu0 0
      %983 = vmatprep.subr.bf16.mxu0 0
      %984 = vmatpush1.bf16.msra.mxu0 0
      %985 = vmatprep.subr.bf16.mxu0 0
      %986 = vmatpush1.bf16.msra.mxu0 0
      %987 = vmatprep.subr.bf16.mxu0 0
      %988 = vmatpush1.bf16.msra.mxu0 0
      %989 = vmatprep.mubr.bf16.mxu0 0
      %990 = vmatmul.mubr.bf16.gmra.mrb[0].mxu0 %v591
      %v991 = vpop.f32.mrb[0].mxu0
      %v992 = vadd.f32 0.0, %v991
      %v993 = vpop.f32.mrb[0].mxu0
      %v994 = vpop.f32.mrb[0].mxu0
      %v995 = vadd.f32 0.0, %v994
      %v996 = vpop.f32.mrb[0].mxu0
      %997 = vmatprep.mubr.bf16.mxu0 0
      %998 = vmatmul.mubr.bf16.gmra.mrb[0].mxu0 %v594
      %v999 = vpop.f32.mrb[0].mxu0
      %v1000 = vadd.f32 0.0, %v999
      %v1001 = vpop.f32.mrb[0].mxu0
      %v1002 = vpop.f32.mrb[0].mxu0
      %v1003 = vadd.f32 0.0, %v1002
      %v1004 = vpop.f32.mrb[0].mxu0
      %1005 = vmatprep.mubr.bf16.mxu0 0
      %1006 = vmatmul.mubr.bf16.gmra.mrb[0].mxu0 %v597
      %v1007 = vpop.f32.mrb[0].mxu0
      %v1008 = vadd.f32 0.0, %v1007
      %v1009 = vpop.f32.mrb[0].mxu0
      %v1010 = vpop.f32.mrb[0].mxu0
      %v1011 = vadd.f32 0.0, %v1010
      %v1012 = vpop.f32.mrb[0].mxu0
      %1013 = vmatprep.mubr.bf16.mxu0 0
      %1014 = vmatmul.mubr.bf16.gmra.mrb[0].mxu0 %v600
      %v1015 = vpop.f32.mrb[0].mxu0
      %v1016 = vadd.f32 0.0, %v1015
      %v1017 = vpop.f32.mrb[0].mxu0
      %v1018 = vpop.f32.mrb[0].mxu0
      %v1019 = vadd.f32 0.0, %v1018
      %v1020 = vpop.f32.mrb[0].mxu0
      %1021 = vmatprep.mubr.bf16.mxu0 0
      %1022 = vmatmul.mubr.bf16.gmra.mrb[0].mxu0 %v603
      %v1023 = vpop.f32.mrb[0].mxu0
      %v1024 = vadd.f32 0.0, %v1023
      %v1025 = vpop.f32.mrb[0].mxu0
      %v1026 = vpop.f32.mrb[0].mxu0
      %v1027 = vadd.f32 0.0, %v1026
      %v1028 = vpop.f32.mrb[0].mxu0
      %1029 = vmatprep.mubr.bf16.mxu0 0
      %1030 = vmatmul.mubr.bf16.gmra.mrb[0].mxu0 %v606
      %v1031 = vpop.f32.mrb[0].mxu0
      %v1032 = vadd.f32 0.0, %v1031
      %v1033 = vpop.f32.mrb[0].mxu0
      %v1034 = vpop.f32.mrb[0].mxu0
      %v1035 = vadd.f32 0.0, %v1034
      %v1036 = vpop.f32.mrb[0].mxu0
      %1037 = vmatprep.mubr.bf16.mxu0 0
      %1038 = vmatmul.mubr.bf16.gmra.mrb[0].mxu0 %v609
      %v1039 = vpop.f32.mrb[0].mxu0
      %v1040 = vadd.f32 0.0, %v1039
      %v1041 = vpop.f32.mrb[0].mxu0
      %v1042 = vpop.f32.mrb[0].mxu0
      %v1043 = vadd.f32 0.0, %v1042
      %v1044 = vpop.f32.mrb[0].mxu0
      %1045 = vmatprep.mubr.bf16.mxu0 0
      %1046 = vmatmul.mubr.bf16.gmra.mrb[0].mxu0 %v952
      %v1047 = vpop.f32.mrb[0].mxu0
      %v1048 = vadd.f32 0.0, %v1047
      %v1049 = vpop.f32.mrb[0].mxu0
      %v1050 = vpop.f32.mrb[0].mxu0
      %v1051 = vadd.f32 0.0, %v1050
      %v1052 = vpop.f32.mrb[0].mxu0
      %1053 = vdwg.mxu0
      %v1054 = vadd.f32 %v928, %v992
      %v1055 = vadd.f32 %v929, %v995
      %v1056 = vadd.f32 %v930, %v1000
      %v1057 = vadd.f32 %v931, %v1003
      %v1058 = vadd.f32 %v932, %v1008
      %v1059 = vadd.f32 %v933, %v1011
      %v1060 = vadd.f32 %v934, %v1016
      %v1061 = vadd.f32 %v935, %v1019
      %v1062 = vadd.f32 %v936, %v1024
      %v1063 = vadd.f32 %v937, %v1027
      %v1064 = vadd.f32 %v938, %v1032
      %v1065 = vadd.f32 %v939, %v1035
      %v1066 = vadd.f32 %v940, %v1040
      %v1067 = vadd.f32 %v941, %v1043
      %v1068 = vadd.f32 %v942, %v1048
      %v1069 = vadd.f32 %v943, %v1051
      %v1071 = vshrl.u32 %v193, 16
      %v1073 = vrot.slane %v1071, 4
      %v1074 = vshll.u32 %v193, 16
      %v1076 = vrot.slane %v1074, 5
      %v1077 = vor.u32 %v1073, %v1076
      %v1078 = vrot.slane %v1077, 4
      %v1080 = vshll.u32 %v194, 16
      %v1082 = vrot.slane %v1080, 5
      %v1083 = vsel %vm202, %v1078, %v1082
      %v1084 = vshrl.u32 %v194, 16
      %v1086 = vrot.slane %v1084, 4
      %v1087 = vor.u32 %v1086, %v1082
      %v1088 = vrot.slane %v1087, 4
      %v1090 = vshll.u32 %v195, 16
      %v1092 = vrot.slane %v1090, 5
      %v1093 = vsel %vm202, %v1088, %v1092
      %s1094 = scalar_lea.vmem %s1, 8
      %v1095 = vld [vmem:[%s1094] sm:$0x3]
      %v1096 = vunpack.c.l.b16 %v1083
      %v1097 = vunpack.c.l.b16 %v1093
      %v1098 = vpack.c.b16 %v1097, %v1096
      %v1100 = vsel %vm421, %v1098, 0
      %v1103 = vsel %vm446, %v1095, 0
      %1105 = vmatprep.subr.bf16.mxu0 0
      %1106 = vmatpush1.bf16.msra.mxu0 %v1103
      %1107 = vmatprep.subr.bf16.mxu0 0
      %1108 = vmatpush1.bf16.msra.mxu0 0
      %1109 = vmatprep.subr.bf16.mxu0 0
      %1110 = vmatpush1.bf16.msra.mxu0 0
      %1111 = vmatprep.subr.bf16.mxu0 0
      %1112 = vmatpush1.bf16.msra.mxu0 0
      %1113 = vmatprep.subr.bf16.mxu0 0
      %1114 = vmatpush1.bf16.msra.mxu0 0
      %1115 = vmatprep.subr.bf16.mxu0 0
      %1116 = vmatpush1.bf16.msra.mxu0 0
      %1117 = vmatprep.subr.bf16.mxu0 0
      %1118 = vmatpush1.bf16.msra.mxu0 0
      %1119 = vmatprep.subr.bf16.mxu0 0
      %1120 = vmatpush1.bf16.msra.mxu0 0
      %1121 = vmatprep.subr.bf16.mxu0 0
      %1122 = vmatpush1.bf16.msra.mxu0 0
      %1123 = vmatprep.subr.bf16.mxu0 0
      %1124 = vmatpush1.bf16.msra.mxu0 0
      %1125 = vmatprep.subr.bf16.mxu0 0
      %1126 = vmatpush1.bf16.msra.mxu0 0
      %1127 = vmatprep.subr.bf16.mxu0 0
      %1128 = vmatpush1.bf16.msra.mxu0 0
      %1129 = vmatprep.subr.bf16.mxu0 0
      %1130 = vmatpush1.bf16.msra.mxu0 0
      %1131 = vmatprep.subr.bf16.mxu0 0
      %1132 = vmatpush1.bf16.msra.mxu0 0
      %1133 = vmatprep.subr.bf16.mxu0 0
      %1134 = vmatpush1.bf16.msra.mxu0 0
      %1135 = vmatprep.subr.bf16.mxu0 0
      %1136 = vmatpush1.bf16.msra.mxu0 0
      %1137 = vmatprep.mubr.bf16.mxu0 0
      %1138 = vmatmul.mubr.bf16.gmra.mrb[0].mxu0 %v426
      %v1139 = vpop.f32.mrb[0].mxu0
      %v1140 = vadd.f32 0.0, %v1139
      %v1141 = vpop.f32.mrb[0].mxu0
      %v1142 = vpop.f32.mrb[0].mxu0
      %v1143 = vadd.f32 0.0, %v1142
      %v1144 = vpop.f32.mrb[0].mxu0
      %1145 = vmatprep.mubr.bf16.mxu0 0
      %1146 = vmatmul.mubr.bf16.gmra.mrb[0].mxu0 %v429
      %v1147 = vpop.f32.mrb[0].mxu0
      %v1148 = vadd.f32 0.0, %v1147
      %v1149 = vpop.f32.mrb[0].mxu0
      %v1150 = vpop.f32.mrb[0].mxu0
      %v1151 = vadd.f32 0.0, %v1150
      %v1152 = vpop.f32.mrb[0].mxu0
      %1153 = vmatprep.mubr.bf16.mxu0 0
      %1154 = vmatmul.mubr.bf16.gmra.mrb[0].mxu0 %v432
      %v1155 = vpop.f32.mrb[0].mxu0
      %v1156 = vadd.f32 0.0, %v1155
      %v1157 = vpop.f32.mrb[0].mxu0
      %v1158 = vpop.f32.mrb[0].mxu0
      %v1159 = vadd.f32 0.0, %v1158
      %v1160 = vpop.f32.mrb[0].mxu0
      %1161 = vmatprep.mubr.bf16.mxu0 0
      %1162 = vmatmul.mubr.bf16.gmra.mrb[0].mxu0 %v435
      %v1163 = vpop.f32.mrb[0].mxu0
      %v1164 = vadd.f32 0.0, %v1163
      %v1165 = vpop.f32.mrb[0].mxu0
      %v1166 = vpop.f32.mrb[0].mxu0
      %v1167 = vadd.f32 0.0, %v1166
      %v1168 = vpop.f32.mrb[0].mxu0
      %1169 = vmatprep.mubr.bf16.mxu0 0
      %1170 = vmatmul.mubr.bf16.gmra.mrb[0].mxu0 %v438
      %v1171 = vpop.f32.mrb[0].mxu0
      %v1172 = vadd.f32 0.0, %v1171
      %v1173 = vpop.f32.mrb[0].mxu0
      %v1174 = vpop.f32.mrb[0].mxu0
      %v1175 = vadd.f32 0.0, %v1174
      %v1176 = vpop.f32.mrb[0].mxu0
      %1177 = vmatprep.mubr.bf16.mxu0 0
      %1178 = vmatmul.mubr.bf16.gmra.mrb[0].mxu0 %v441
      %v1179 = vpop.f32.mrb[0].mxu0
      %v1180 = vadd.f32 0.0, %v1179
      %v1181 = vpop.f32.mrb[0].mxu0
      %v1182 = vpop.f32.mrb[0].mxu0
      %v1183 = vadd.f32 0.0, %v1182
      %v1184 = vpop.f32.mrb[0].mxu0
      %1185 = vmatprep.mubr.bf16.mxu0 0
      %1186 = vmatmul.mubr.bf16.gmra.mrb[0].mxu0 %v444
      %v1187 = vpop.f32.mrb[0].mxu0
      %v1188 = vadd.f32 0.0, %v1187
      %v1189 = vpop.f32.mrb[0].mxu0
      %v1190 = vpop.f32.mrb[0].mxu0
      %v1191 = vadd.f32 0.0, %v1190
      %v1192 = vpop.f32.mrb[0].mxu0
      %1193 = vmatprep.mubr.bf16.mxu0 0
      %1194 = vmatmul.mubr.bf16.gmra.mrb[0].mxu0 %v1100
      %v1195 = vpop.f32.mrb[0].mxu0
      %v1196 = vadd.f32 0.0, %v1195
      %v1197 = vpop.f32.mrb[0].mxu0
      %v1198 = vpop.f32.mrb[0].mxu0
      %v1199 = vadd.f32 0.0, %v1198
      %v1200 = vpop.f32.mrb[0].mxu0
      %1201 = vdwg.mxu0
      %v1202 = vadd.f32 %v1054, %v1140
      %v1203 = vadd.f32 %v1055, %v1143
      %v1204 = vadd.f32 %v1056, %v1148
      %v1205 = vadd.f32 %v1057, %v1151
      %v1206 = vadd.f32 %v1058, %v1156
      %v1207 = vadd.f32 %v1059, %v1159
      %v1208 = vadd.f32 %v1060, %v1164
      %v1209 = vadd.f32 %v1061, %v1167
      %v1210 = vadd.f32 %v1062, %v1172
      %v1211 = vadd.f32 %v1063, %v1175
      %v1212 = vadd.f32 %v1064, %v1180
      %v1213 = vadd.f32 %v1065, %v1183
      %v1214 = vadd.f32 %v1066, %v1188
      %v1215 = vadd.f32 %v1067, %v1191
      %v1216 = vadd.f32 %v1068, %v1196
      %v1217 = vadd.f32 %v1069, %v1199
      %v1219 = vrot.slane %v193, 5
      %v1220 = vrot.slane %v1219, 4
      %v1221 = vrot.slane %v194, 5
      %v1222 = vsel %vm721, %v1220, %v1221
      %v1223 = vrot.slane %v1221, 4
      %v1224 = vrot.slane %v195, 5
      %v1225 = vsel %vm721, %v1223, %v1224
      %s1226 = scalar_lea.vmem %s1, 10
      %v1227 = vld [vmem:[%s1226] sm:$0x3]
      %v1228 = vunpack.c.l.b16 %v1222
      %v1229 = vunpack.c.l.b16 %v1225
      %v1230 = vpack.c.b16 %v1229, %v1228
      %v1232 = vsel %vm421, %v1230, 0
      %v1235 = vsel %vm446, %v1227, 0
      %1237 = vmatprep.subr.bf16.mxu0 0
      %1238 = vmatpush1.bf16.msra.mxu0 %v1235
      %1239 = vmatprep.subr.bf16.mxu0 0
      %1240 = vmatpush1.bf16.msra.mxu0 0
      %1241 = vmatprep.subr.bf16.mxu0 0
      %1242 = vmatpush1.bf16.msra.mxu0 0
      %1243 = vmatprep.subr.bf16.mxu0 0
      %1244 = vmatpush1.bf16.msra.mxu0 0
      %1245 = vmatprep.subr.bf16.mxu0 0
      %1246 = vmatpush1.bf16.msra.mxu0 0
      %1247 = vmatprep.subr.bf16.mxu0 0
      %1248 = vmatpush1.bf16.msra.mxu0 0
      %1249 = vmatprep.subr.bf16.mxu0 0
      %1250 = vmatpush1.bf16.msra.mxu0 0
      %1251 = vmatprep.subr.bf16.mxu0 0
      %1252 = vmatpush1.bf16.msra.mxu0 0
      %1253 = vmatprep.subr.bf16.mxu0 0
      %1254 = vmatpush1.bf16.msra.mxu0 0
      %1255 = vmatprep.subr.bf16.mxu0 0
      %1256 = vmatpush1.bf16.msra.mxu0 0
      %1257 = vmatprep.subr.bf16.mxu0 0
      %1258 = vmatpush1.bf16.msra.mxu0 0
      %1259 = vmatprep.subr.bf16.mxu0 0
      %1260 = vmatpush1.bf16.msra.mxu0 0
      %1261 = vmatprep.subr.bf16.mxu0 0
      %1262 = vmatpush1.bf16.msra.mxu0 0
      %1263 = vmatprep.subr.bf16.mxu0 0
      %1264 = vmatpush1.bf16.msra.mxu0 0
      %1265 = vmatprep.subr.bf16.mxu0 0
      %1266 = vmatpush1.bf16.msra.mxu0 0
      %1267 = vmatprep.subr.bf16.mxu0 0
      %1268 = vmatpush1.bf16.msra.mxu0 0
      %1269 = vmatprep.mubr.bf16.mxu0 0
      %1270 = vmatmul.mubr.bf16.gmra.mrb[0].mxu0 %v808
      %v1271 = vpop.f32.mrb[0].mxu0
      %v1272 = vadd.f32 0.0, %v1271
      %v1273 = vpop.f32.mrb[0].mxu0
      %v1274 = vpop.f32.mrb[0].mxu0
      %v1275 = vadd.f32 0.0, %v1274
      %v1276 = vpop.f32.mrb[0].mxu0
      %1277 = vmatprep.mubr.bf16.mxu0 0
      %1278 = vmatmul.mubr.bf16.gmra.mrb[0].mxu0 %v811
      %v1279 = vpop.f32.mrb[0].mxu0
      %v1280 = vadd.f32 0.0, %v1279
      %v1281 = vpop.f32.mrb[0].mxu0
      %v1282 = vpop.f32.mrb[0].mxu0
      %v1283 = vadd.f32 0.0, %v1282
      %v1284 = vpop.f32.mrb[0].mxu0
      %1285 = vmatprep.mubr.bf16.mxu0 0
      %1286 = vmatmul.mubr.bf16.gmra.mrb[0].mxu0 %v814
      %v1287 = vpop.f32.mrb[0].mxu0
      %v1288 = vadd.f32 0.0, %v1287
      %v1289 = vpop.f32.mrb[0].mxu0
      %v1290 = vpop.f32.mrb[0].mxu0
      %v1291 = vadd.f32 0.0, %v1290
      %v1292 = vpop.f32.mrb[0].mxu0
      %1293 = vmatprep.mubr.bf16.mxu0 0
      %1294 = vmatmul.mubr.bf16.gmra.mrb[0].mxu0 %v817
      %v1295 = vpop.f32.mrb[0].mxu0
      %v1296 = vadd.f32 0.0, %v1295
      %v1297 = vpop.f32.mrb[0].mxu0
      %v1298 = vpop.f32.mrb[0].mxu0
      %v1299 = vadd.f32 0.0, %v1298
      %v1300 = vpop.f32.mrb[0].mxu0
      %1301 = vmatprep.mubr.bf16.mxu0 0
      %1302 = vmatmul.mubr.bf16.gmra.mrb[0].mxu0 %v820
      %v1303 = vpop.f32.mrb[0].mxu0
      %v1304 = vadd.f32 0.0, %v1303
      %v1305 = vpop.f32.mrb[0].mxu0
      %v1306 = vpop.f32.mrb[0].mxu0
      %v1307 = vadd.f32 0.0, %v1306
      %v1308 = vpop.f32.mrb[0].mxu0
      %1309 = vmatprep.mubr.bf16.mxu0 0
      %1310 = vmatmul.mubr.bf16.gmra.mrb[0].mxu0 %v823
      %v1311 = vpop.f32.mrb[0].mxu0
      %v1312 = vadd.f32 0.0, %v1311
      %v1313 = vpop.f32.mrb[0].mxu0
      %v1314 = vpop.f32.mrb[0].mxu0
      %v1315 = vadd.f32 0.0, %v1314
      %v1316 = vpop.f32.mrb[0].mxu0
      %1317 = vmatprep.mubr.bf16.mxu0 0
      %1318 = vmatmul.mubr.bf16.gmra.mrb[0].mxu0 %v826
      %v1319 = vpop.f32.mrb[0].mxu0
      %v1320 = vadd.f32 0.0, %v1319
      %v1321 = vpop.f32.mrb[0].mxu0
      %v1322 = vpop.f32.mrb[0].mxu0
      %v1323 = vadd.f32 0.0, %v1322
      %v1324 = vpop.f32.mrb[0].mxu0
      %1325 = vmatprep.mubr.bf16.mxu0 0
      %1326 = vmatmul.mubr.bf16.gmra.mrb[0].mxu0 %v1232
      %v1327 = vpop.f32.mrb[0].mxu0
      %v1328 = vadd.f32 0.0, %v1327
      %v1329 = vpop.f32.mrb[0].mxu0
      %v1330 = vpop.f32.mrb[0].mxu0
      %v1331 = vadd.f32 0.0, %v1330
      %v1332 = vpop.f32.mrb[0].mxu0
      %1333 = vdwg.mxu0
      %v1334 = vadd.f32 %v1202, %v1272
      %v1335 = vadd.f32 %v1203, %v1275
      %v1336 = vadd.f32 %v1204, %v1280
      %v1337 = vadd.f32 %v1205, %v1283
      %v1338 = vadd.f32 %v1206, %v1288
      %v1339 = vadd.f32 %v1207, %v1291
      %v1340 = vadd.f32 %v1208, %v1296
      %v1341 = vadd.f32 %v1209, %v1299
      %v1342 = vadd.f32 %v1210, %v1304
      %v1343 = vadd.f32 %v1211, %v1307
      %v1344 = vadd.f32 %v1212, %v1312
      %v1345 = vadd.f32 %v1213, %v1315
      %v1346 = vadd.f32 %v1214, %v1320
      %v1347 = vadd.f32 %v1215, %v1323
      %v1348 = vadd.f32 %v1216, %v1328
      %v1349 = vadd.f32 %v1217, %v1331
      %s1350 = scalar_lea.vmem %s1, 12
      %v1351 = vld [vmem:[%s1350] sm:$0x3]
      %v1354 = vunpack.c.l.b16 %v196
      %v1355 = vunpack.c.l.b16 %v197
      %v1356 = vpack.c.b16 %v1355, %v1354
      %v1358 = vsel %vm421, %v1356, 0
      %v1361 = vsel %vm446, %v1351, 0
      %1363 = vmatprep.subr.bf16.mxu0 0
      %1364 = vmatpush1.bf16.msra.mxu0 %v1361
      %1365 = vmatprep.subr.bf16.mxu0 0
      %1366 = vmatpush1.bf16.msra.mxu0 0
      %1367 = vmatprep.subr.bf16.mxu0 0
      %1368 = vmatpush1.bf16.msra.mxu0 0
      %1369 = vmatprep.subr.bf16.mxu0 0
      %1370 = vmatpush1.bf16.msra.mxu0 0
      %1371 = vmatprep.subr.bf16.mxu0 0
      %1372 = vmatpush1.bf16.msra.mxu0 0
      %1373 = vmatprep.subr.bf16.mxu0 0
      %1374 = vmatpush1.bf16.msra.mxu0 0
      %1375 = vmatprep.subr.bf16.mxu0 0
      %1376 = vmatpush1.bf16.msra.mxu0 0
      %1377 = vmatprep.subr.bf16.mxu0 0
      %1378 = vmatpush1.bf16.msra.mxu0 0
      %1379 = vmatprep.subr.bf16.mxu0 0
      %1380 = vmatpush1.bf16.msra.mxu0 0
      %1381 = vmatprep.subr.bf16.mxu0 0
      %1382 = vmatpush1.bf16.msra.mxu0 0
      %1383 = vmatprep.subr.bf16.mxu0 0
      %1384 = vmatpush1.bf16.msra.mxu0 0
      %1385 = vmatprep.subr.bf16.mxu0 0
      %1386 = vmatpush1.bf16.msra.mxu0 0
      %1387 = vmatprep.subr.bf16.mxu0 0
      %1388 = vmatpush1.bf16.msra.mxu0 0
      %1389 = vmatprep.subr.bf16.mxu0 0
      %1390 = vmatpush1.bf16.msra.mxu0 0
      %1391 = vmatprep.subr.bf16.mxu0 0
      %1392 = vmatpush1.bf16.msra.mxu0 0
      %1393 = vmatprep.subr.bf16.mxu0 0
      %1394 = vmatpush1.bf16.msra.mxu0 0
      %1395 = vmatprep.mubr.bf16.mxu0 0
      %1396 = vmatmul.mubr.bf16.gmra.mrb[0].mxu0 %v594
      %v1397 = vpop.f32.mrb[0].mxu0
      %v1398 = vadd.f32 0.0, %v1397
      %v1399 = vpop.f32.mrb[0].mxu0
      %v1400 = vpop.f32.mrb[0].mxu0
      %v1401 = vadd.f32 0.0, %v1400
      %v1402 = vpop.f32.mrb[0].mxu0
      %1403 = vmatprep.mubr.bf16.mxu0 0
      %1404 = vmatmul.mubr.bf16.gmra.mrb[0].mxu0 %v597
      %v1405 = vpop.f32.mrb[0].mxu0
      %v1406 = vadd.f32 0.0, %v1405
      %v1407 = vpop.f32.mrb[0].mxu0
      %v1408 = vpop.f32.mrb[0].mxu0
      %v1409 = vadd.f32 0.0, %v1408
      %v1410 = vpop.f32.mrb[0].mxu0
      %1411 = vmatprep.mubr.bf16.mxu0 0
      %1412 = vmatmul.mubr.bf16.gmra.mrb[0].mxu0 %v600
      %v1413 = vpop.f32.mrb[0].mxu0
      %v1414 = vadd.f32 0.0, %v1413
      %v1415 = vpop.f32.mrb[0].mxu0
      %v1416 = vpop.f32.mrb[0].mxu0
      %v1417 = vadd.f32 0.0, %v1416
      %v1418 = vpop.f32.mrb[0].mxu0
      %1419 = vmatprep.mubr.bf16.mxu0 0
      %1420 = vmatmul.mubr.bf16.gmra.mrb[0].mxu0 %v603
      %v1421 = vpop.f32.mrb[0].mxu0
      %v1422 = vadd.f32 0.0, %v1421
      %v1423 = vpop.f32.mrb[0].mxu0
      %v1424 = vpop.f32.mrb[0].mxu0
      %v1425 = vadd.f32 0.0, %v1424
      %v1426 = vpop.f32.mrb[0].mxu0
      %1427 = vmatprep.mubr.bf16.mxu0 0
      %1428 = vmatmul.mubr.bf16.gmra.mrb[0].mxu0 %v606
      %v1429 = vpop.f32.mrb[0].mxu0
      %v1430 = vadd.f32 0.0, %v1429
      %v1431 = vpop.f32.mrb[0].mxu0
      %v1432 = vpop.f32.mrb[0].mxu0
      %v1433 = vadd.f32 0.0, %v1432
      %v1434 = vpop.f32.mrb[0].mxu0
      %1435 = vmatprep.mubr.bf16.mxu0 0
      %1436 = vmatmul.mubr.bf16.gmra.mrb[0].mxu0 %v609
      %v1437 = vpop.f32.mrb[0].mxu0
      %v1438 = vadd.f32 0.0, %v1437
      %v1439 = vpop.f32.mrb[0].mxu0
      %v1440 = vpop.f32.mrb[0].mxu0
      %v1441 = vadd.f32 0.0, %v1440
      %v1442 = vpop.f32.mrb[0].mxu0
      %1443 = vmatprep.mubr.bf16.mxu0 0
      %1444 = vmatmul.mubr.bf16.gmra.mrb[0].mxu0 %v952
      %v1445 = vpop.f32.mrb[0].mxu0
      %v1446 = vadd.f32 0.0, %v1445
      %v1447 = vpop.f32.mrb[0].mxu0
      %v1448 = vpop.f32.mrb[0].mxu0
      %v1449 = vadd.f32 0.0, %v1448
      %v1450 = vpop.f32.mrb[0].mxu0
      %1451 = vmatprep.mubr.bf16.mxu0 0
      %1452 = vmatmul.mubr.bf16.gmra.mrb[0].mxu0 %v1358
      %v1453 = vpop.f32.mrb[0].mxu0
      %v1454 = vadd.f32 0.0, %v1453
      %v1455 = vpop.f32.mrb[0].mxu0
      %v1456 = vpop.f32.mrb[0].mxu0
      %v1457 = vadd.f32 0.0, %v1456
      %v1458 = vpop.f32.mrb[0].mxu0
      %1459 = vdwg.mxu0
      %v1460 = vadd.f32 %v1334, %v1398
      %v1461 = vadd.f32 %v1335, %v1401
      %v1462 = vadd.f32 %v1336, %v1406
      %v1463 = vadd.f32 %v1337, %v1409
      %v1464 = vadd.f32 %v1338, %v1414
      %v1465 = vadd.f32 %v1339, %v1417
      %v1466 = vadd.f32 %v1340, %v1422
      %v1467 = vadd.f32 %v1341, %v1425
      %v1468 = vadd.f32 %v1342, %v1430
      %v1469 = vadd.f32 %v1343, %v1433
      %v1470 = vadd.f32 %v1344, %v1438
      %v1471 = vadd.f32 %v1345, %v1441
      %v1472 = vadd.f32 %v1346, %v1446
      %v1473 = vadd.f32 %v1347, %v1449
      %v1474 = vadd.f32 %v1348, %v1454
      %v1475 = vadd.f32 %v1349, %v1457
      %v1477 = vshrl.u32 %v196, 16
      %v1479 = vrot.slane %v1477, 4
      %v1480 = vshll.u32 %v196, 16
      %v1482 = vrot.slane %v1480, 5
      %v1483 = vor.u32 %v1479, %v1482
      %v1484 = vrot.slane %v1483, 4
      %v1486 = vshll.u32 %v197, 16
      %v1488 = vrot.slane %v1486, 5
      %v1489 = vsel %vm202, %v1484, %v1488
      %v1490 = vshrl.u32 %v197, 16
      %v1492 = vrot.slane %v1490, 4
      %v1493 = vor.u32 %v1492, %v1488
      %v1494 = vrot.slane %v1493, 4
      %v1496 = vshll.u32 %v198, 16
      %v1498 = vrot.slane %v1496, 5
      %v1499 = vsel %vm202, %v1494, %v1498
      %s1500 = scalar_lea.vmem %s1, 14
      %v1501 = vld [vmem:[%s1500] sm:$0x3]
      %v1502 = vunpack.c.l.b16 %v1489
      %v1503 = vunpack.c.l.b16 %v1499
      %v1504 = vpack.c.b16 %v1503, %v1502
      %v1506 = vsel %vm421, %v1504, 0
      %v1509 = vsel %vm446, %v1501, 0
      %1511 = vmatprep.subr.bf16.mxu0 0
      %1512 = vmatpush1.bf16.msra.mxu0 %v1509
      %1513 = vmatprep.subr.bf16.mxu0 0
      %1514 = vmatpush1.bf16.msra.mxu0 0
      %1515 = vmatprep.subr.bf16.mxu0 0
      %1516 = vmatpush1.bf16.msra.mxu0 0
      %1517 = vmatprep.subr.bf16.mxu0 0
      %1518 = vmatpush1.bf16.msra.mxu0 0
      %1519 = vmatprep.subr.bf16.mxu0 0
      %1520 = vmatpush1.bf16.msra.mxu0 0
      %1521 = vmatprep.subr.bf16.mxu0 0
      %1522 = vmatpush1.bf16.msra.mxu0 0
      %1523 = vmatprep.subr.bf16.mxu0 0
      %1524 = vmatpush1.bf16.msra.mxu0 0
      %1525 = vmatprep.subr.bf16.mxu0 0
      %1526 = vmatpush1.bf16.msra.mxu0 0
      %1527 = vmatprep.subr.bf16.mxu0 0
      %1528 = vmatpush1.bf16.msra.mxu0 0
      %1529 = vmatprep.subr.bf16.mxu0 0
      %1530 = vmatpush1.bf16.msra.mxu0 0
      %1531 = vmatprep.subr.bf16.mxu0 0
      %1532 = vmatpush1.bf16.msra.mxu0 0
      %1533 = vmatprep.subr.bf16.mxu0 0
      %1534 = vmatpush1.bf16.msra.mxu0 0
      %1535 = vmatprep.subr.bf16.mxu0 0
      %1536 = vmatpush1.bf16.msra.mxu0 0
      %1537 = vmatprep.subr.bf16.mxu0 0
      %1538 = vmatpush1.bf16.msra.mxu0 0
      %1539 = vmatprep.subr.bf16.mxu0 0
      %1540 = vmatpush1.bf16.msra.mxu0 0
      %1541 = vmatprep.subr.bf16.mxu0 0
      %1542 = vmatpush1.bf16.msra.mxu0 0
      %1543 = vmatprep.mubr.bf16.mxu0 0
      %1544 = vmatmul.mubr.bf16.gmra.mrb[0].mxu0 %v429
      %v1545 = vpop.f32.mrb[0].mxu0
      %v1546 = vadd.f32 0.0, %v1545
      %v1547 = vpop.f32.mrb[0].mxu0
      %v1548 = vpop.f32.mrb[0].mxu0
      %v1549 = vadd.f32 0.0, %v1548
      %v1550 = vpop.f32.mrb[0].mxu0
      %1551 = vmatprep.mubr.bf16.mxu0 0
      %1552 = vmatmul.mubr.bf16.gmra.mrb[0].mxu0 %v432
      %v1553 = vpop.f32.mrb[0].mxu0
      %v1554 = vadd.f32 0.0, %v1553
      %v1555 = vpop.f32.mrb[0].mxu0
      %v1556 = vpop.f32.mrb[0].mxu0
      %v1557 = vadd.f32 0.0, %v1556
      %v1558 = vpop.f32.mrb[0].mxu0
      %1559 = vmatprep.mubr.bf16.mxu0 0
      %1560 = vmatmul.mubr.bf16.gmra.mrb[0].mxu0 %v435
      %v1561 = vpop.f32.mrb[0].mxu0
      %v1562 = vadd.f32 0.0, %v1561
      %v1563 = vpop.f32.mrb[0].mxu0
      %v1564 = vpop.f32.mrb[0].mxu0
      %v1565 = vadd.f32 0.0, %v1564
      %v1566 = vpop.f32.mrb[0].mxu0
      %1567 = vmatprep.mubr.bf16.mxu0 0
      %1568 = vmatmul.mubr.bf16.gmra.mrb[0].mxu0 %v438
      %v1569 = vpop.f32.mrb[0].mxu0
      %v1570 = vadd.f32 0.0, %v1569
      %v1571 = vpop.f32.mrb[0].mxu0
      %v1572 = vpop.f32.mrb[0].mxu0
      %v1573 = vadd.f32 0.0, %v1572
      %v1574 = vpop.f32.mrb[0].mxu0
      %1575 = vmatprep.mubr.bf16.mxu0 0
      %1576 = vmatmul.mubr.bf16.gmra.mrb[0].mxu0 %v441
      %v1577 = vpop.f32.mrb[0].mxu0
      %v1578 = vadd.f32 0.0, %v1577
      %v1579 = vpop.f32.mrb[0].mxu0
      %v1580 = vpop.f32.mrb[0].mxu0
      %v1581 = vadd.f32 0.0, %v1580
      %v1582 = vpop.f32.mrb[0].mxu0
      %1583 = vmatprep.mubr.bf16.mxu0 0
      %1584 = vmatmul.mubr.bf16.gmra.mrb[0].mxu0 %v444
      %v1585 = vpop.f32.mrb[0].mxu0
      %v1586 = vadd.f32 0.0, %v1585
      %v1587 = vpop.f32.mrb[0].mxu0
      %v1588 = vpop.f32.mrb[0].mxu0
      %v1589 = vadd.f32 0.0, %v1588
      %v1590 = vpop.f32.mrb[0].mxu0
      %1591 = vmatprep.mubr.bf16.mxu0 0
      %1592 = vmatmul.mubr.bf16.gmra.mrb[0].mxu0 %v1100
      %v1593 = vpop.f32.mrb[0].mxu0
      %v1594 = vadd.f32 0.0, %v1593
      %v1595 = vpop.f32.mrb[0].mxu0
      %v1596 = vpop.f32.mrb[0].mxu0
      %v1597 = vadd.f32 0.0, %v1596
      %v1598 = vpop.f32.mrb[0].mxu0
      %1599 = vmatprep.mubr.bf16.mxu0 0
      %1600 = vmatmul.mubr.bf16.gmra.mrb[0].mxu0 %v1506
      %v1601 = vpop.f32.mrb[0].mxu0
      %v1602 = vadd.f32 0.0, %v1601
      %v1603 = vpop.f32.mrb[0].mxu0
      %v1604 = vpop.f32.mrb[0].mxu0
      %v1605 = vadd.f32 0.0, %v1604
      %v1606 = vpop.f32.mrb[0].mxu0
      %1607 = vdwg.mxu0
      %v1608 = vadd.f32 %v1460, %v1546
      %v1609 = vadd.f32 %v1461, %v1549
      %v1610 = vadd.f32 %v1462, %v1554
      %v1611 = vadd.f32 %v1463, %v1557
      %v1612 = vadd.f32 %v1464, %v1562
      %v1613 = vadd.f32 %v1465, %v1565
      %v1614 = vadd.f32 %v1466, %v1570
      %v1615 = vadd.f32 %v1467, %v1573
      %v1616 = vadd.f32 %v1468, %v1578
      %v1617 = vadd.f32 %v1469, %v1581
      %v1618 = vadd.f32 %v1470, %v1586
      %v1619 = vadd.f32 %v1471, %v1589
      %v1620 = vadd.f32 %v1472, %v1594
      %v1621 = vadd.f32 %v1473, %v1597
      %v1622 = vadd.f32 %v1474, %v1602
      %v1623 = vadd.f32 %v1475, %v1605
      %v1625 = vrot.slane %v196, 5
      %v1626 = vrot.slane %v1625, 4
      %v1627 = vrot.slane %v197, 5
      %v1628 = vsel %vm721, %v1626, %v1627
      %v1629 = vrot.slane %v1627, 4
      %v1630 = vrot.slane %v198, 5
      %v1631 = vsel %vm721, %v1629, %v1630
      %s1632 = scalar_lea.vmem %s1, 16
      %v1633 = vld [vmem:[%s1632] sm:$0x3]
      %v1634 = vunpack.c.l.b16 %v1628
      %v1635 = vunpack.c.l.b16 %v1631
      %v1636 = vpack.c.b16 %v1635, %v1634
      %v1638 = vsel %vm421, %v1636, 0
      %v1641 = vsel %vm446, %v1633, 0
      %1643 = vmatprep.subr.bf16.mxu0 0
      %1644 = vmatpush1.bf16.msra.mxu0 %v1641
      %1645 = vmatprep.subr.bf16.mxu0 0
      %1646 = vmatpush1.bf16.msra.mxu0 0
      %1647 = vmatprep.subr.bf16.mxu0 0
      %1648 = vmatpush1.bf16.msra.mxu0 0
      %1649 = vmatprep.subr.bf16.mxu0 0
      %1650 = vmatpush1.bf16.msra.mxu0 0
      %1651 = vmatprep.subr.bf16.mxu0 0
      %1652 = vmatpush1.bf16.msra.mxu0 0
      %1653 = vmatprep.subr.bf16.mxu0 0
      %1654 = vmatpush1.bf16.msra.mxu0 0
      %1655 = vmatprep.subr.bf16.mxu0 0
      %1656 = vmatpush1.bf16.msra.mxu0 0
      %1657 = vmatprep.subr.bf16.mxu0 0
      %1658 = vmatpush1.bf16.msra.mxu0 0
      %1659 = vmatprep.subr.bf16.mxu0 0
      %1660 = vmatpush1.bf16.msra.mxu0 0
      %1661 = vmatprep.subr.bf16.mxu0 0
      %1662 = vmatpush1.bf16.msra.mxu0 0
      %1663 = vmatprep.subr.bf16.mxu0 0
      %1664 = vmatpush1.bf16.msra.mxu0 0
      %1665 = vmatprep.subr.bf16.mxu0 0
      %1666 = vmatpush1.bf16.msra.mxu0 0
      %1667 = vmatprep.subr.bf16.mxu0 0
      %1668 = vmatpush1.bf16.msra.mxu0 0
      %1669 = vmatprep.subr.bf16.mxu0 0
      %1670 = vmatpush1.bf16.msra.mxu0 0
      %1671 = vmatprep.subr.bf16.mxu0 0
      %1672 = vmatpush1.bf16.msra.mxu0 0
      %1673 = vmatprep.subr.bf16.mxu0 0
      %1674 = vmatpush1.bf16.msra.mxu0 0
      %1675 = vmatprep.mubr.bf16.mxu0 0
      %1676 = vmatmul.mubr.bf16.gmra.mrb[0].mxu0 %v811
      %v1677 = vpop.f32.mrb[0].mxu0
      %v1678 = vadd.f32 0.0, %v1677
      %v1679 = vpop.f32.mrb[0].mxu0
      %v1680 = vpop.f32.mrb[0].mxu0
      %v1681 = vadd.f32 0.0, %v1680
      %v1682 = vpop.f32.mrb[0].mxu0
      %1683 = vmatprep.mubr.bf16.mxu0 0
      %1684 = vmatmul.mubr.bf16.gmra.mrb[0].mxu0 %v814
      %v1685 = vpop.f32.mrb[0].mxu0
      %v1686 = vadd.f32 0.0, %v1685
      %v1687 = vpop.f32.mrb[0].mxu0
      %v1688 = vpop.f32.mrb[0].mxu0
      %v1689 = vadd.f32 0.0, %v1688
      %v1690 = vpop.f32.mrb[0].mxu0
      %1691 = vmatprep.mubr.bf16.mxu0 0
      %1692 = vmatmul.mubr.bf16.gmra.mrb[0].mxu0 %v817
      %v1693 = vpop.f32.mrb[0].mxu0
      %v1694 = vadd.f32 0.0, %v1693
      %v1695 = vpop.f32.mrb[0].mxu0
      %v1696 = vpop.f32.mrb[0].mxu0
      %v1697 = vadd.f32 0.0, %v1696
      %v1698 = vpop.f32.mrb[0].mxu0
      %1699 = vmatprep.mubr.bf16.mxu0 0
      %1700 = vmatmul.mubr.bf16.gmra.mrb[0].mxu0 %v820
      %v1701 = vpop.f32.mrb[0].mxu0
      %v1702 = vadd.f32 0.0, %v1701
      %v1703 = vpop.f32.mrb[0].mxu0
      %v1704 = vpop.f32.mrb[0].mxu0
      %v1705 = vadd.f32 0.0, %v1704
      %v1706 = vpop.f32.mrb[0].mxu0
      %1707 = vmatprep.mubr.bf16.mxu0 0
      %1708 = vmatmul.mubr.bf16.gmra.mrb[0].mxu0 %v823
      %v1709 = vpop.f32.mrb[0].mxu0
      %v1710 = vadd.f32 0.0, %v1709
      %v1711 = vpop.f32.mrb[0].mxu0
      %v1712 = vpop.f32.mrb[0].mxu0
      %v1713 = vadd.f32 0.0, %v1712
      %v1714 = vpop.f32.mrb[0].mxu0
      %1715 = vmatprep.mubr.bf16.mxu0 0
      %1716 = vmatmul.mubr.bf16.gmra.mrb[0].mxu0 %v826
      %v1717 = vpop.f32.mrb[0].mxu0
      %v1718 = vadd.f32 0.0, %v1717
      %v1719 = vpop.f32.mrb[0].mxu0
      %v1720 = vpop.f32.mrb[0].mxu0
      %v1721 = vadd.f32 0.0, %v1720
      %v1722 = vpop.f32.mrb[0].mxu0
      %1723 = vmatprep.mubr.bf16.mxu0 0
      %1724 = vmatmul.mubr.bf16.gmra.mrb[0].mxu0 %v1232
      %v1725 = vpop.f32.mrb[0].mxu0
      %v1726 = vadd.f32 0.0, %v1725
      %v1727 = vpop.f32.mrb[0].mxu0
      %v1728 = vpop.f32.mrb[0].mxu0
      %v1729 = vadd.f32 0.0, %v1728
      %v1730 = vpop.f32.mrb[0].mxu0
      %1731 = vmatprep.mubr.bf16.mxu0 0
      %1732 = vmatmul.mubr.bf16.gmra.mrb[0].mxu0 %v1638
      %v1733 = vpop.f32.mrb[0].mxu0
      %v1734 = vadd.f32 0.0, %v1733
      %v1735 = vpop.f32.mrb[0].mxu0
      %v1736 = vpop.f32.mrb[0].mxu0
      %v1737 = vadd.f32 0.0, %v1736
      %v1738 = vpop.f32.mrb[0].mxu0
      %1739 = vdwg.mxu0
      %v1740 = vadd.f32 %v1608, %v1678
      %v1741 = vadd.f32 %v1609, %v1681
      %v1742 = vadd.f32 %v1610, %v1686
      %v1743 = vadd.f32 %v1611, %v1689
      %v1744 = vadd.f32 %v1612, %v1694
      %v1745 = vadd.f32 %v1613, %v1697
      %v1746 = vadd.f32 %v1614, %v1702
      %v1747 = vadd.f32 %v1615, %v1705
      %v1748 = vadd.f32 %v1616, %v1710
      %v1749 = vadd.f32 %v1617, %v1713
      %v1750 = vadd.f32 %v1618, %v1718
      %v1751 = vadd.f32 %v1619, %v1721
      %v1752 = vadd.f32 %v1620, %v1726
      %v1753 = vadd.f32 %v1621, %v1729
      %v1754 = vadd.f32 %v1622, %v1734
      %v1755 = vadd.f32 %v1623, %v1737
      %v1756 = vadd.f32 %v1740, %v1741
      %v1757 = vadd.f32 %v1756, %v1742
      %v1758 = vadd.f32 %v1757, %v1743
      %v1759 = vadd.f32 %v1758, %v1744
      %v1760 = vadd.f32 %v1759, %v1745
      %v1761 = vadd.f32 %v1760, %v1746
      %v1762 = vadd.f32 %v1761, %v1747
      %v1763 = vadd.f32 %v1762, %v1748
      %v1764 = vadd.f32 %v1763, %v1749
      %v1765 = vadd.f32 %v1764, %v1750
      %v1766 = vadd.f32 %v1765, %v1751
      %v1767 = vadd.f32 %v1766, %v1752
      %v1768 = vadd.f32 %v1767, %v1753
      %v1769 = vadd.f32 %v1768, %v1754
      %v1770 = vadd.f32 %v1769, %v1755
      %v1771 = vrot.slane %v1770, 4
      %v1772 = vadd.f32 %v1770, %v1771
      %v1773 = vrot.slane %v1772, 2
      %v1774 = vadd.f32 %v1772, %v1773
      %v1775 = vrot.slane %v1774, 1
      %v1776 = vadd.f32 %v1774, %v1775
      %v1777 = vmul.f32 %v1740, %v1740
      %v1778 = vmul.f32 %v1741, %v1741
      %v1779 = vmul.f32 %v1742, %v1742
      %v1780 = vmul.f32 %v1743, %v1743
      %v1781 = vmul.f32 %v1744, %v1744
      %v1782 = vmul.f32 %v1745, %v1745
      %v1783 = vmul.f32 %v1746, %v1746
      %v1784 = vmul.f32 %v1747, %v1747
      %v1785 = vmul.f32 %v1748, %v1748
      %v1786 = vmul.f32 %v1749, %v1749
      %v1787 = vmul.f32 %v1750, %v1750
      %v1788 = vmul.f32 %v1751, %v1751
      %v1789 = vmul.f32 %v1752, %v1752
      %v1790 = vmul.f32 %v1753, %v1753
      %v1791 = vmul.f32 %v1754, %v1754
      %v1792 = vmul.f32 %v1755, %v1755
      %v1793 = vadd.f32 %v1777, %v1778
      %v1794 = vadd.f32 %v1793, %v1779
      %v1795 = vadd.f32 %v1794, %v1780
      %v1796 = vadd.f32 %v1795, %v1781
      %v1797 = vadd.f32 %v1796, %v1782
      %v1798 = vadd.f32 %v1797, %v1783
      %v1799 = vadd.f32 %v1798, %v1784
      %v1800 = vadd.f32 %v1799, %v1785
      %v1801 = vadd.f32 %v1800, %v1786
      %v1802 = vadd.f32 %v1801, %v1787
      %v1803 = vadd.f32 %v1802, %v1788
      %v1804 = vadd.f32 %v1803, %v1789
      %v1805 = vadd.f32 %v1804, %v1790
      %v1806 = vadd.f32 %v1805, %v1791
      %v1807 = vadd.f32 %v1806, %v1792
      %v1808 = vrot.slane %v1807, 4
      %v1809 = vadd.f32 %v1807, %v1808
      %v1810 = vrot.slane %v1809, 2
      %v1811 = vadd.f32 %v1809, %v1810
      %v1812 = vrot.slane %v1811, 1
      %v1813 = vadd.f32 %v1811, %v1812
      %vm1814 = vcmask 1040384
      %v1815 = vsel %vm1814, %v1776, %v1813
      %1816 = vst [vmem:[%s163] sm:$0x3] %v1815
      %p1817 = scmp.lt.s32.totalorder %s17, 1
      %s1818 = scalar_select %p1817, %s17, 1
      %p1819 = scmp.lt.s32.totalorder %s18, 1
      %s1820 = scalar_select %p1819, %s18, 1
      %s1821 = smul.addr %s1818, 2
      %s1822 = sadd.s32 %s1820, %s1821
      %s1823 = smul.addr %s1822, 2
      %s1824 = scalar_lea.vmem %s2, %s1823
      // Predicated region
      $region29: #{conv_block_forward.2} parent=27 // pred_check
        %p1825 = pneg %p92
      $region30: #{conv_block_forward.2} parent=27 // pred_check_branch
        %1827 = sbr.rel (%p1825) target = $region32
      $region31: #{conv_block_forward.2} parent=27 // pred_region
        _
      $region32: #{conv_block_forward.2} parent=27 // pred_fallthru
        _
    $region28: #{conv_block_forward.2} parent=5 // pred_fallthru
      _
    %p1828 = scmp.le.s32.totalorder 2, %s8
    // Predicated region
    $region33: #{conv_block_forward.2} parent=5 // pred_check
      %p1829 = pneg %p1828
    $region34: #{conv_block_forward.2} parent=5 // pred_check_branch
      %1831 = sbr.rel (%p1829) target = $region36
    $region35: #{conv_block_forward.2} parent=5 // pred_region
      %s1832 = ssub.s32 %s8, 2
      // Predicated region
      $region37: #{conv_block_forward.2} parent=35 // pred_check
        %p1833 = pneg %p98
      $region38: #{conv_block_forward.2} parent=35 // pred_check_branch
        %1835 = sbr.rel (%p1833) target = $region40
      $region39: #{conv_block_forward.2} parent=35 // pred_region
        %p1836 = scmp.lt.s32.totalorder %s19, 1
        %s1837 = scalar_select %p1836, %s19, 1
        %p1838 = scmp.lt.s32.totalorder %s20, 1
        %s1839 = scalar_select %p1838, %s20, 1
        %s1840 = smul.addr %s1837, 2
        %s1841 = sadd.s32 %s1839, %s1840
        %s1842 = smul.addr %s1841, 2
        %s1843 = scalar_lea.vmem %s2, %s1842
      $region40: #{conv_block_forward.2} parent=35 // pred_fallthru
        _
    $region36: #{conv_block_forward.2} parent=5 // pred_fallthru
      _
  $region6: #{conv_block_forward.2} parent=0 // loop_footer
    %s12 = sadd.s32 1, %s8
  $region7: #{conv_block_forward.2} parent=0 // loop_footer_branch
    %7 = sbr.rel target = $region3
  $region8: #{conv_block_forward.2} parent=0 // loop_exit
    _

</llo_original>
